<compile_context>
chip_gen: v7x
topology: tpu7x:2x2x1
jax: 0.10.0
libtpu: 0.0.40
codegen_flags: <defaults>
</compile_context>

<pallas_src>
import math

import numpy as np
import jax
import jax.numpy as jnp
from jax.experimental import pallas as pl
from jax.experimental.pallas import tpu as pltpu


# --------------------------------------------------------------------------
# One-time host-side weight packing (numpy, outside jit).
# --------------------------------------------------------------------------
def _convt_to_hwio(w_pt):
    # PyTorch ConvTranspose2d weight (Cin, Cout, KH, KW) -> flipped conv HWIO
    return np.flip(np.asarray(w_pt, np.float32), (2, 3)).transpose(2, 3, 0, 1)


def _conv_to_hwio(w_pt):
    # PyTorch Conv2d weight (Cout, Cin, KH, KW) -> HWIO
    return np.asarray(w_pt, np.float32).transpose(2, 3, 1, 0)


def _w_band(k_hwio, win, stride, pad):
    """Fold W-direction (transposed-)conv + channel mixing into per-kh bands.

    out_row(Wout*Cout) = sum_kh  in_row_shifted_by_kh(Win*Cin) @ band[kh]
    where band[kh][xi*Cin + c, xo*Cout + o] = K[kh, pad + stride*xi - xo, c, o].
    """
    KH, KW, cin, cout = k_hwio.shape
    wout = (win - 1) * stride + 1 + 2 * pad - KW + 1
    band = np.zeros((KH, win * cin, wout * cout), np.float32)
    for xi in range(win):
        for xo in range(wout):
            t = pad + stride * xi - xo          # kernel tap along W
            if 0 <= t < KW:
                band[:, xi * cin:(xi + 1) * cin, xo * cout:(xo + 1) * cout] = \
                    k_hwio[:, t, :, :]
    return band, wout


def _h_dilate(hin, stride, pad, kh):
    """0/1 matrix scattering input rows onto the dilated + padded row grid."""
    hdp = (hin - 1) * stride + 1 + 2 * pad
    d = np.zeros((hdp, hin), np.float32)
    d[pad + stride * np.arange(hin), np.arange(hin)] = 1.0
    return d, hdp - kh + 1


# --------------------------------------------------------------------------
# Fused forward builder.
# --------------------------------------------------------------------------
def build_fused_forward(params, hin, win):
    # layer 1: ConvTranspose2d(3 -> 5, k=6, stride=2)
    k1 = _convt_to_hwio(params["wt1"])
    kh1, kw1, cin, c1 = k1.shape
    band1, w1 = _w_band(k1, win, 2, kw1 - 1)
    dil1, h1 = _h_dilate(hin, 2, kh1 - 1, kh1)
    bias1 = np.tile(np.asarray(params["bt1"], np.float32), w1)      # (w1*c1,)

    # layer 2: Conv2d(5 -> 6, k=5, stride=1)
    k2 = _conv_to_hwio(params["wc"])
    kh2, kw2, _, c2 = k2.shape
    band2, w2 = _w_band(k2, w1, 1, 0)
    h2 = h1 - kh2 + 1
    bias2 = np.tile(np.asarray(params["bc"], np.float32), w2)

    # layer 3: ConvTranspose2d(6 -> 2, k=3, stride=2)
    k3 = _convt_to_hwio(params["wt2"])
    kh3, kw3, _, c3 = k3.shape
    band3, w3 = _w_band(k3, w2, 2, kw3 - 1)
    dil3, h3 = _h_dilate(h2, 2, kh3 - 1, kh3)
    bias3 = np.tile(np.asarray(params["bt2"], np.float32), w3)

    wc_in, wc1, wc2, wc3 = win * cin, w1 * c1, w2 * c2, w3 * c3

    # ---- host-precomputed H-combine matrices (all tap shifts baked in) -----
    # dcat1[r, k*hin + i] = dil1[r + k, i]   =>   v1_pre = dcat1 @ Y1
    dcat1 = np.zeros((h1, kh1 * hin), np.float32)
    for k in range(kh1):
        dcat1[:, k * hin:(k + 1) * hin] = dil1[k:k + h1, :]
    # dstack1 also pre-shifts v1 for the kh2 layer-2 H taps:
    # (dstack1 @ Y1)[k*h2 + r, :] == v1_pre[k + r, :]  (8/16-aligned blocks)
    dstack1 = np.concatenate([dcat1[k:k + h2, :] for k in range(kh2)], axis=0)

    # dcat3[r, k*h2 + i] = dil3[r + k, i]    =>   v3 = dcat3 @ Y3 + bias3
    dcat3 = np.zeros((h3, kh3 * h2), np.float32)
    for k in range(kh3):
        dcat3[:, k * h2:(k + 1) * h2] = dil3[k:k + h3, :]

    # fold the (row-constant) layer-1 bias into the layer-2 bias
    bias12 = bias1 @ band2.sum(axis=0) + bias2                       # (wc2,)

    bf = jnp.bfloat16
    band1_d = jnp.asarray(band1, bf)
    band2_d = jnp.asarray(band2, bf)
    band3_d = jnp.asarray(band3, bf)
    dstack1_d = jnp.asarray(dstack1, bf)
    dcat3_d = jnp.asarray(dcat3, bf)
    bias12_d = jnp.asarray(bias12[None, :], jnp.float32)
    bias3_d = jnp.asarray(bias3[None, :], jnp.float32)

    # ---- the fused kernel: one grid step == one block of images ------------
    def make_kernel(bpb):
        def kernel(x_ref, b1_ref, d1_ref, g2_ref, b2_ref, b3_ref, d3_ref,
                   g3_ref, o_ref, y1_ref, v1_ref, y3_ref):
            f32 = jnp.float32
            for b in range(bpb):                  # static unroll over images
                xb = x_ref[b]                                  # (hin, wc_in) bf16

                # layer 1, W direction: one small matmul per H tap, stored at
                # aligned row offsets k*hin.
                for k in range(kh1):
                    y1_ref[b, k * hin:(k + 1) * hin, :] = jnp.dot(
                        xb, b1_ref[k], preferred_element_type=f32).astype(bf)
                # layer 1, H direction: ONE matmul emits all kh2 pre-shifted
                # layer-2 windows of v1 (bias1 folded into bias12).
                v1_ref[b] = jnp.dot(d1_ref[...], y1_ref[b],
                                    preferred_element_type=f32).astype(bf)

                # layer 2 (stride-1 conv): aligned window slices at k*h2;
                # accumulator initialized with the combined bias.
                acc = jnp.broadcast_to(g2_ref[...], (h2, wc2))
                for k in range(kh2):
                    acc = acc + jnp.dot(v1_ref[b, k * h2:(k + 1) * h2, :],
                                        b2_ref[k], preferred_element_type=f32)
                v2 = acc.astype(bf)

                # layer 3, W direction: per-tap matmuls, aligned offsets k*h2.
                for k in range(kh3):
                    y3_ref[b, k * h2:(k + 1) * h2, :] = jnp.dot(
                        v2, b3_ref[k], preferred_element_type=f32).astype(bf)
                # layer 3, H direction + bias: final f32 output slab.
                o_ref[b] = jnp.dot(d3_ref[...], y3_ref[b],
                                   preferred_element_type=f32) + g3_ref[...]
        return kernel

    def _full2(a):
        return pl.BlockSpec(a.shape, lambda i: (0, 0))

    def _full3(a):
        return pl.BlockSpec(a.shape, lambda i: (0, 0, 0))

    def _images_per_block(n):
        # Multi-TensorCore chips (v7x / v4 / v5p): split the batch across the
        # cores via the 'parallel' grid axis.  Single-TC v5e/v6e: pack the
        # whole batch into one grid step (no serial per-step overhead, and the
        # images' independent matmul chains interleave).
        try:
            kind = jax.devices()[0].device_kind.lower()
        except Exception:
            kind = ""
        multi_core = any(t in kind for t in ("v7", "7x", "v4", "v5p"))
        bpb = max(1, n // 2) if (multi_core and n >= 2) else n
        while n % bpb:
            bpb -= 1
        return max(bpb, 1)

    def forward(x_nchw):
        n = x_nchw.shape[0]
        bpb = _images_per_block(n)
        xf = jnp.transpose(x_nchw, (0, 2, 3, 1)).reshape(n, hin, wc_in)
        xf = xf.astype(bf)
        out_flat = pl.pallas_call(
            make_kernel(bpb),
            out_shape=jax.ShapeDtypeStruct((n, h3, wc3), jnp.float32),
            grid=(n // bpb,),
            in_specs=[
                pl.BlockSpec((bpb, hin, wc_in), lambda i: (i, 0, 0)),
                _full3(band1_d), _full2(dstack1_d), _full2(bias12_d),
                _full3(band2_d), _full3(band3_d), _full2(dcat3_d),
                _full2(bias3_d),
            ],
            out_specs=pl.BlockSpec((bpb, h3, wc3), lambda i: (i, 0, 0)),
            scratch_shapes=[
                pltpu.VMEM((bpb, kh1 * hin, wc1), bf),   # Y1 (tap-stacked)
                pltpu.VMEM((bpb, kh2 * h2, wc1), bf),    # pre-shifted v1 windows
                pltpu.VMEM((bpb, kh3 * h2, wc3), bf),    # Y3 (tap-stacked)
            ],
            compiler_params=pltpu.CompilerParams(
                dimension_semantics=("parallel",)),
        )(xf, band1_d, dstack1_d, bias12_d, band2_d, band3_d, dcat3_d, bias3_d)
        out = out_flat.reshape(n, h3, w3, c3)
        return jnp.transpose(out, (0, 3, 1, 2))            # -> NCHW

    return jax.jit(forward)


# --------------------------------------------------------------------------
# Parameters.
# TODO(synk): the original PyTorch module declares Conv2d(2, 6, 5) and
# ConvTranspose2d(5, 2, 3), whose in-channel counts are inconsistent with the
# declared forward() chaining (it raises at runtime in PyTorch). Channel counts
# are adjusted (conv: 5 in-channels, second conv_transpose: 6 in-channels) so
# the stated op order / kernel sizes / strides run end-to-end.
# --------------------------------------------------------------------------
def init_params(key):
    k1, k2, k3, k4, k5, k6 = jax.random.split(key, 6)

    def u(k, shape, fan):
        bound = 1.0 / math.sqrt(fan)
        return jax.random.uniform(k, shape, jnp.float32, -bound, bound)

    return dict(
        wt1=u(k1, (3, 5, 6, 6), 5 * 6 * 6),   # ConvTranspose2d(3, 5, 6, stride=2)
        bt1=u(k2, (5,), 5 * 6 * 6),
        wc=u(k3, (6, 5, 5, 5), 5 * 5 * 5),    # Conv2d(5 -> 6, k=5, stride=1)
        bc=u(k4, (6,), 5 * 5 * 5),
        wt2=u(k5, (6, 2, 3, 3), 2 * 3 * 3),   # ConvTranspose2d(6 -> 2, k=3, stride=2)
        bt2=u(k6, (2,), 2 * 3 * 3),
    )


# --------------------------------------------------------------------------
# Pure-JAX reference (lax convs, f32) for the correctness check.
# --------------------------------------------------------------------------
def ref_forward(x_nchw, params):
    x = jnp.transpose(x_nchw, (0, 2, 3, 1))

    def convt(h, w_pt, b, s):
        w = jnp.flip(w_pt, (2, 3)).transpose(2, 3, 0, 1)
        k = w.shape[0]
        y = jax.lax.conv_general_dilated(
            h, w, (1, 1), [(k - 1, k - 1), (k - 1, k - 1)],
            lhs_dilation=(s, s), dimension_numbers=("NHWC", "HWIO", "NHWC"))
        return y + b

    def conv(h, w_pt, b, s):
        w = jnp.transpose(w_pt, (2, 3, 1, 0))
        y = jax.lax.conv_general_dilated(
            h, w, (s, s), "VALID", dimension_numbers=("NHWC", "HWIO", "NHWC"))
        return y + b

    v1 = convt(x, params["wt1"], params["bt1"], 2)
    v2 = conv(v1, params["wc"], params["bc"], 1)
    v3 = convt(v2, params["wt2"], params["bt2"], 2)
    return jnp.transpose(v3, (0, 3, 1, 2))


if __name__ == "__main__":
    key = jax.random.PRNGKey(0)
    pkey, xkey = jax.random.split(key)
    params = init_params(pkey)
    x = jax.random.normal(xkey, (2, 3, 16, 16), jnp.float32)   # small NCHW input

    fwd = build_fused_forward(params, 16, 16)
    out = jax.block_until_ready(fwd(x))

    # shapes: (16-1)*2+6=36 -> 36-5+1=32 -> (32-1)*2+3=65
    assert out.shape == (2, 2, 65, 65), out.shape
    ref = ref_forward(x, params)
    err = float(jnp.max(jnp.abs(out - ref)))
    # bf16 MXU operands with f32 accumulation -> relaxed tolerance vs f32 ref.
    assert jnp.allclose(out, ref, atol=8e-2, rtol=8e-2), err
    print("KERNEL_OK")
</pallas_src>

<mosaic_0001>
module attributes {stable_mosaic.version = 11 : i64} {
  func.func @kernel(%arg0: i32, %arg1: memref<2x16x48xbf16, #tpu.memory_space<vmem>>, %arg2: memref<6x48x180xbf16, #tpu.memory_space<vmem>>, %arg3: memref<160x96xbf16, #tpu.memory_space<vmem>>, %arg4: memref<1x192xf32, #tpu.memory_space<vmem>>, %arg5: memref<5x180x192xbf16, #tpu.memory_space<vmem>>, %arg6: memref<3x192x130xbf16, #tpu.memory_space<vmem>>, %arg7: memref<65x96xbf16, #tpu.memory_space<vmem>>, %arg8: memref<1x130xf32, #tpu.memory_space<vmem>>, %arg9: memref<2x65x130xf32, #tpu.memory_space<vmem>>, %arg10: memref<2x96x180xbf16, #tpu.memory_space<vmem>>, %arg11: memref<2x160x180xbf16, #tpu.memory_space<vmem>>, %arg12: memref<2x96x130xbf16, #tpu.memory_space<vmem>>) attributes {dimension_semantics = [#tpu.dimension_semantics<parallel>], iteration_bounds = array<i64: 1>, scalar_prefetch = 0 : i64, scratch_operands = 3 : i64, tpu.core_type = #tpu.core_type<tc>, window_params = [{transform_indices = @transform_0, window_bounds = array<i64: 2, 16, 48>}, {pipeline_mode = #tpu.pipeline_mode<synchronous>, transform_indices = @transform_1, window_bounds = array<i64: 6, 48, 180>}, {pipeline_mode = #tpu.pipeline_mode<synchronous>, transform_indices = @transform_2, window_bounds = array<i64: 160, 96>}, {pipeline_mode = #tpu.pipeline_mode<synchronous>, transform_indices = @transform_3, window_bounds = array<i64: 1, 192>}, {pipeline_mode = #tpu.pipeline_mode<synchronous>, transform_indices = @transform_4, window_bounds = array<i64: 5, 180, 192>}, {pipeline_mode = #tpu.pipeline_mode<synchronous>, transform_indices = @transform_5, window_bounds = array<i64: 3, 192, 130>}, {pipeline_mode = #tpu.pipeline_mode<synchronous>, transform_indices = @transform_6, window_bounds = array<i64: 65, 96>}, {pipeline_mode = #tpu.pipeline_mode<synchronous>, transform_indices = @transform_7, window_bounds = array<i64: 1, 130>}, {transform_indices = @transform_8, window_bounds = array<i64: 2, 65, 130>}]} {
    %c0 = arith.constant 0 : index
    %c0_0 = arith.constant 0 : index
    %c0_1 = arith.constant 0 : index
    %0 = vector.load %arg1[%c0, %c0_0, %c0_1] : memref<2x16x48xbf16, #tpu.memory_space<vmem>>, vector<1x16x48xbf16>
    %1 = vector.shape_cast %0 : vector<1x16x48xbf16> to vector<16x48xbf16>
    %c0_2 = arith.constant 0 : index
    %c0_3 = arith.constant 0 : index
    %c0_4 = arith.constant 0 : index
    %2 = vector.load %arg2[%c0_2, %c0_3, %c0_4] : memref<6x48x180xbf16, #tpu.memory_space<vmem>>, vector<1x48x180xbf16>
    %3 = vector.shape_cast %2 : vector<1x48x180xbf16> to vector<48x180xbf16>
    %cst = arith.constant dense<0.000000e+00> : vector<16x180xf32>
    %4 = tpu.matmul %1, %3, %cst {dimension_numbers = #tpu.dot_dimension_numbers<[1], [0], [0], [1], [0, 0, 1, 1], [], []>} : vector<16x48xbf16>, vector<48x180xbf16>, vector<16x180xf32> -> vector<16x180xf32>
    %5 = arith.truncf %4 : vector<16x180xf32> to vector<16x180xbf16>
    %c0_5 = arith.constant 0 : index
    %c0_6 = arith.constant 0 : index
    %c0_7 = arith.constant 0 : index
    %6 = vector.load %arg10[%c0_5, %c0_6, %c0_7] : memref<2x96x180xbf16, #tpu.memory_space<vmem>>, vector<1x16x180xbf16>
    %7 = vector.shape_cast %6 : vector<1x16x180xbf16> to vector<16x180xbf16>
    %8 = vector.shape_cast %5 : vector<16x180xbf16> to vector<1x16x180xbf16>
    tpu.vector_store %arg10[%c0_5, %c0_6, %c0_7], %8 {strides = array<i32>} : memref<2x96x180xbf16, #tpu.memory_space<vmem>>, vector<1x16x180xbf16>,
    %c1 = arith.constant 1 : index
    %c0_8 = arith.constant 0 : index
    %c0_9 = arith.constant 0 : index
    %9 = vector.load %arg2[%c1, %c0_8, %c0_9] : memref<6x48x180xbf16, #tpu.memory_space<vmem>>, vector<1x48x180xbf16>
    %10 = vector.shape_cast %9 : vector<1x48x180xbf16> to vector<48x180xbf16>
    %cst_10 = arith.constant dense<0.000000e+00> : vector<16x180xf32>
    %11 = tpu.matmul %1, %10, %cst_10 {dimension_numbers = #tpu.dot_dimension_numbers<[1], [0], [0], [1], [0, 0, 1, 1], [], []>} : vector<16x48xbf16>, vector<48x180xbf16>, vector<16x180xf32> -> vector<16x180xf32>
    %12 = arith.truncf %11 : vector<16x180xf32> to vector<16x180xbf16>
    %c0_11 = arith.constant 0 : index
    %c16 = arith.constant 16 : index
    %c0_12 = arith.constant 0 : index
    %13 = vector.load %arg10[%c0_11, %c16, %c0_12] : memref<2x96x180xbf16, #tpu.memory_space<vmem>>, vector<1x16x180xbf16>
    %14 = vector.shape_cast %13 : vector<1x16x180xbf16> to vector<16x180xbf16>
    %15 = vector.shape_cast %12 : vector<16x180xbf16> to vector<1x16x180xbf16>
    tpu.vector_store %arg10[%c0_11, %c16, %c0_12], %15 {strides = array<i32>} : memref<2x96x180xbf16, #tpu.memory_space<vmem>>, vector<1x16x180xbf16>,
    %c2 = arith.constant 2 : index
    %c0_13 = arith.constant 0 : index
    %c0_14 = arith.constant 0 : index
    %16 = vector.load %arg2[%c2, %c0_13, %c0_14] : memref<6x48x180xbf16, #tpu.memory_space<vmem>>, vector<1x48x180xbf16>
    %17 = vector.shape_cast %16 : vector<1x48x180xbf16> to vector<48x180xbf16>
    %cst_15 = arith.constant dense<0.000000e+00> : vector<16x180xf32>
    %18 = tpu.matmul %1, %17, %cst_15 {dimension_numbers = #tpu.dot_dimension_numbers<[1], [0], [0], [1], [0, 0, 1, 1], [], []>} : vector<16x48xbf16>, vector<48x180xbf16>, vector<16x180xf32> -> vector<16x180xf32>
    %19 = arith.truncf %18 : vector<16x180xf32> to vector<16x180xbf16>
    %c0_16 = arith.constant 0 : index
    %c32 = arith.constant 32 : index
    %c0_17 = arith.constant 0 : index
    %20 = vector.load %arg10[%c0_16, %c32, %c0_17] : memref<2x96x180xbf16, #tpu.memory_space<vmem>>, vector<1x16x180xbf16>
    %21 = vector.shape_cast %20 : vector<1x16x180xbf16> to vector<16x180xbf16>
    %22 = vector.shape_cast %19 : vector<16x180xbf16> to vector<1x16x180xbf16>
    tpu.vector_store %arg10[%c0_16, %c32, %c0_17], %22 {strides = array<i32>} : memref<2x96x180xbf16, #tpu.memory_space<vmem>>, vector<1x16x180xbf16>,
    %c3 = arith.constant 3 : index
    %c0_18 = arith.constant 0 : index
    %c0_19 = arith.constant 0 : index
    %23 = vector.load %arg2[%c3, %c0_18, %c0_19] : memref<6x48x180xbf16, #tpu.memory_space<vmem>>, vector<1x48x180xbf16>
    %24 = vector.shape_cast %23 : vector<1x48x180xbf16> to vector<48x180xbf16>
    %cst_20 = arith.constant dense<0.000000e+00> : vector<16x180xf32>
    %25 = tpu.matmul %1, %24, %cst_20 {dimension_numbers = #tpu.dot_dimension_numbers<[1], [0], [0], [1], [0, 0, 1, 1], [], []>} : vector<16x48xbf16>, vector<48x180xbf16>, vector<16x180xf32> -> vector<16x180xf32>
    %26 = arith.truncf %25 : vector<16x180xf32> to vector<16x180xbf16>
    %c0_21 = arith.constant 0 : index
    %c48 = arith.constant 48 : index
    %c0_22 = arith.constant 0 : index
    %27 = vector.load %arg10[%c0_21, %c48, %c0_22] : memref<2x96x180xbf16, #tpu.memory_space<vmem>>, vector<1x16x180xbf16>
    %28 = vector.shape_cast %27 : vector<1x16x180xbf16> to vector<16x180xbf16>
    %29 = vector.shape_cast %26 : vector<16x180xbf16> to vector<1x16x180xbf16>
    tpu.vector_store %arg10[%c0_21, %c48, %c0_22], %29 {strides = array<i32>} : memref<2x96x180xbf16, #tpu.memory_space<vmem>>, vector<1x16x180xbf16>,
    %c4 = arith.constant 4 : index
    %c0_23 = arith.constant 0 : index
    %c0_24 = arith.constant 0 : index
    %30 = vector.load %arg2[%c4, %c0_23, %c0_24] : memref<6x48x180xbf16, #tpu.memory_space<vmem>>, vector<1x48x180xbf16>
    %31 = vector.shape_cast %30 : vector<1x48x180xbf16> to vector<48x180xbf16>
    %cst_25 = arith.constant dense<0.000000e+00> : vector<16x180xf32>
    %32 = tpu.matmul %1, %31, %cst_25 {dimension_numbers = #tpu.dot_dimension_numbers<[1], [0], [0], [1], [0, 0, 1, 1], [], []>} : vector<16x48xbf16>, vector<48x180xbf16>, vector<16x180xf32> -> vector<16x180xf32>
    %33 = arith.truncf %32 : vector<16x180xf32> to vector<16x180xbf16>
    %c0_26 = arith.constant 0 : index
    %c64 = arith.constant 64 : index
    %c0_27 = arith.constant 0 : index
    %34 = vector.load %arg10[%c0_26, %c64, %c0_27] : memref<2x96x180xbf16, #tpu.memory_space<vmem>>, vector<1x16x180xbf16>
    %35 = vector.shape_cast %34 : vector<1x16x180xbf16> to vector<16x180xbf16>
    %36 = vector.shape_cast %33 : vector<16x180xbf16> to vector<1x16x180xbf16>
    tpu.vector_store %arg10[%c0_26, %c64, %c0_27], %36 {strides = array<i32>} : memref<2x96x180xbf16, #tpu.memory_space<vmem>>, vector<1x16x180xbf16>,
    %c5 = arith.constant 5 : index
    %c0_28 = arith.constant 0 : index
    %c0_29 = arith.constant 0 : index
    %37 = vector.load %arg2[%c5, %c0_28, %c0_29] : memref<6x48x180xbf16, #tpu.memory_space<vmem>>, vector<1x48x180xbf16>
    %38 = vector.shape_cast %37 : vector<1x48x180xbf16> to vector<48x180xbf16>
    %cst_30 = arith.constant dense<0.000000e+00> : vector<16x180xf32>
    %39 = tpu.matmul %1, %38, %cst_30 {dimension_numbers = #tpu.dot_dimension_numbers<[1], [0], [0], [1], [0, 0, 1, 1], [], []>} : vector<16x48xbf16>, vector<48x180xbf16>, vector<16x180xf32> -> vector<16x180xf32>
    %40 = arith.truncf %39 : vector<16x180xf32> to vector<16x180xbf16>
    %c0_31 = arith.constant 0 : index
    %c80 = arith.constant 80 : index
    %c0_32 = arith.constant 0 : index
    %41 = vector.load %arg10[%c0_31, %c80, %c0_32] : memref<2x96x180xbf16, #tpu.memory_space<vmem>>, vector<1x16x180xbf16>
    %42 = vector.shape_cast %41 : vector<1x16x180xbf16> to vector<16x180xbf16>
    %43 = vector.shape_cast %40 : vector<16x180xbf16> to vector<1x16x180xbf16>
    tpu.vector_store %arg10[%c0_31, %c80, %c0_32], %43 {strides = array<i32>} : memref<2x96x180xbf16, #tpu.memory_space<vmem>>, vector<1x16x180xbf16>,
    %c0_33 = arith.constant 0 : index
    %c0_34 = arith.constant 0 : index
    %44 = vector.load %arg3[%c0_33, %c0_34] : memref<160x96xbf16, #tpu.memory_space<vmem>>, vector<160x96xbf16>
    %c0_35 = arith.constant 0 : index
    %c0_36 = arith.constant 0 : index
    %c0_37 = arith.constant 0 : index
    %45 = vector.load %arg10[%c0_35, %c0_36, %c0_37] : memref<2x96x180xbf16, #tpu.memory_space<vmem>>, vector<1x96x180xbf16>
    %46 = vector.shape_cast %45 : vector<1x96x180xbf16> to vector<96x180xbf16>
    %cst_38 = arith.constant dense<0.000000e+00> : vector<160x180xf32>
    %47 = tpu.matmul %44, %46, %cst_38 {dimension_numbers = #tpu.dot_dimension_numbers<[1], [0], [0], [1], [0, 0, 1, 1], [], []>} : vector<160x96xbf16>, vector<96x180xbf16>, vector<160x180xf32> -> vector<160x180xf32>
    %48 = arith.truncf %47 : vector<160x180xf32> to vector<160x180xbf16>
    %c0_39 = arith.constant 0 : index
    %c0_40 = arith.constant 0 : index
    %c0_41 = arith.constant 0 : index
    %49 = vector.load %arg11[%c0_39, %c0_40, %c0_41] : memref<2x160x180xbf16, #tpu.memory_space<vmem>>, vector<1x160x180xbf16>
    %50 = vector.shape_cast %49 : vector<1x160x180xbf16> to vector<160x180xbf16>
    %51 = vector.shape_cast %48 : vector<160x180xbf16> to vector<1x160x180xbf16>
    tpu.vector_store %arg11[%c0_39, %c0_40, %c0_41], %51 {strides = array<i32>} : memref<2x160x180xbf16, #tpu.memory_space<vmem>>, vector<1x160x180xbf16>,
    %c0_42 = arith.constant 0 : index
    %c0_43 = arith.constant 0 : index
    %52 = vector.load %arg4[%c0_42, %c0_43] : memref<1x192xf32, #tpu.memory_space<vmem>>, vector<1x192xf32>
    %53 = vector.shape_cast %52 : vector<1x192xf32> to vector<1x192xf32>
    %54 = vector.broadcast %53 : vector<1x192xf32> to vector<32x192xf32>
    %c0_44 = arith.constant 0 : index
    %c0_45 = arith.constant 0 : index
    %c0_46 = arith.constant 0 : index
    %55 = vector.load %arg11[%c0_44, %c0_45, %c0_46] : memref<2x160x180xbf16, #tpu.memory_space<vmem>>, vector<1x32x180xbf16>
    %56 = vector.shape_cast %55 : vector<1x32x180xbf16> to vector<32x180xbf16>
    %c0_47 = arith.constant 0 : index
    %c0_48 = arith.constant 0 : index
    %c0_49 = arith.constant 0 : index
    %57 = vector.load %arg5[%c0_47, %c0_48, %c0_49] : memref<5x180x192xbf16, #tpu.memory_space<vmem>>, vector<1x180x192xbf16>
    %58 = vector.shape_cast %57 : vector<1x180x192xbf16> to vector<180x192xbf16>
    %cst_50 = arith.constant dense<0.000000e+00> : vector<32x192xf32>
    %59 = tpu.matmul %56, %58, %cst_50 {dimension_numbers = #tpu.dot_dimension_numbers<[1], [0], [0], [1], [0, 0, 1, 1], [], []>} : vector<32x180xbf16>, vector<180x192xbf16>, vector<32x192xf32> -> vector<32x192xf32>
    %60 = arith.addf %54, %59 : vector<32x192xf32>
    %c0_51 = arith.constant 0 : index
    %c32_52 = arith.constant 32 : index
    %c0_53 = arith.constant 0 : index
    %61 = vector.load %arg11[%c0_51, %c32_52, %c0_53] : memref<2x160x180xbf16, #tpu.memory_space<vmem>>, vector<1x32x180xbf16>
    %62 = vector.shape_cast %61 : vector<1x32x180xbf16> to vector<32x180xbf16>
    %c1_54 = arith.constant 1 : index
    %c0_55 = arith.constant 0 : index
    %c0_56 = arith.constant 0 : index
    %63 = vector.load %arg5[%c1_54, %c0_55, %c0_56] : memref<5x180x192xbf16, #tpu.memory_space<vmem>>, vector<1x180x192xbf16>
    %64 = vector.shape_cast %63 : vector<1x180x192xbf16> to vector<180x192xbf16>
    %cst_57 = arith.constant dense<0.000000e+00> : vector<32x192xf32>
    %65 = tpu.matmul %62, %64, %cst_57 {dimension_numbers = #tpu.dot_dimension_numbers<[1], [0], [0], [1], [0, 0, 1, 1], [], []>} : vector<32x180xbf16>, vector<180x192xbf16>, vector<32x192xf32> -> vector<32x192xf32>
    %66 = arith.addf %60, %65 : vector<32x192xf32>
    %c0_58 = arith.constant 0 : index
    %c64_59 = arith.constant 64 : index
    %c0_60 = arith.constant 0 : index
    %67 = vector.load %arg11[%c0_58, %c64_59, %c0_60] : memref<2x160x180xbf16, #tpu.memory_space<vmem>>, vector<1x32x180xbf16>
    %68 = vector.shape_cast %67 : vector<1x32x180xbf16> to vector<32x180xbf16>
    %c2_61 = arith.constant 2 : index
    %c0_62 = arith.constant 0 : index
    %c0_63 = arith.constant 0 : index
    %69 = vector.load %arg5[%c2_61, %c0_62, %c0_63] : memref<5x180x192xbf16, #tpu.memory_space<vmem>>, vector<1x180x192xbf16>
    %70 = vector.shape_cast %69 : vector<1x180x192xbf16> to vector<180x192xbf16>
    %cst_64 = arith.constant dense<0.000000e+00> : vector<32x192xf32>
    %71 = tpu.matmul %68, %70, %cst_64 {dimension_numbers = #tpu.dot_dimension_numbers<[1], [0], [0], [1], [0, 0, 1, 1], [], []>} : vector<32x180xbf16>, vector<180x192xbf16>, vector<32x192xf32> -> vector<32x192xf32>
    %72 = arith.addf %66, %71 : vector<32x192xf32>
    %c0_65 = arith.constant 0 : index
    %c96 = arith.constant 96 : index
    %c0_66 = arith.constant 0 : index
    %73 = vector.load %arg11[%c0_65, %c96, %c0_66] : memref<2x160x180xbf16, #tpu.memory_space<vmem>>, vector<1x32x180xbf16>
    %74 = vector.shape_cast %73 : vector<1x32x180xbf16> to vector<32x180xbf16>
    %c3_67 = arith.constant 3 : index
    %c0_68 = arith.constant 0 : index
    %c0_69 = arith.constant 0 : index
    %75 = vector.load %arg5[%c3_67, %c0_68, %c0_69] : memref<5x180x192xbf16, #tpu.memory_space<vmem>>, vector<1x180x192xbf16>
    %76 = vector.shape_cast %75 : vector<1x180x192xbf16> to vector<180x192xbf16>
    %cst_70 = arith.constant dense<0.000000e+00> : vector<32x192xf32>
    %77 = tpu.matmul %74, %76, %cst_70 {dimension_numbers = #tpu.dot_dimension_numbers<[1], [0], [0], [1], [0, 0, 1, 1], [], []>} : vector<32x180xbf16>, vector<180x192xbf16>, vector<32x192xf32> -> vector<32x192xf32>
    %78 = arith.addf %72, %77 : vector<32x192xf32>
    %c0_71 = arith.constant 0 : index
    %c128 = arith.constant 128 : index
    %c0_72 = arith.constant 0 : index
    %79 = vector.load %arg11[%c0_71, %c128, %c0_72] : memref<2x160x180xbf16, #tpu.memory_space<vmem>>, vector<1x32x180xbf16>
    %80 = vector.shape_cast %79 : vector<1x32x180xbf16> to vector<32x180xbf16>
    %c4_73 = arith.constant 4 : index
    %c0_74 = arith.constant 0 : index
    %c0_75 = arith.constant 0 : index
    %81 = vector.load %arg5[%c4_73, %c0_74, %c0_75] : memref<5x180x192xbf16, #tpu.memory_space<vmem>>, vector<1x180x192xbf16>
    %82 = vector.shape_cast %81 : vector<1x180x192xbf16> to vector<180x192xbf16>
    %cst_76 = arith.constant dense<0.000000e+00> : vector<32x192xf32>
    %83 = tpu.matmul %80, %82, %cst_76 {dimension_numbers = #tpu.dot_dimension_numbers<[1], [0], [0], [1], [0, 0, 1, 1], [], []>} : vector<32x180xbf16>, vector<180x192xbf16>, vector<32x192xf32> -> vector<32x192xf32>
    %84 = arith.addf %78, %83 : vector<32x192xf32>
    %85 = arith.truncf %84 : vector<32x192xf32> to vector<32x192xbf16>
    %c0_77 = arith.constant 0 : index
    %c0_78 = arith.constant 0 : index
    %c0_79 = arith.constant 0 : index
    %86 = vector.load %arg6[%c0_77, %c0_78, %c0_79] : memref<3x192x130xbf16, #tpu.memory_space<vmem>>, vector<1x192x130xbf16>
    %87 = vector.shape_cast %86 : vector<1x192x130xbf16> to vector<192x130xbf16>
    %cst_80 = arith.constant dense<0.000000e+00> : vector<32x130xf32>
    %88 = tpu.matmul %85, %87, %cst_80 {dimension_numbers = #tpu.dot_dimension_numbers<[1], [0], [0], [1], [0, 0, 1, 1], [], []>} : vector<32x192xbf16>, vector<192x130xbf16>, vector<32x130xf32> -> vector<32x130xf32>
    %89 = arith.truncf %88 : vector<32x130xf32> to vector<32x130xbf16>
    %c0_81 = arith.constant 0 : index
    %c0_82 = arith.constant 0 : index
    %c0_83 = arith.constant 0 : index
    %90 = vector.load %arg12[%c0_81, %c0_82, %c0_83] : memref<2x96x130xbf16, #tpu.memory_space<vmem>>, vector<1x32x130xbf16>
    %91 = vector.shape_cast %90 : vector<1x32x130xbf16> to vector<32x130xbf16>
    %92 = vector.shape_cast %89 : vector<32x130xbf16> to vector<1x32x130xbf16>
    tpu.vector_store %arg12[%c0_81, %c0_82, %c0_83], %92 {strides = array<i32>} : memref<2x96x130xbf16, #tpu.memory_space<vmem>>, vector<1x32x130xbf16>,
    %c1_84 = arith.constant 1 : index
    %c0_85 = arith.constant 0 : index
    %c0_86 = arith.constant 0 : index
    %93 = vector.load %arg6[%c1_84, %c0_85, %c0_86] : memref<3x192x130xbf16, #tpu.memory_space<vmem>>, vector<1x192x130xbf16>
    %94 = vector.shape_cast %93 : vector<1x192x130xbf16> to vector<192x130xbf16>
    %cst_87 = arith.constant dense<0.000000e+00> : vector<32x130xf32>
    %95 = tpu.matmul %85, %94, %cst_87 {dimension_numbers = #tpu.dot_dimension_numbers<[1], [0], [0], [1], [0, 0, 1, 1], [], []>} : vector<32x192xbf16>, vector<192x130xbf16>, vector<32x130xf32> -> vector<32x130xf32>
    %96 = arith.truncf %95 : vector<32x130xf32> to vector<32x130xbf16>
    %c0_88 = arith.constant 0 : index
    %c32_89 = arith.constant 32 : index
    %c0_90 = arith.constant 0 : index
    %97 = vector.load %arg12[%c0_88, %c32_89, %c0_90] : memref<2x96x130xbf16, #tpu.memory_space<vmem>>, vector<1x32x130xbf16>
    %98 = vector.shape_cast %97 : vector<1x32x130xbf16> to vector<32x130xbf16>
    %99 = vector.shape_cast %96 : vector<32x130xbf16> to vector<1x32x130xbf16>
    tpu.vector_store %arg12[%c0_88, %c32_89, %c0_90], %99 {strides = array<i32>} : memref<2x96x130xbf16, #tpu.memory_space<vmem>>, vector<1x32x130xbf16>,
    %c2_91 = arith.constant 2 : index
    %c0_92 = arith.constant 0 : index
    %c0_93 = arith.constant 0 : index
    %100 = vector.load %arg6[%c2_91, %c0_92, %c0_93] : memref<3x192x130xbf16, #tpu.memory_space<vmem>>, vector<1x192x130xbf16>
    %101 = vector.shape_cast %100 : vector<1x192x130xbf16> to vector<192x130xbf16>
    %cst_94 = arith.constant dense<0.000000e+00> : vector<32x130xf32>
    %102 = tpu.matmul %85, %101, %cst_94 {dimension_numbers = #tpu.dot_dimension_numbers<[1], [0], [0], [1], [0, 0, 1, 1], [], []>} : vector<32x192xbf16>, vector<192x130xbf16>, vector<32x130xf32> -> vector<32x130xf32>
    %103 = arith.truncf %102 : vector<32x130xf32> to vector<32x130xbf16>
    %c0_95 = arith.constant 0 : index
    %c64_96 = arith.constant 64 : index
    %c0_97 = arith.constant 0 : index
    %104 = vector.load %arg12[%c0_95, %c64_96, %c0_97] : memref<2x96x130xbf16, #tpu.memory_space<vmem>>, vector<1x32x130xbf16>
    %105 = vector.shape_cast %104 : vector<1x32x130xbf16> to vector<32x130xbf16>
    %106 = vector.shape_cast %103 : vector<32x130xbf16> to vector<1x32x130xbf16>
    tpu.vector_store %arg12[%c0_95, %c64_96, %c0_97], %106 {strides = array<i32>} : memref<2x96x130xbf16, #tpu.memory_space<vmem>>, vector<1x32x130xbf16>,
    %c0_98 = arith.constant 0 : index
    %c0_99 = arith.constant 0 : index
    %107 = vector.load %arg7[%c0_98, %c0_99] : memref<65x96xbf16, #tpu.memory_space<vmem>>, vector<65x96xbf16>
    %c0_100 = arith.constant 0 : index
    %c0_101 = arith.constant 0 : index
    %c0_102 = arith.constant 0 : index
    %108 = vector.load %arg12[%c0_100, %c0_101, %c0_102] : memref<2x96x130xbf16, #tpu.memory_space<vmem>>, vector<1x96x130xbf16>
    %109 = vector.shape_cast %108 : vector<1x96x130xbf16> to vector<96x130xbf16>
    %cst_103 = arith.constant dense<0.000000e+00> : vector<65x130xf32>
    %110 = tpu.matmul %107, %109, %cst_103 {dimension_numbers = #tpu.dot_dimension_numbers<[1], [0], [0], [1], [0, 0, 1, 1], [], []>} : vector<65x96xbf16>, vector<96x130xbf16>, vector<65x130xf32> -> vector<65x130xf32>
    %c0_104 = arith.constant 0 : index
    %c0_105 = arith.constant 0 : index
    %111 = vector.load %arg8[%c0_104, %c0_105] : memref<1x130xf32, #tpu.memory_space<vmem>>, vector<1x130xf32>
    %112 = vector.broadcast %111 : vector<1x130xf32> to vector<65x130xf32>
    %113 = arith.addf %110, %112 : vector<65x130xf32>
    %c0_106 = arith.constant 0 : index
    %c0_107 = arith.constant 0 : index
    %c0_108 = arith.constant 0 : index
    %114 = vector.load %arg9[%c0_106, %c0_107, %c0_108] : memref<2x65x130xf32, #tpu.memory_space<vmem>>, vector<1x65x130xf32>
    %115 = vector.shape_cast %114 : vector<1x65x130xf32> to vector<65x130xf32>
    %116 = vector.shape_cast %113 : vector<65x130xf32> to vector<1x65x130xf32>
    tpu.vector_store %arg9[%c0_106, %c0_107, %c0_108], %116 {strides = array<i32>} : memref<2x65x130xf32, #tpu.memory_space<vmem>>, vector<1x65x130xf32>,
    %c1_109 = arith.constant 1 : index
    %c0_110 = arith.constant 0 : index
    %c0_111 = arith.constant 0 : index
    %117 = vector.load %arg1[%c1_109, %c0_110, %c0_111] : memref<2x16x48xbf16, #tpu.memory_space<vmem>>, vector<1x16x48xbf16>
    %118 = vector.shape_cast %117 : vector<1x16x48xbf16> to vector<16x48xbf16>
    %c0_112 = arith.constant 0 : index
    %c0_113 = arith.constant 0 : index
    %c0_114 = arith.constant 0 : index
    %119 = vector.load %arg2[%c0_112, %c0_113, %c0_114] : memref<6x48x180xbf16, #tpu.memory_space<vmem>>, vector<1x48x180xbf16>
    %120 = vector.shape_cast %119 : vector<1x48x180xbf16> to vector<48x180xbf16>
    %cst_115 = arith.constant dense<0.000000e+00> : vector<16x180xf32>
    %121 = tpu.matmul %118, %120, %cst_115 {dimension_numbers = #tpu.dot_dimension_numbers<[1], [0], [0], [1], [0, 0, 1, 1], [], []>} : vector<16x48xbf16>, vector<48x180xbf16>, vector<16x180xf32> -> vector<16x180xf32>
    %122 = arith.truncf %121 : vector<16x180xf32> to vector<16x180xbf16>
    %c1_116 = arith.constant 1 : index
    %c0_117 = arith.constant 0 : index
    %c0_118 = arith.constant 0 : index
    %123 = vector.load %arg10[%c1_116, %c0_117, %c0_118] : memref<2x96x180xbf16, #tpu.memory_space<vmem>>, vector<1x16x180xbf16>
    %124 = vector.shape_cast %123 : vector<1x16x180xbf16> to vector<16x180xbf16>
    %125 = vector.shape_cast %122 : vector<16x180xbf16> to vector<1x16x180xbf16>
    tpu.vector_store %arg10[%c1_116, %c0_117, %c0_118], %125 {strides = array<i32>} : memref<2x96x180xbf16, #tpu.memory_space<vmem>>, vector<1x16x180xbf16>,
    %c1_119 = arith.constant 1 : index
    %c0_120 = arith.constant 0 : index
    %c0_121 = arith.constant 0 : index
    %126 = vector.load %arg2[%c1_119, %c0_120, %c0_121] : memref<6x48x180xbf16, #tpu.memory_space<vmem>>, vector<1x48x180xbf16>
    %127 = vector.shape_cast %126 : vector<1x48x180xbf16> to vector<48x180xbf16>
    %cst_122 = arith.constant dense<0.000000e+00> : vector<16x180xf32>
    %128 = tpu.matmul %118, %127, %cst_122 {dimension_numbers = #tpu.dot_dimension_numbers<[1], [0], [0], [1], [0, 0, 1, 1], [], []>} : vector<16x48xbf16>, vector<48x180xbf16>, vector<16x180xf32> -> vector<16x180xf32>
    %129 = arith.truncf %128 : vector<16x180xf32> to vector<16x180xbf16>
    %c1_123 = arith.constant 1 : index
    %c16_124 = arith.constant 16 : index
    %c0_125 = arith.constant 0 : index
    %130 = vector.load %arg10[%c1_123, %c16_124, %c0_125] : memref<2x96x180xbf16, #tpu.memory_space<vmem>>, vector<1x16x180xbf16>
    %131 = vector.shape_cast %130 : vector<1x16x180xbf16> to vector<16x180xbf16>
    %132 = vector.shape_cast %129 : vector<16x180xbf16> to vector<1x16x180xbf16>
    tpu.vector_store %arg10[%c1_123, %c16_124, %c0_125], %132 {strides = array<i32>} : memref<2x96x180xbf16, #tpu.memory_space<vmem>>, vector<1x16x180xbf16>,
    %c2_126 = arith.constant 2 : index
    %c0_127 = arith.constant 0 : index
    %c0_128 = arith.constant 0 : index
    %133 = vector.load %arg2[%c2_126, %c0_127, %c0_128] : memref<6x48x180xbf16, #tpu.memory_space<vmem>>, vector<1x48x180xbf16>
    %134 = vector.shape_cast %133 : vector<1x48x180xbf16> to vector<48x180xbf16>
    %cst_129 = arith.constant dense<0.000000e+00> : vector<16x180xf32>
    %135 = tpu.matmul %118, %134, %cst_129 {dimension_numbers = #tpu.dot_dimension_numbers<[1], [0], [0], [1], [0, 0, 1, 1], [], []>} : vector<16x48xbf16>, vector<48x180xbf16>, vector<16x180xf32> -> vector<16x180xf32>
    %136 = arith.truncf %135 : vector<16x180xf32> to vector<16x180xbf16>
    %c1_130 = arith.constant 1 : index
    %c32_131 = arith.constant 32 : index
    %c0_132 = arith.constant 0 : index
    %137 = vector.load %arg10[%c1_130, %c32_131, %c0_132] : memref<2x96x180xbf16, #tpu.memory_space<vmem>>, vector<1x16x180xbf16>
    %138 = vector.shape_cast %137 : vector<1x16x180xbf16> to vector<16x180xbf16>
    %139 = vector.shape_cast %136 : vector<16x180xbf16> to vector<1x16x180xbf16>
    tpu.vector_store %arg10[%c1_130, %c32_131, %c0_132], %139 {strides = array<i32>} : memref<2x96x180xbf16, #tpu.memory_space<vmem>>, vector<1x16x180xbf16>,
    %c3_133 = arith.constant 3 : index
    %c0_134 = arith.constant 0 : index
    %c0_135 = arith.constant 0 : index
    %140 = vector.load %arg2[%c3_133, %c0_134, %c0_135] : memref<6x48x180xbf16, #tpu.memory_space<vmem>>, vector<1x48x180xbf16>
    %141 = vector.shape_cast %140 : vector<1x48x180xbf16> to vector<48x180xbf16>
    %cst_136 = arith.constant dense<0.000000e+00> : vector<16x180xf32>
    %142 = tpu.matmul %118, %141, %cst_136 {dimension_numbers = #tpu.dot_dimension_numbers<[1], [0], [0], [1], [0, 0, 1, 1], [], []>} : vector<16x48xbf16>, vector<48x180xbf16>, vector<16x180xf32> -> vector<16x180xf32>
    %143 = arith.truncf %142 : vector<16x180xf32> to vector<16x180xbf16>
    %c1_137 = arith.constant 1 : index
    %c48_138 = arith.constant 48 : index
    %c0_139 = arith.constant 0 : index
    %144 = vector.load %arg10[%c1_137, %c48_138, %c0_139] : memref<2x96x180xbf16, #tpu.memory_space<vmem>>, vector<1x16x180xbf16>
    %145 = vector.shape_cast %144 : vector<1x16x180xbf16> to vector<16x180xbf16>
    %146 = vector.shape_cast %143 : vector<16x180xbf16> to vector<1x16x180xbf16>
    tpu.vector_store %arg10[%c1_137, %c48_138, %c0_139], %146 {strides = array<i32>} : memref<2x96x180xbf16, #tpu.memory_space<vmem>>, vector<1x16x180xbf16>,
    %c4_140 = arith.constant 4 : index
    %c0_141 = arith.constant 0 : index
    %c0_142 = arith.constant 0 : index
    %147 = vector.load %arg2[%c4_140, %c0_141, %c0_142] : memref<6x48x180xbf16, #tpu.memory_space<vmem>>, vector<1x48x180xbf16>
    %148 = vector.shape_cast %147 : vector<1x48x180xbf16> to vector<48x180xbf16>
    %cst_143 = arith.constant dense<0.000000e+00> : vector<16x180xf32>
    %149 = tpu.matmul %118, %148, %cst_143 {dimension_numbers = #tpu.dot_dimension_numbers<[1], [0], [0], [1], [0, 0, 1, 1], [], []>} : vector<16x48xbf16>, vector<48x180xbf16>, vector<16x180xf32> -> vector<16x180xf32>
    %150 = arith.truncf %149 : vector<16x180xf32> to vector<16x180xbf16>
    %c1_144 = arith.constant 1 : index
    %c64_145 = arith.constant 64 : index
    %c0_146 = arith.constant 0 : index
    %151 = vector.load %arg10[%c1_144, %c64_145, %c0_146] : memref<2x96x180xbf16, #tpu.memory_space<vmem>>, vector<1x16x180xbf16>
    %152 = vector.shape_cast %151 : vector<1x16x180xbf16> to vector<16x180xbf16>
    %153 = vector.shape_cast %150 : vector<16x180xbf16> to vector<1x16x180xbf16>
    tpu.vector_store %arg10[%c1_144, %c64_145, %c0_146], %153 {strides = array<i32>} : memref<2x96x180xbf16, #tpu.memory_space<vmem>>, vector<1x16x180xbf16>,
    %c5_147 = arith.constant 5 : index
    %c0_148 = arith.constant 0 : index
    %c0_149 = arith.constant 0 : index
    %154 = vector.load %arg2[%c5_147, %c0_148, %c0_149] : memref<6x48x180xbf16, #tpu.memory_space<vmem>>, vector<1x48x180xbf16>
    %155 = vector.shape_cast %154 : vector<1x48x180xbf16> to vector<48x180xbf16>
    %cst_150 = arith.constant dense<0.000000e+00> : vector<16x180xf32>
    %156 = tpu.matmul %118, %155, %cst_150 {dimension_numbers = #tpu.dot_dimension_numbers<[1], [0], [0], [1], [0, 0, 1, 1], [], []>} : vector<16x48xbf16>, vector<48x180xbf16>, vector<16x180xf32> -> vector<16x180xf32>
    %157 = arith.truncf %156 : vector<16x180xf32> to vector<16x180xbf16>
    %c1_151 = arith.constant 1 : index
    %c80_152 = arith.constant 80 : index
    %c0_153 = arith.constant 0 : index
    %158 = vector.load %arg10[%c1_151, %c80_152, %c0_153] : memref<2x96x180xbf16, #tpu.memory_space<vmem>>, vector<1x16x180xbf16>
    %159 = vector.shape_cast %158 : vector<1x16x180xbf16> to vector<16x180xbf16>
    %160 = vector.shape_cast %157 : vector<16x180xbf16> to vector<1x16x180xbf16>
    tpu.vector_store %arg10[%c1_151, %c80_152, %c0_153], %160 {strides = array<i32>} : memref<2x96x180xbf16, #tpu.memory_space<vmem>>, vector<1x16x180xbf16>,
    %c0_154 = arith.constant 0 : index
    %c0_155 = arith.constant 0 : index
    %161 = vector.load %arg3[%c0_154, %c0_155] : memref<160x96xbf16, #tpu.memory_space<vmem>>, vector<160x96xbf16>
    %c1_156 = arith.constant 1 : index
    %c0_157 = arith.constant 0 : index
    %c0_158 = arith.constant 0 : index
    %162 = vector.load %arg10[%c1_156, %c0_157, %c0_158] : memref<2x96x180xbf16, #tpu.memory_space<vmem>>, vector<1x96x180xbf16>
    %163 = vector.shape_cast %162 : vector<1x96x180xbf16> to vector<96x180xbf16>
    %cst_159 = arith.constant dense<0.000000e+00> : vector<160x180xf32>
    %164 = tpu.matmul %161, %163, %cst_159 {dimension_numbers = #tpu.dot_dimension_numbers<[1], [0], [0], [1], [0, 0, 1, 1], [], []>} : vector<160x96xbf16>, vector<96x180xbf16>, vector<160x180xf32> -> vector<160x180xf32>
    %165 = arith.truncf %164 : vector<160x180xf32> to vector<160x180xbf16>
    %c1_160 = arith.constant 1 : index
    %c0_161 = arith.constant 0 : index
    %c0_162 = arith.constant 0 : index
    %166 = vector.load %arg11[%c1_160, %c0_161, %c0_162] : memref<2x160x180xbf16, #tpu.memory_space<vmem>>, vector<1x160x180xbf16>
    %167 = vector.shape_cast %166 : vector<1x160x180xbf16> to vector<160x180xbf16>
    %168 = vector.shape_cast %165 : vector<160x180xbf16> to vector<1x160x180xbf16>
    tpu.vector_store %arg11[%c1_160, %c0_161, %c0_162], %168 {strides = array<i32>} : memref<2x160x180xbf16, #tpu.memory_space<vmem>>, vector<1x160x180xbf16>,
    %c0_163 = arith.constant 0 : index
    %c0_164 = arith.constant 0 : index
    %169 = vector.load %arg4[%c0_163, %c0_164] : memref<1x192xf32, #tpu.memory_space<vmem>>, vector<1x192xf32>
    %170 = vector.shape_cast %169 : vector<1x192xf32> to vector<1x192xf32>
    %171 = vector.broadcast %170 : vector<1x192xf32> to vector<32x192xf32>
    %c1_165 = arith.constant 1 : index
    %c0_166 = arith.constant 0 : index
    %c0_167 = arith.constant 0 : index
    %172 = vector.load %arg11[%c1_165, %c0_166, %c0_167] : memref<2x160x180xbf16, #tpu.memory_space<vmem>>, vector<1x32x180xbf16>
    %173 = vector.shape_cast %172 : vector<1x32x180xbf16> to vector<32x180xbf16>
    %c0_168 = arith.constant 0 : index
    %c0_169 = arith.constant 0 : index
    %c0_170 = arith.constant 0 : index
    %174 = vector.load %arg5[%c0_168, %c0_169, %c0_170] : memref<5x180x192xbf16, #tpu.memory_space<vmem>>, vector<1x180x192xbf16>
    %175 = vector.shape_cast %174 : vector<1x180x192xbf16> to vector<180x192xbf16>
    %cst_171 = arith.constant dense<0.000000e+00> : vector<32x192xf32>
    %176 = tpu.matmul %173, %175, %cst_171 {dimension_numbers = #tpu.dot_dimension_numbers<[1], [0], [0], [1], [0, 0, 1, 1], [], []>} : vector<32x180xbf16>, vector<180x192xbf16>, vector<32x192xf32> -> vector<32x192xf32>
    %177 = arith.addf %171, %176 : vector<32x192xf32>
    %c1_172 = arith.constant 1 : index
    %c32_173 = arith.constant 32 : index
    %c0_174 = arith.constant 0 : index
    %178 = vector.load %arg11[%c1_172, %c32_173, %c0_174] : memref<2x160x180xbf16, #tpu.memory_space<vmem>>, vector<1x32x180xbf16>
    %179 = vector.shape_cast %178 : vector<1x32x180xbf16> to vector<32x180xbf16>
    %c1_175 = arith.constant 1 : index
    %c0_176 = arith.constant 0 : index
    %c0_177 = arith.constant 0 : index
    %180 = vector.load %arg5[%c1_175, %c0_176, %c0_177] : memref<5x180x192xbf16, #tpu.memory_space<vmem>>, vector<1x180x192xbf16>
    %181 = vector.shape_cast %180 : vector<1x180x192xbf16> to vector<180x192xbf16>
    %cst_178 = arith.constant dense<0.000000e+00> : vector<32x192xf32>
    %182 = tpu.matmul %179, %181, %cst_178 {dimension_numbers = #tpu.dot_dimension_numbers<[1], [0], [0], [1], [0, 0, 1, 1], [], []>} : vector<32x180xbf16>, vector<180x192xbf16>, vector<32x192xf32> -> vector<32x192xf32>
    %183 = arith.addf %177, %182 : vector<32x192xf32>
    %c1_179 = arith.constant 1 : index
    %c64_180 = arith.constant 64 : index
    %c0_181 = arith.constant 0 : index
    %184 = vector.load %arg11[%c1_179, %c64_180, %c0_181] : memref<2x160x180xbf16, #tpu.memory_space<vmem>>, vector<1x32x180xbf16>
    %185 = vector.shape_cast %184 : vector<1x32x180xbf16> to vector<32x180xbf16>
    %c2_182 = arith.constant 2 : index
    %c0_183 = arith.constant 0 : index
    %c0_184 = arith.constant 0 : index
    %186 = vector.load %arg5[%c2_182, %c0_183, %c0_184] : memref<5x180x192xbf16, #tpu.memory_space<vmem>>, vector<1x180x192xbf16>
    %187 = vector.shape_cast %186 : vector<1x180x192xbf16> to vector<180x192xbf16>
    %cst_185 = arith.constant dense<0.000000e+00> : vector<32x192xf32>
    %188 = tpu.matmul %185, %187, %cst_185 {dimension_numbers = #tpu.dot_dimension_numbers<[1], [0], [0], [1], [0, 0, 1, 1], [], []>} : vector<32x180xbf16>, vector<180x192xbf16>, vector<32x192xf32> -> vector<32x192xf32>
    %189 = arith.addf %183, %188 : vector<32x192xf32>
    %c1_186 = arith.constant 1 : index
    %c96_187 = arith.constant 96 : index
    %c0_188 = arith.constant 0 : index
    %190 = vector.load %arg11[%c1_186, %c96_187, %c0_188] : memref<2x160x180xbf16, #tpu.memory_space<vmem>>, vector<1x32x180xbf16>
    %191 = vector.shape_cast %190 : vector<1x32x180xbf16> to vector<32x180xbf16>
    %c3_189 = arith.constant 3 : index
    %c0_190 = arith.constant 0 : index
    %c0_191 = arith.constant 0 : index
    %192 = vector.load %arg5[%c3_189, %c0_190, %c0_191] : memref<5x180x192xbf16, #tpu.memory_space<vmem>>, vector<1x180x192xbf16>
    %193 = vector.shape_cast %192 : vector<1x180x192xbf16> to vector<180x192xbf16>
    %cst_192 = arith.constant dense<0.000000e+00> : vector<32x192xf32>
    %194 = tpu.matmul %191, %193, %cst_192 {dimension_numbers = #tpu.dot_dimension_numbers<[1], [0], [0], [1], [0, 0, 1, 1], [], []>} : vector<32x180xbf16>, vector<180x192xbf16>, vector<32x192xf32> -> vector<32x192xf32>
    %195 = arith.addf %189, %194 : vector<32x192xf32>
    %c1_193 = arith.constant 1 : index
    %c128_194 = arith.constant 128 : index
    %c0_195 = arith.constant 0 : index
    %196 = vector.load %arg11[%c1_193, %c128_194, %c0_195] : memref<2x160x180xbf16, #tpu.memory_space<vmem>>, vector<1x32x180xbf16>
    %197 = vector.shape_cast %196 : vector<1x32x180xbf16> to vector<32x180xbf16>
    %c4_196 = arith.constant 4 : index
    %c0_197 = arith.constant 0 : index
    %c0_198 = arith.constant 0 : index
    %198 = vector.load %arg5[%c4_196, %c0_197, %c0_198] : memref<5x180x192xbf16, #tpu.memory_space<vmem>>, vector<1x180x192xbf16>
    %199 = vector.shape_cast %198 : vector<1x180x192xbf16> to vector<180x192xbf16>
    %cst_199 = arith.constant dense<0.000000e+00> : vector<32x192xf32>
    %200 = tpu.matmul %197, %199, %cst_199 {dimension_numbers = #tpu.dot_dimension_numbers<[1], [0], [0], [1], [0, 0, 1, 1], [], []>} : vector<32x180xbf16>, vector<180x192xbf16>, vector<32x192xf32> -> vector<32x192xf32>
    %201 = arith.addf %195, %200 : vector<32x192xf32>
    %202 = arith.truncf %201 : vector<32x192xf32> to vector<32x192xbf16>
    %c0_200 = arith.constant 0 : index
    %c0_201 = arith.constant 0 : index
    %c0_202 = arith.constant 0 : index
    %203 = vector.load %arg6[%c0_200, %c0_201, %c0_202] : memref<3x192x130xbf16, #tpu.memory_space<vmem>>, vector<1x192x130xbf16>
    %204 = vector.shape_cast %203 : vector<1x192x130xbf16> to vector<192x130xbf16>
    %cst_203 = arith.constant dense<0.000000e+00> : vector<32x130xf32>
    %205 = tpu.matmul %202, %204, %cst_203 {dimension_numbers = #tpu.dot_dimension_numbers<[1], [0], [0], [1], [0, 0, 1, 1], [], []>} : vector<32x192xbf16>, vector<192x130xbf16>, vector<32x130xf32> -> vector<32x130xf32>
    %206 = arith.truncf %205 : vector<32x130xf32> to vector<32x130xbf16>
    %c1_204 = arith.constant 1 : index
    %c0_205 = arith.constant 0 : index
    %c0_206 = arith.constant 0 : index
    %207 = vector.load %arg12[%c1_204, %c0_205, %c0_206] : memref<2x96x130xbf16, #tpu.memory_space<vmem>>, vector<1x32x130xbf16>
    %208 = vector.shape_cast %207 : vector<1x32x130xbf16> to vector<32x130xbf16>
    %209 = vector.shape_cast %206 : vector<32x130xbf16> to vector<1x32x130xbf16>
    tpu.vector_store %arg12[%c1_204, %c0_205, %c0_206], %209 {strides = array<i32>} : memref<2x96x130xbf16, #tpu.memory_space<vmem>>, vector<1x32x130xbf16>,
    %c1_207 = arith.constant 1 : index
    %c0_208 = arith.constant 0 : index
    %c0_209 = arith.constant 0 : index
    %210 = vector.load %arg6[%c1_207, %c0_208, %c0_209] : memref<3x192x130xbf16, #tpu.memory_space<vmem>>, vector<1x192x130xbf16>
    %211 = vector.shape_cast %210 : vector<1x192x130xbf16> to vector<192x130xbf16>
    %cst_210 = arith.constant dense<0.000000e+00> : vector<32x130xf32>
    %212 = tpu.matmul %202, %211, %cst_210 {dimension_numbers = #tpu.dot_dimension_numbers<[1], [0], [0], [1], [0, 0, 1, 1], [], []>} : vector<32x192xbf16>, vector<192x130xbf16>, vector<32x130xf32> -> vector<32x130xf32>
    %213 = arith.truncf %212 : vector<32x130xf32> to vector<32x130xbf16>
    %c1_211 = arith.constant 1 : index
    %c32_212 = arith.constant 32 : index
    %c0_213 = arith.constant 0 : index
    %214 = vector.load %arg12[%c1_211, %c32_212, %c0_213] : memref<2x96x130xbf16, #tpu.memory_space<vmem>>, vector<1x32x130xbf16>
    %215 = vector.shape_cast %214 : vector<1x32x130xbf16> to vector<32x130xbf16>
    %216 = vector.shape_cast %213 : vector<32x130xbf16> to vector<1x32x130xbf16>
    tpu.vector_store %arg12[%c1_211, %c32_212, %c0_213], %216 {strides = array<i32>} : memref<2x96x130xbf16, #tpu.memory_space<vmem>>, vector<1x32x130xbf16>,
    %c2_214 = arith.constant 2 : index
    %c0_215 = arith.constant 0 : index
    %c0_216 = arith.constant 0 : index
    %217 = vector.load %arg6[%c2_214, %c0_215, %c0_216] : memref<3x192x130xbf16, #tpu.memory_space<vmem>>, vector<1x192x130xbf16>
    %218 = vector.shape_cast %217 : vector<1x192x130xbf16> to vector<192x130xbf16>
    %cst_217 = arith.constant dense<0.000000e+00> : vector<32x130xf32>
    %219 = tpu.matmul %202, %218, %cst_217 {dimension_numbers = #tpu.dot_dimension_numbers<[1], [0], [0], [1], [0, 0, 1, 1], [], []>} : vector<32x192xbf16>, vector<192x130xbf16>, vector<32x130xf32> -> vector<32x130xf32>
    %220 = arith.truncf %219 : vector<32x130xf32> to vector<32x130xbf16>
    %c1_218 = arith.constant 1 : index
    %c64_219 = arith.constant 64 : index
    %c0_220 = arith.constant 0 : index
    %221 = vector.load %arg12[%c1_218, %c64_219, %c0_220] : memref<2x96x130xbf16, #tpu.memory_space<vmem>>, vector<1x32x130xbf16>
    %222 = vector.shape_cast %221 : vector<1x32x130xbf16> to vector<32x130xbf16>
    %223 = vector.shape_cast %220 : vector<32x130xbf16> to vector<1x32x130xbf16>
    tpu.vector_store %arg12[%c1_218, %c64_219, %c0_220], %223 {strides = array<i32>} : memref<2x96x130xbf16, #tpu.memory_space<vmem>>, vector<1x32x130xbf16>,
    %c0_221 = arith.constant 0 : index
    %c0_222 = arith.constant 0 : index
    %224 = vector.load %arg7[%c0_221, %c0_222] : memref<65x96xbf16, #tpu.memory_space<vmem>>, vector<65x96xbf16>
    %c1_223 = arith.constant 1 : index
    %c0_224 = arith.constant 0 : index
    %c0_225 = arith.constant 0 : index
    %225 = vector.load %arg12[%c1_223, %c0_224, %c0_225] : memref<2x96x130xbf16, #tpu.memory_space<vmem>>, vector<1x96x130xbf16>
    %226 = vector.shape_cast %225 : vector<1x96x130xbf16> to vector<96x130xbf16>
    %cst_226 = arith.constant dense<0.000000e+00> : vector<65x130xf32>
    %227 = tpu.matmul %224, %226, %cst_226 {dimension_numbers = #tpu.dot_dimension_numbers<[1], [0], [0], [1], [0, 0, 1, 1], [], []>} : vector<65x96xbf16>, vector<96x130xbf16>, vector<65x130xf32> -> vector<65x130xf32>
    %c0_227 = arith.constant 0 : index
    %c0_228 = arith.constant 0 : index
    %228 = vector.load %arg8[%c0_227, %c0_228] : memref<1x130xf32, #tpu.memory_space<vmem>>, vector<1x130xf32>
    %229 = vector.broadcast %228 : vector<1x130xf32> to vector<65x130xf32>
    %230 = arith.addf %227, %229 : vector<65x130xf32>
    %c1_229 = arith.constant 1 : index
    %c0_230 = arith.constant 0 : index
    %c0_231 = arith.constant 0 : index
    %231 = vector.load %arg9[%c1_229, %c0_230, %c0_231] : memref<2x65x130xf32, #tpu.memory_space<vmem>>, vector<1x65x130xf32>
    %232 = vector.shape_cast %231 : vector<1x65x130xf32> to vector<65x130xf32>
    %233 = vector.shape_cast %230 : vector<65x130xf32> to vector<1x65x130xf32>
    tpu.vector_store %arg9[%c1_229, %c0_230, %c0_231], %233 {strides = array<i32>} : memref<2x65x130xf32, #tpu.memory_space<vmem>>, vector<1x65x130xf32>,
    return
  }
  func.func @transform_0(%arg0: i32) -> (i32, i32, i32) {
    %c0_i32 = arith.constant 0 : i32
    %c0_i32_0 = arith.constant 0 : i32
    %c0_i32_1 = arith.constant 0 : i32
    return %arg0, %c0_i32, %c0_i32_0 : i32, i32, i32
  }
  func.func @transform_1(%arg0: i32) -> (i32, i32, i32) {
    %c0_i32 = arith.constant 0 : i32
    %c0_i32_0 = arith.constant 0 : i32
    %c0_i32_1 = arith.constant 0 : i32
    %c0_i32_2 = arith.constant 0 : i32
    return %c0_i32, %c0_i32_0, %c0_i32_1 : i32, i32, i32
  }
  func.func @transform_2(%arg0: i32) -> (i32, i32) {
    %c0_i32 = arith.constant 0 : i32
    %c0_i32_0 = arith.constant 0 : i32
    %c0_i32_1 = arith.constant 0 : i32
    return %c0_i32, %c0_i32_0 : i32, i32
  }
  func.func @transform_3(%arg0: i32) -> (i32, i32) {
    %c0_i32 = arith.constant 0 : i32
    %c0_i32_0 = arith.constant 0 : i32
    %c0_i32_1 = arith.constant 0 : i32
    return %c0_i32, %c0_i32_0 : i32, i32
  }
  func.func @transform_4(%arg0: i32) -> (i32, i32, i32) {
    %c0_i32 = arith.constant 0 : i32
    %c0_i32_0 = arith.constant 0 : i32
    %c0_i32_1 = arith.constant 0 : i32
    %c0_i32_2 = arith.constant 0 : i32
    return %c0_i32, %c0_i32_0, %c0_i32_1 : i32, i32, i32
  }
  func.func @transform_5(%arg0: i32) -> (i32, i32, i32) {
    %c0_i32 = arith.constant 0 : i32
    %c0_i32_0 = arith.constant 0 : i32
    %c0_i32_1 = arith.constant 0 : i32
    %c0_i32_2 = arith.constant 0 : i32
    return %c0_i32, %c0_i32_0, %c0_i32_1 : i32, i32, i32
  }
  func.func @transform_6(%arg0: i32) -> (i32, i32) {
    %c0_i32 = arith.constant 0 : i32
    %c0_i32_0 = arith.constant 0 : i32
    %c0_i32_1 = arith.constant 0 : i32
    return %c0_i32, %c0_i32_0 : i32, i32
  }
  func.func @transform_7(%arg0: i32) -> (i32, i32) {
    %c0_i32 = arith.constant 0 : i32
    %c0_i32_0 = arith.constant 0 : i32
    %c0_i32_1 = arith.constant 0 : i32
    return %c0_i32, %c0_i32_0 : i32, i32
  }
  func.func @transform_8(%arg0: i32) -> (i32, i32, i32) {
    %c0_i32 = arith.constant 0 : i32
    %c0_i32_0 = arith.constant 0 : i32
    %c0_i32_1 = arith.constant 0 : i32
    return %arg0, %c0_i32, %c0_i32_0 : i32, i32, i32
  }
}

</mosaic_0001>

<llo_original>
// kernel: forward.1
$region0: #{forward.1}
  #allocation0 [shape = 'u32[]', space=smem, size = 0x4, offset = 0x4, fixed_abs, tag = 'smem constant byte address 0x4 - core index']
  #allocation1 [shape = 'u32[144,128]{1,0:T(1,128)}', space=vmem, size = 0x12000, scoped, tag = 'internal scratch']
  #allocation2 [shape = 'bf16[2,96,180]{2,1,0:T(16,128)(2,1)}', space=vmem, size = 0x18000, scoped, tag = 'scratch operand']
  #allocation3 [shape = 'bf16[2,160,180]{2,1,0:T(16,128)(2,1)}', space=vmem, size = 0x28000, scoped, tag = 'scratch operand']
  #allocation4 [shape = 'bf16[2,96,130]{2,1,0:T(16,128)(2,1)}', space=vmem, size = 0x18000, scoped, tag = 'scratch operand']
  %s0 = inlined_call_operand.vmem [shape: bf16[2,16,48], index: 0, kind: input, shape index: {}]
  %s1 = inlined_call_operand.vmem [shape: bf16[6,48,180], index: 1, kind: input, shape index: {}]
  %s2 = inlined_call_operand.vmem [shape: bf16[160,96], index: 2, kind: input, shape index: {}]
  %s3 = inlined_call_operand.vmem [shape: f32[1,192], index: 3, kind: input, shape index: {}]
  %s4 = inlined_call_operand.vmem [shape: bf16[5,180,192], index: 4, kind: input, shape index: {}]
  %s5 = inlined_call_operand.vmem [shape: bf16[3,192,130], index: 5, kind: input, shape index: {}]
  %s6 = inlined_call_operand.vmem [shape: bf16[65,96], index: 6, kind: input, shape index: {}]
  %s7 = inlined_call_operand.vmem [shape: f32[1,130], index: 7, kind: input, shape index: {}]
  %s8 = inlined_call_operand.vmem [shape: f32[2,65,130], index: 8, kind: output, shape index: {}]
  %s9 = sld [smem:[#allocation0]]
  $region42: #{forward.1} parent=0
    _
  %s11 = ssub.s32 1, %s9
  %s12 = scalar_select 0, %s11, %s9
  // Predicated region
  $region2: #{forward.1} parent=0 // pred_check
    _
  $region3: #{forward.1} parent=0 // pred_check_branch
    %14 = sbr.rel (0) target = $region5
  $region4: #{forward.1} parent=0 // pred_region
    _
  $region5: #{forward.1} parent=0 // pred_fallthru
    _
  // Predicated region
  $region6: #{forward.1} parent=0 // pred_check
    _
  $region7: #{forward.1} parent=0 // pred_check_branch
    %16 = sbr.rel (0) target = $region9
  $region8: #{forward.1} parent=0 // pred_region
    _
  $region9: #{forward.1} parent=0 // pred_fallthru
    _
  // Predicated region
  $region10: #{forward.1} parent=0 // pred_check
    _
  $region11: #{forward.1} parent=0 // pred_check_branch
    %18 = sbr.rel (0) target = $region13
  $region12: #{forward.1} parent=0 // pred_region
    _
  $region13: #{forward.1} parent=0 // pred_fallthru
    _
  // Predicated region
  $region14: #{forward.1} parent=0 // pred_check
    _
  $region15: #{forward.1} parent=0 // pred_check_branch
    %20 = sbr.rel (0) target = $region17
  $region16: #{forward.1} parent=0 // pred_region
    _
  $region17: #{forward.1} parent=0 // pred_fallthru
    _
  // Predicated region
  $region18: #{forward.1} parent=0 // pred_check
    _
  $region19: #{forward.1} parent=0 // pred_check_branch
    %22 = sbr.rel (0) target = $region21
  $region20: #{forward.1} parent=0 // pred_region
    _
  $region21: #{forward.1} parent=0 // pred_fallthru
    _
  // Predicated region
  $region22: #{forward.1} parent=0 // pred_check
    _
  $region23: #{forward.1} parent=0 // pred_check_branch
    %24 = sbr.rel (0) target = $region25
  $region24: #{forward.1} parent=0 // pred_region
    _
  $region25: #{forward.1} parent=0 // pred_fallthru
    _
  // Predicated region
  $region26: #{forward.1} parent=0 // pred_check
    _
  $region27: #{forward.1} parent=0 // pred_check_branch
    %26 = sbr.rel (0) target = $region29
  $region28: #{forward.1} parent=0 // pred_region
    _
  $region29: #{forward.1} parent=0 // pred_fallthru
    _
  // Predicated region
  $region30: #{forward.1} parent=0 // pred_check
    _
  $region31: #{forward.1} parent=0 // pred_check_branch
    %28 = sbr.rel (0) target = $region33
  $region32: #{forward.1} parent=0 // pred_region
    _
  $region33: #{forward.1} parent=0 // pred_fallthru
    _
  %v30 = vld [vmem:[%s0] sm:$0xf]
  %v31 = vld [vmem:[%s0 + $0x4] sm:$0xf]
  %v32 = vld [vmem:[%s1] sm:$0xff]
  %v33 = vld [vmem:[%s1 + $0x8] sm:$0xff]
  %v34 = vld [vmem:[%s1 + $0x10] sm:$0xff]
  %v35 = vld [vmem:[%s1 + $0x18] sm:$0xff]
  %v36 = vld [vmem:[%s1 + $0x20] sm:$0xff]
  %v37 = vld [vmem:[%s1 + $0x28] sm:$0xff]
  %v40 = vunpack.c.l.b16 %v30
  %v41 = vunpack.c.l.b16 %v31
  %v42 = vpack.c.b16 %v41, %v40
  %v49 = vunpack.c.l.b16 %v32
  %v50 = vunpack.c.h.b16 %v32
  %v51 = vunpack.c.l.b16 %v33
  %v52 = vunpack.c.h.b16 %v33
  %v53 = vunpack.c.l.b16 %v34
  %v54 = vunpack.c.h.b16 %v34
  %v55 = vunpack.c.l.b16 %v35
  %v56 = vunpack.c.h.b16 %v35
  %v57 = vunpack.c.l.b16 %v36
  %v58 = vunpack.c.h.b16 %v36
  %v59 = vunpack.c.l.b16 %v37
  %v60 = vunpack.c.h.b16 %v37
  %v61 = vpack.c.b16 %v51, %v49
  %v62 = vpack.c.b16 %v52, %v50
  %v63 = vpack.c.b16 %v55, %v53
  %v64 = vpack.c.b16 %v56, %v54
  %v65 = vpack.c.b16 %v59, %v57
  %v66 = vpack.c.b16 %v60, %v58
  %vm73 = vcmask 392192
  %v75 = vsel %vm73, %v42, 0
  %77 = vmatprep.subr.bf16.mxu0 %v62
  %78 = vmatpush1.bf16.msra.mxu0 %v61
  %79 = vmatprep.subr.bf16.mxu0 %v64
  %80 = vmatpush1.bf16.msra.mxu0 %v63
  %81 = vmatprep.subr.bf16.mxu0 %v66
  %82 = vmatpush1.bf16.msra.mxu0 %v65
  %83 = vmatprep.subr.bf16.mxu0 0
  %84 = vmatpush1.bf16.msra.mxu0 0
  %85 = vmatprep.subr.bf16.mxu0 0
  %86 = vmatpush1.bf16.msra.mxu0 0
  %87 = vmatprep.subr.bf16.mxu0 0
  %88 = vmatpush1.bf16.msra.mxu0 0
  %89 = vmatprep.subr.bf16.mxu0 0
  %90 = vmatpush1.bf16.msra.mxu0 0
  %91 = vmatprep.subr.bf16.mxu0 0
  %92 = vmatpush1.bf16.msra.mxu0 0
  %93 = vmatprep.subr.bf16.mxu0 0
  %94 = vmatpush1.bf16.msra.mxu0 0
  %95 = vmatprep.subr.bf16.mxu0 0
  %96 = vmatpush1.bf16.msra.mxu0 0
  %97 = vmatprep.subr.bf16.mxu0 0
  %98 = vmatpush1.bf16.msra.mxu0 0
  %99 = vmatprep.subr.bf16.mxu0 0
  %100 = vmatpush1.bf16.msra.mxu0 0
  %101 = vmatprep.subr.bf16.mxu0 0
  %102 = vmatpush1.bf16.msra.mxu0 0
  %103 = vmatprep.subr.bf16.mxu0 0
  %104 = vmatpush1.bf16.msra.mxu0 0
  %105 = vmatprep.subr.bf16.mxu0 0
  %106 = vmatpush1.bf16.msra.mxu0 0
  %107 = vmatprep.subr.bf16.mxu0 0
  %108 = vmatpush1.bf16.msra.mxu0 0
  %109 = vmatprep.mubr.bf16.mxu0 0
  %110 = vmatmul.mubr.bf16.gmra.mrb[0].mxu0 %v75
  %v111 = vpop.f32.mrb[0].mxu0
  %v112 = vadd.f32 0.0, %v111
  %v113 = vpop.f32.mrb[0].mxu0
  %v114 = vadd.f32 0.0, %v113
  %v115 = vpop.f32.mrb[0].mxu0
  %v116 = vadd.f32 0.0, %v115
  %v117 = vpop.f32.mrb[0].mxu0
  %v118 = vadd.f32 0.0, %v117
  %119 = vdwg.mxu0
  %v120 = vpack.c.bf16 %v116, %v112
  %v121 = vpack.c.bf16 %v118, %v114
  %122 = vst [vmem:[#allocation2] sm:$0xff] %v120
  %vm123 = vcmask 424960
  %124 = vst.msk [vmem:[#allocation2 + $0x8] sm:$0xff] %vm123, %v121
  %s125 = scalar_lea.vmem %s1, 48
  %v126 = vld [vmem:[%s125] sm:$0xff]
  %v127 = vld [vmem:[%s125 + $0x8] sm:$0xff]
  %v128 = vld [vmem:[%s125 + $0x10] sm:$0xff]
  %v129 = vld [vmem:[%s125 + $0x18] sm:$0xff]
  %v130 = vld [vmem:[%s125 + $0x20] sm:$0xff]
  %v131 = vld [vmem:[%s125 + $0x28] sm:$0xff]
  %v138 = vunpack.c.l.b16 %v126
  %v139 = vunpack.c.h.b16 %v126
  %v140 = vunpack.c.l.b16 %v127
  %v141 = vunpack.c.h.b16 %v127
  %v142 = vunpack.c.l.b16 %v128
  %v143 = vunpack.c.h.b16 %v128
  %v144 = vunpack.c.l.b16 %v129
  %v145 = vunpack.c.h.b16 %v129
  %v146 = vunpack.c.l.b16 %v130
  %v147 = vunpack.c.h.b16 %v130
  %v148 = vunpack.c.l.b16 %v131
  %v149 = vunpack.c.h.b16 %v131
  %v150 = vpack.c.b16 %v140, %v138
  %v151 = vpack.c.b16 %v141, %v139
  %v152 = vpack.c.b16 %v144, %v142
  %v153 = vpack.c.b16 %v145, %v143
  %v154 = vpack.c.b16 %v148, %v146
  %v155 = vpack.c.b16 %v149, %v147
  %162 = vmatprep.subr.bf16.mxu0 %v151
  %163 = vmatpush1.bf16.msra.mxu0 %v150
  %164 = vmatprep.subr.bf16.mxu0 %v153
  %165 = vmatpush1.bf16.msra.mxu0 %v152
  %166 = vmatprep.subr.bf16.mxu0 %v155
  %167 = vmatpush1.bf16.msra.mxu0 %v154
  %168 = vmatprep.subr.bf16.mxu0 0
  %169 = vmatpush1.bf16.msra.mxu0 0
  %170 = vmatprep.subr.bf16.mxu0 0
  %171 = vmatpush1.bf16.msra.mxu0 0
  %172 = vmatprep.subr.bf16.mxu0 0
  %173 = vmatpush1.bf16.msra.mxu0 0
  %174 = vmatprep.subr.bf16.mxu0 0
  %175 = vmatpush1.bf16.msra.mxu0 0
  %176 = vmatprep.subr.bf16.mxu0 0
  %177 = vmatpush1.bf16.msra.mxu0 0
  %178 = vmatprep.subr.bf16.mxu0 0
  %179 = vmatpush1.bf16.msra.mxu0 0
  %180 = vmatprep.subr.bf16.mxu0 0
  %181 = vmatpush1.bf16.msra.mxu0 0
  %182 = vmatprep.subr.bf16.mxu0 0
  %183 = vmatpush1.bf16.msra.mxu0 0
  %184 = vmatprep.subr.bf16.mxu0 0
  %185 = vmatpush1.bf16.msra.mxu0 0
  %186 = vmatprep.subr.bf16.mxu0 0
  %187 = vmatpush1.bf16.msra.mxu0 0
  %188 = vmatprep.subr.bf16.mxu0 0
  %189 = vmatpush1.bf16.msra.mxu0 0
  %190 = vmatprep.subr.bf16.mxu0 0
  %191 = vmatpush1.bf16.msra.mxu0 0
  %192 = vmatprep.subr.bf16.mxu0 0
  %193 = vmatpush1.bf16.msra.mxu0 0
  %194 = vmatprep.mubr.bf16.mxu0 0
  %195 = vmatmul.mubr.bf16.gmra.mrb[0].mxu0 %v75
  %v196 = vpop.f32.mrb[0].mxu0
  %v197 = vadd.f32 0.0, %v196
  %v198 = vpop.f32.mrb[0].mxu0
  %v199 = vadd.f32 0.0, %v198
  %v200 = vpop.f32.mrb[0].mxu0
  %v201 = vadd.f32 0.0, %v200
  %v202 = vpop.f32.mrb[0].mxu0
  %v203 = vadd.f32 0.0, %v202
  %204 = vdwg.mxu0
  %v205 = vpack.c.bf16 %v201, %v197
  %v206 = vpack.c.bf16 %v203, %v199
  %207 = vst [vmem:[#allocation2 + $0x10] sm:$0xff] %v205
  %208 = vst.msk [vmem:[#allocation2 + $0x18] sm:$0xff] %vm123, %v206
  %s209 = scalar_lea.vmem %s1, 96
  %v210 = vld [vmem:[%s209] sm:$0xff]
  %v211 = vld [vmem:[%s209 + $0x8] sm:$0xff]
  %v212 = vld [vmem:[%s209 + $0x10] sm:$0xff]
  %v213 = vld [vmem:[%s209 + $0x18] sm:$0xff]
  %v214 = vld [vmem:[%s209 + $0x20] sm:$0xff]
  %v215 = vld [vmem:[%s209 + $0x28] sm:$0xff]
  %v222 = vunpack.c.l.b16 %v210
  %v223 = vunpack.c.h.b16 %v210
  %v224 = vunpack.c.l.b16 %v211
  %v225 = vunpack.c.h.b16 %v211
  %v226 = vunpack.c.l.b16 %v212
  %v227 = vunpack.c.h.b16 %v212
  %v228 = vunpack.c.l.b16 %v213
  %v229 = vunpack.c.h.b16 %v213
  %v230 = vunpack.c.l.b16 %v214
  %v231 = vunpack.c.h.b16 %v214
  %v232 = vunpack.c.l.b16 %v215
  %v233 = vunpack.c.h.b16 %v215
  %v234 = vpack.c.b16 %v224, %v222
  %v235 = vpack.c.b16 %v225, %v223
  %v236 = vpack.c.b16 %v228, %v226
  %v237 = vpack.c.b16 %v229, %v227
  %v238 = vpack.c.b16 %v232, %v230
  %v239 = vpack.c.b16 %v233, %v231
  %246 = vmatprep.subr.bf16.mxu0 %v235
  %247 = vmatpush1.bf16.msra.mxu0 %v234
  %248 = vmatprep.subr.bf16.mxu0 %v237
  %249 = vmatpush1.bf16.msra.mxu0 %v236
  %250 = vmatprep.subr.bf16.mxu0 %v239
  %251 = vmatpush1.bf16.msra.mxu0 %v238
  %252 = vmatprep.subr.bf16.mxu0 0
  %253 = vmatpush1.bf16.msra.mxu0 0
  %254 = vmatprep.subr.bf16.mxu0 0
  %255 = vmatpush1.bf16.msra.mxu0 0
  %256 = vmatprep.subr.bf16.mxu0 0
  %257 = vmatpush1.bf16.msra.mxu0 0
  %258 = vmatprep.subr.bf16.mxu0 0
  %259 = vmatpush1.bf16.msra.mxu0 0
  %260 = vmatprep.subr.bf16.mxu0 0
  %261 = vmatpush1.bf16.msra.mxu0 0
  %262 = vmatprep.subr.bf16.mxu0 0
  %263 = vmatpush1.bf16.msra.mxu0 0
  %264 = vmatprep.subr.bf16.mxu0 0
  %265 = vmatpush1.bf16.msra.mxu0 0
  %266 = vmatprep.subr.bf16.mxu0 0
  %267 = vmatpush1.bf16.msra.mxu0 0
  %268 = vmatprep.subr.bf16.mxu0 0
  %269 = vmatpush1.bf16.msra.mxu0 0
  %270 = vmatprep.subr.bf16.mxu0 0
  %271 = vmatpush1.bf16.msra.mxu0 0
  %272 = vmatprep.subr.bf16.mxu0 0
  %273 = vmatpush1.bf16.msra.mxu0 0
  %274 = vmatprep.subr.bf16.mxu0 0
  %275 = vmatpush1.bf16.msra.mxu0 0
  %276 = vmatprep.subr.bf16.mxu0 0
  %277 = vmatpush1.bf16.msra.mxu0 0
  %278 = vmatprep.mubr.bf16.mxu0 0
  %279 = vmatmul.mubr.bf16.gmra.mrb[0].mxu0 %v75
  %v280 = vpop.f32.mrb[0].mxu0
  %v281 = vadd.f32 0.0, %v280
  %v282 = vpop.f32.mrb[0].mxu0
  %v283 = vadd.f32 0.0, %v282
  %v284 = vpop.f32.mrb[0].mxu0
  %v285 = vadd.f32 0.0, %v284
  %v286 = vpop.f32.mrb[0].mxu0
  %v287 = vadd.f32 0.0, %v286
  %288 = vdwg.mxu0
  %v289 = vpack.c.bf16 %v285, %v281
  %v290 = vpack.c.bf16 %v287, %v283
  %291 = vst [vmem:[#allocation2 + $0x20] sm:$0xff] %v289
  %292 = vst.msk [vmem:[#allocation2 + $0x28] sm:$0xff] %vm123, %v290
  %s293 = scalar_lea.vmem %s1, 144
  %v294 = vld [vmem:[%s293] sm:$0xff]
  %v295 = vld [vmem:[%s293 + $0x8] sm:$0xff]
  %v296 = vld [vmem:[%s293 + $0x10] sm:$0xff]
  %v297 = vld [vmem:[%s293 + $0x18] sm:$0xff]
  %v298 = vld [vmem:[%s293 + $0x20] sm:$0xff]
  %v299 = vld [vmem:[%s293 + $0x28] sm:$0xff]
  %v306 = vunpack.c.l.b16 %v294
  %v307 = vunpack.c.h.b16 %v294
  %v308 = vunpack.c.l.b16 %v295
  %v309 = vunpack.c.h.b16 %v295
  %v310 = vunpack.c.l.b16 %v296
  %v311 = vunpack.c.h.b16 %v296
  %v312 = vunpack.c.l.b16 %v297
  %v313 = vunpack.c.h.b16 %v297
  %v314 = vunpack.c.l.b16 %v298
  %v315 = vunpack.c.h.b16 %v298
  %v316 = vunpack.c.l.b16 %v299
  %v317 = vunpack.c.h.b16 %v299
  %v318 = vpack.c.b16 %v308, %v306
  %v319 = vpack.c.b16 %v309, %v307
  %v320 = vpack.c.b16 %v312, %v310
  %v321 = vpack.c.b16 %v313, %v311
  %v322 = vpack.c.b16 %v316, %v314
  %v323 = vpack.c.b16 %v317, %v315
  %330 = vmatprep.subr.bf16.mxu0 %v319
  %331 = vmatpush1.bf16.msra.mxu0 %v318
  %332 = vmatprep.subr.bf16.mxu0 %v321
  %333 = vmatpush1.bf16.msra.mxu0 %v320
  %334 = vmatprep.subr.bf16.mxu0 %v323
  %335 = vmatpush1.bf16.msra.mxu0 %v322
  %336 = vmatprep.subr.bf16.mxu0 0
  %337 = vmatpush1.bf16.msra.mxu0 0
  %338 = vmatprep.subr.bf16.mxu0 0
  %339 = vmatpush1.bf16.msra.mxu0 0
  %340 = vmatprep.subr.bf16.mxu0 0
  %341 = vmatpush1.bf16.msra.mxu0 0
  %342 = vmatprep.subr.bf16.mxu0 0
  %343 = vmatpush1.bf16.msra.mxu0 0
  %344 = vmatprep.subr.bf16.mxu0 0
  %345 = vmatpush1.bf16.msra.mxu0 0
  %346 = vmatprep.subr.bf16.mxu0 0
  %347 = vmatpush1.bf16.msra.mxu0 0
  %348 = vmatprep.subr.bf16.mxu0 0
  %349 = vmatpush1.bf16.msra.mxu0 0
  %350 = vmatprep.subr.bf16.mxu0 0
  %351 = vmatpush1.bf16.msra.mxu0 0
  %352 = vmatprep.subr.bf16.mxu0 0
  %353 = vmatpush1.bf16.msra.mxu0 0
  %354 = vmatprep.subr.bf16.mxu0 0
  %355 = vmatpush1.bf16.msra.mxu0 0
  %356 = vmatprep.subr.bf16.mxu0 0
  %357 = vmatpush1.bf16.msra.mxu0 0
  %358 = vmatprep.subr.bf16.mxu0 0
  %359 = vmatpush1.bf16.msra.mxu0 0
  %360 = vmatprep.subr.bf16.mxu0 0
  %361 = vmatpush1.bf16.msra.mxu0 0
  %362 = vmatprep.mubr.bf16.mxu0 0
  %363 = vmatmul.mubr.bf16.gmra.mrb[0].mxu0 %v75
  %v364 = vpop.f32.mrb[0].mxu0
  %v365 = vadd.f32 0.0, %v364
  %v366 = vpop.f32.mrb[0].mxu0
  %v367 = vadd.f32 0.0, %v366
  %v368 = vpop.f32.mrb[0].mxu0
  %v369 = vadd.f32 0.0, %v368
  %v370 = vpop.f32.mrb[0].mxu0
  %v371 = vadd.f32 0.0, %v370
  %372 = vdwg.mxu0
  %v373 = vpack.c.bf16 %v369, %v365
  %v374 = vpack.c.bf16 %v371, %v367
  %375 = vst [vmem:[#allocation2 + $0x30] sm:$0xff] %v373
  %376 = vst.msk [vmem:[#allocation2 + $0x38] sm:$0xff] %vm123, %v374
  %s377 = scalar_lea.vmem %s1, 192
  %v378 = vld [vmem:[%s377] sm:$0xff]
  %v379 = vld [vmem:[%s377 + $0x8] sm:$0xff]
  %v380 = vld [vmem:[%s377 + $0x10] sm:$0xff]
  %v381 = vld [vmem:[%s377 + $0x18] sm:$0xff]
  %v382 = vld [vmem:[%s377 + $0x20] sm:$0xff]
  %v383 = vld [vmem:[%s377 + $0x28] sm:$0xff]
  %v390 = vunpack.c.l.b16 %v378
  %v391 = vunpack.c.h.b16 %v378
  %v392 = vunpack.c.l.b16 %v379
  %v393 = vunpack.c.h.b16 %v379
  %v394 = vunpack.c.l.b16 %v380
  %v395 = vunpack.c.h.b16 %v380
  %v396 = vunpack.c.l.b16 %v381
  %v397 = vunpack.c.h.b16 %v381
  %v398 = vunpack.c.l.b16 %v382
  %v399 = vunpack.c.h.b16 %v382
  %v400 = vunpack.c.l.b16 %v383
  %v401 = vunpack.c.h.b16 %v383
  %v402 = vpack.c.b16 %v392, %v390
  %v403 = vpack.c.b16 %v393, %v391
  %v404 = vpack.c.b16 %v396, %v394
  %v405 = vpack.c.b16 %v397, %v395
  %v406 = vpack.c.b16 %v400, %v398
  %v407 = vpack.c.b16 %v401, %v399
  %414 = vmatprep.subr.bf16.mxu0 %v403
  %415 = vmatpush1.bf16.msra.mxu0 %v402
  %416 = vmatprep.subr.bf16.mxu0 %v405
  %417 = vmatpush1.bf16.msra.mxu0 %v404
  %418 = vmatprep.subr.bf16.mxu0 %v407
  %419 = vmatpush1.bf16.msra.mxu0 %v406
  %420 = vmatprep.subr.bf16.mxu0 0
  %421 = vmatpush1.bf16.msra.mxu0 0
  %422 = vmatprep.subr.bf16.mxu0 0
  %423 = vmatpush1.bf16.msra.mxu0 0
  %424 = vmatprep.subr.bf16.mxu0 0
  %425 = vmatpush1.bf16.msra.mxu0 0
  %426 = vmatprep.subr.bf16.mxu0 0
  %427 = vmatpush1.bf16.msra.mxu0 0
  %428 = vmatprep.subr.bf16.mxu0 0
  %429 = vmatpush1.bf16.msra.mxu0 0
  %430 = vmatprep.subr.bf16.mxu0 0
  %431 = vmatpush1.bf16.msra.mxu0 0
  %432 = vmatprep.subr.bf16.mxu0 0
  %433 = vmatpush1.bf16.msra.mxu0 0
  %434 = vmatprep.subr.bf16.mxu0 0
  %435 = vmatpush1.bf16.msra.mxu0 0
  %436 = vmatprep.subr.bf16.mxu0 0
  %437 = vmatpush1.bf16.msra.mxu0 0
  %438 = vmatprep.subr.bf16.mxu0 0
  %439 = vmatpush1.bf16.msra.mxu0 0
  %440 = vmatprep.subr.bf16.mxu0 0
  %441 = vmatpush1.bf16.msra.mxu0 0
  %442 = vmatprep.subr.bf16.mxu0 0
  %443 = vmatpush1.bf16.msra.mxu0 0
  %444 = vmatprep.subr.bf16.mxu0 0
  %445 = vmatpush1.bf16.msra.mxu0 0
  %446 = vmatprep.mubr.bf16.mxu0 0
  %447 = vmatmul.mubr.bf16.gmra.mrb[0].mxu0 %v75
  %v448 = vpop.f32.mrb[0].mxu0
  %v449 = vadd.f32 0.0, %v448
  %v450 = vpop.f32.mrb[0].mxu0
  %v451 = vadd.f32 0.0, %v450
  %v452 = vpop.f32.mrb[0].mxu0
  %v453 = vadd.f32 0.0, %v452
  %v454 = vpop.f32.mrb[0].mxu0
  %v455 = vadd.f32 0.0, %v454
  %456 = vdwg.mxu0
  %v457 = vpack.c.bf16 %v453, %v449
  %v458 = vpack.c.bf16 %v455, %v451
  %459 = vst [vmem:[#allocation2 + $0x40] sm:$0xff] %v457
  %460 = vst.msk [vmem:[#allocation2 + $0x48] sm:$0xff] %vm123, %v458
  %s461 = scalar_lea.vmem %s1, 240
  %v462 = vld [vmem:[%s461] sm:$0xff]
  %v463 = vld [vmem:[%s461 + $0x8] sm:$0xff]
  %v464 = vld [vmem:[%s461 + $0x10] sm:$0xff]
  %v465 = vld [vmem:[%s461 + $0x18] sm:$0xff]
  %v466 = vld [vmem:[%s461 + $0x20] sm:$0xff]
  %v467 = vld [vmem:[%s461 + $0x28] sm:$0xff]
  %v474 = vunpack.c.l.b16 %v462
  %v475 = vunpack.c.h.b16 %v462
  %v476 = vunpack.c.l.b16 %v463
  %v477 = vunpack.c.h.b16 %v463
  %v478 = vunpack.c.l.b16 %v464
  %v479 = vunpack.c.h.b16 %v464
  %v480 = vunpack.c.l.b16 %v465
  %v481 = vunpack.c.h.b16 %v465
  %v482 = vunpack.c.l.b16 %v466
  %v483 = vunpack.c.h.b16 %v466
  %v484 = vunpack.c.l.b16 %v467
  %v485 = vunpack.c.h.b16 %v467
  %v486 = vpack.c.b16 %v476, %v474
  %v487 = vpack.c.b16 %v477, %v475
  %v488 = vpack.c.b16 %v480, %v478
  %v489 = vpack.c.b16 %v481, %v479
  %v490 = vpack.c.b16 %v484, %v482
  %v491 = vpack.c.b16 %v485, %v483
  %498 = vmatprep.subr.bf16.mxu0 %v487
  %499 = vmatpush1.bf16.msra.mxu0 %v486
  %500 = vmatprep.subr.bf16.mxu0 %v489
  %501 = vmatpush1.bf16.msra.mxu0 %v488
  %502 = vmatprep.subr.bf16.mxu0 %v491
  %503 = vmatpush1.bf16.msra.mxu0 %v490
  %504 = vmatprep.subr.bf16.mxu0 0
  %505 = vmatpush1.bf16.msra.mxu0 0
  %506 = vmatprep.subr.bf16.mxu0 0
  %507 = vmatpush1.bf16.msra.mxu0 0
  %508 = vmatprep.subr.bf16.mxu0 0
  %509 = vmatpush1.bf16.msra.mxu0 0
  %510 = vmatprep.subr.bf16.mxu0 0
  %511 = vmatpush1.bf16.msra.mxu0 0
  %512 = vmatprep.subr.bf16.mxu0 0
  %513 = vmatpush1.bf16.msra.mxu0 0
  %514 = vmatprep.subr.bf16.mxu0 0
  %515 = vmatpush1.bf16.msra.mxu0 0
  %516 = vmatprep.subr.bf16.mxu0 0
  %517 = vmatpush1.bf16.msra.mxu0 0
  %518 = vmatprep.subr.bf16.mxu0 0
  %519 = vmatpush1.bf16.msra.mxu0 0
  %520 = vmatprep.subr.bf16.mxu0 0
  %521 = vmatpush1.bf16.msra.mxu0 0
  %522 = vmatprep.subr.bf16.mxu0 0
  %523 = vmatpush1.bf16.msra.mxu0 0
  %524 = vmatprep.subr.bf16.mxu0 0
  %525 = vmatpush1.bf16.msra.mxu0 0
  %526 = vmatprep.subr.bf16.mxu0 0
  %527 = vmatpush1.bf16.msra.mxu0 0
  %528 = vmatprep.subr.bf16.mxu0 0
  %529 = vmatpush1.bf16.msra.mxu0 0
  %530 = vmatprep.mubr.bf16.mxu0 0
  %531 = vmatmul.mubr.bf16.gmra.mrb[0].mxu0 %v75
  %v532 = vpop.f32.mrb[0].mxu0
  %v533 = vadd.f32 0.0, %v532
  %v534 = vpop.f32.mrb[0].mxu0
  %v535 = vadd.f32 0.0, %v534
  %v536 = vpop.f32.mrb[0].mxu0
  %v537 = vadd.f32 0.0, %v536
  %v538 = vpop.f32.mrb[0].mxu0
  %v539 = vadd.f32 0.0, %v538
  %540 = vdwg.mxu0
  %v541 = vpack.c.bf16 %v537, %v533
  %v542 = vpack.c.bf16 %v539, %v535
  %543 = vst [vmem:[#allocation2 + $0x50] sm:$0xff] %v541
  %544 = vst.msk [vmem:[#allocation2 + $0x58] sm:$0xff] %vm123, %v542
  %v545 = vld [vmem:[%s2] sm:$0xf]
  %v546 = vld [vmem:[%s2 + $0x4] sm:$0xf]
  %v547 = vld [vmem:[%s2 + $0x8] sm:$0xf]
  %v548 = vld [vmem:[%s2 + $0xc] sm:$0xf]
  %v549 = vld [vmem:[%s2 + $0x10] sm:$0xf]
  %v550 = vld [vmem:[%s2 + $0x14] sm:$0xf]
  %v551 = vld [vmem:[%s2 + $0x18] sm:$0xf]
  %v552 = vld [vmem:[%s2 + $0x1c] sm:$0xf]
  %v553 = vld [vmem:[%s2 + $0x20] sm:$0xf]
  %v554 = vld [vmem:[%s2 + $0x24] sm:$0xf]
  %v555 = vld [vmem:[%s2 + $0x28] sm:$0xf]
  %v556 = vld [vmem:[%s2 + $0x2c] sm:$0xf]
  %v557 = vld [vmem:[%s2 + $0x30] sm:$0xf]
  %v558 = vld [vmem:[%s2 + $0x34] sm:$0xf]
  %v559 = vld [vmem:[%s2 + $0x38] sm:$0xf]
  %v560 = vld [vmem:[%s2 + $0x3c] sm:$0xf]
  %v561 = vld [vmem:[%s2 + $0x40] sm:$0xf]
  %v562 = vld [vmem:[%s2 + $0x44] sm:$0xf]
  %v563 = vld [vmem:[%s2 + $0x48] sm:$0xf]
  %v564 = vld [vmem:[%s2 + $0x4c] sm:$0xf]
  %v565 = vld [vmem:[#allocation2] sm:$0xff]
  %v566 = vld [vmem:[#allocation2 + $0x8] sm:$0xff]
  %v567 = vld [vmem:[#allocation2 + $0x10] sm:$0xff]
  %v568 = vld [vmem:[#allocation2 + $0x18] sm:$0xff]
  %v569 = vld [vmem:[#allocation2 + $0x20] sm:$0xff]
  %v570 = vld [vmem:[#allocation2 + $0x28] sm:$0xff]
  %v571 = vld [vmem:[#allocation2 + $0x30] sm:$0xff]
  %v572 = vld [vmem:[#allocation2 + $0x38] sm:$0xff]
  %v573 = vld [vmem:[#allocation2 + $0x40] sm:$0xff]
  %v574 = vld [vmem:[#allocation2 + $0x48] sm:$0xff]
  %v575 = vld [vmem:[#allocation2 + $0x50] sm:$0xff]
  %v576 = vld [vmem:[#allocation2 + $0x58] sm:$0xff]
  %v597 = vunpack.c.l.b16 %v545
  %v598 = vunpack.c.l.b16 %v546
  %v599 = vunpack.c.l.b16 %v547
  %v600 = vunpack.c.l.b16 %v548
  %v601 = vunpack.c.l.b16 %v549
  %v602 = vunpack.c.l.b16 %v550
  %v603 = vunpack.c.l.b16 %v551
  %v604 = vunpack.c.l.b16 %v552
  %v605 = vunpack.c.l.b16 %v553
  %v606 = vunpack.c.l.b16 %v554
  %v607 = vunpack.c.l.b16 %v555
  %v608 = vunpack.c.l.b16 %v556
  %v609 = vunpack.c.l.b16 %v557
  %v610 = vunpack.c.l.b16 %v558
  %v611 = vunpack.c.l.b16 %v559
  %v612 = vunpack.c.l.b16 %v560
  %v613 = vunpack.c.l.b16 %v561
  %v614 = vunpack.c.l.b16 %v562
  %v615 = vunpack.c.l.b16 %v563
  %v616 = vunpack.c.l.b16 %v564
  %v617 = vpack.c.b16 %v598, %v597
  %v618 = vpack.c.b16 %v600, %v599
  %v619 = vpack.c.b16 %v602, %v601
  %v620 = vpack.c.b16 %v604, %v603
  %v621 = vpack.c.b16 %v606, %v605
  %v622 = vpack.c.b16 %v608, %v607
  %v623 = vpack.c.b16 %v610, %v609
  %v624 = vpack.c.b16 %v612, %v611
  %v625 = vpack.c.b16 %v614, %v613
  %v626 = vpack.c.b16 %v616, %v615
  %vm627 = vcmask 785408
  %v629 = vsel %vm627, %v617, 0
  %v632 = vsel %vm627, %v618, 0
  %v635 = vsel %vm627, %v619, 0
  %v638 = vsel %vm627, %v620, 0
  %v641 = vsel %vm627, %v621, 0
  %v644 = vsel %vm627, %v622, 0
  %v647 = vsel %vm627, %v623, 0
  %v650 = vsel %vm627, %v624, 0
  %v653 = vsel %vm627, %v625, 0
  %v656 = vsel %vm627, %v626, 0
  %658 = vmatprep.subr.bf16.mxu0 %v566
  %659 = vmatpush1.bf16.msra.mxu0 %v565
  %660 = vmatprep.subr.bf16.mxu0 %v568
  %661 = vmatpush1.bf16.msra.mxu0 %v567
  %662 = vmatprep.subr.bf16.mxu0 %v570
  %663 = vmatpush1.bf16.msra.mxu0 %v569
  %664 = vmatprep.subr.bf16.mxu0 %v572
  %665 = vmatpush1.bf16.msra.mxu0 %v571
  %666 = vmatprep.subr.bf16.mxu0 %v574
  %667 = vmatpush1.bf16.msra.mxu0 %v573
  %668 = vmatprep.subr.bf16.mxu0 %v576
  %669 = vmatpush1.bf16.msra.mxu0 %v575
  %670 = vmatprep.subr.bf16.mxu0 0
  %671 = vmatpush1.bf16.msra.mxu0 0
  %672 = vmatprep.subr.bf16.mxu0 0
  %673 = vmatpush1.bf16.msra.mxu0 0
  %674 = vmatprep.subr.bf16.mxu0 0
  %675 = vmatpush1.bf16.msra.mxu0 0
  %676 = vmatprep.subr.bf16.mxu0 0
  %677 = vmatpush1.bf16.msra.mxu0 0
  %678 = vmatprep.subr.bf16.mxu0 0
  %679 = vmatpush1.bf16.msra.mxu0 0
  %680 = vmatprep.subr.bf16.mxu0 0
  %681 = vmatpush1.bf16.msra.mxu0 0
  %682 = vmatprep.subr.bf16.mxu0 0
  %683 = vmatpush1.bf16.msra.mxu0 0
  %684 = vmatprep.subr.bf16.mxu0 0
  %685 = vmatpush1.bf16.msra.mxu0 0
  %686 = vmatprep.subr.bf16.mxu0 0
  %687 = vmatpush1.bf16.msra.mxu0 0
  %688 = vmatprep.subr.bf16.mxu0 0
  %689 = vmatpush1.bf16.msra.mxu0 0
  %690 = vmatprep.mubr.bf16.mxu0 0
  %691 = vmatmul.mubr.bf16.gmra.mrb[0].mxu0 %v629
  %v692 = vpop.f32.mrb[0].mxu0
  %v693 = vadd.f32 0.0, %v692
  %v694 = vpop.f32.mrb[0].mxu0
  %v695 = vadd.f32 0.0, %v694
  %v696 = vpop.f32.mrb[0].mxu0
  %v697 = vadd.f32 0.0, %v696
  %v698 = vpop.f32.mrb[0].mxu0
  %v699 = vadd.f32 0.0, %v698
  %700 = vmatprep.mubr.bf16.mxu0 0
  %701 = vmatmul.mubr.bf16.gmra.mrb[0].mxu0 %v632
  %v702 = vpop.f32.mrb[0].mxu0
  %v703 = vadd.f32 0.0, %v702
  %v704 = vpop.f32.mrb[0].mxu0
  %v705 = vadd.f32 0.0, %v704
  %v706 = vpop.f32.mrb[0].mxu0
  %v707 = vadd.f32 0.0, %v706
  %v708 = vpop.f32.mrb[0].mxu0
  %v709 = vadd.f32 0.0, %v708
  %710 = vmatprep.mubr.bf16.mxu0 0
  %711 = vmatmul.mubr.bf16.gmra.mrb[0].mxu0 %v635
  %v712 = vpop.f32.mrb[0].mxu0
  %v713 = vadd.f32 0.0, %v712
  %v714 = vpop.f32.mrb[0].mxu0
  %v715 = vadd.f32 0.0, %v714
  %v716 = vpop.f32.mrb[0].mxu0
  %v717 = vadd.f32 0.0, %v716
  %v718 = vpop.f32.mrb[0].mxu0
  %v719 = vadd.f32 0.0, %v718
  %720 = vmatprep.mubr.bf16.mxu0 0
  %721 = vmatmul.mubr.bf16.gmra.mrb[0].mxu0 %v638
  %v722 = vpop.f32.mrb[0].mxu0
  %v723 = vadd.f32 0.0, %v722
  %v724 = vpop.f32.mrb[0].mxu0
  %v725 = vadd.f32 0.0, %v724
  %v726 = vpop.f32.mrb[0].mxu0
  %v727 = vadd.f32 0.0, %v726
  %v728 = vpop.f32.mrb[0].mxu0
  %v729 = vadd.f32 0.0, %v728
  %730 = vmatprep.mubr.bf16.mxu0 0
  %731 = vmatmul.mubr.bf16.gmra.mrb[0].mxu0 %v641
  %v732 = vpop.f32.mrb[0].mxu0
  %v733 = vadd.f32 0.0, %v732
  %v734 = vpop.f32.mrb[0].mxu0
  %v735 = vadd.f32 0.0, %v734
  %v736 = vpop.f32.mrb[0].mxu0
  %v737 = vadd.f32 0.0, %v736
  %v738 = vpop.f32.mrb[0].mxu0
  %v739 = vadd.f32 0.0, %v738
  %740 = vmatprep.mubr.bf16.mxu0 0
  %741 = vmatmul.mubr.bf16.gmra.mrb[0].mxu0 %v644
  %v742 = vpop.f32.mrb[0].mxu0
  %v743 = vadd.f32 0.0, %v742
  %v744 = vpop.f32.mrb[0].mxu0
  %v745 = vadd.f32 0.0, %v744
  %v746 = vpop.f32.mrb[0].mxu0
  %v747 = vadd.f32 0.0, %v746
  %v748 = vpop.f32.mrb[0].mxu0
  %v749 = vadd.f32 0.0, %v748
  %750 = vmatprep.mubr.bf16.mxu0 0
  %751 = vmatmul.mubr.bf16.gmra.mrb[0].mxu0 %v647
  %v752 = vpop.f32.mrb[0].mxu0
  %v753 = vadd.f32 0.0, %v752
  %v754 = vpop.f32.mrb[0].mxu0
  %v755 = vadd.f32 0.0, %v754
  %v756 = vpop.f32.mrb[0].mxu0
  %v757 = vadd.f32 0.0, %v756
  %v758 = vpop.f32.mrb[0].mxu0
  %v759 = vadd.f32 0.0, %v758
  %760 = vmatprep.mubr.bf16.mxu0 0
  %761 = vmatmul.mubr.bf16.gmra.mrb[0].mxu0 %v650
  %v762 = vpop.f32.mrb[0].mxu0
  %v763 = vadd.f32 0.0, %v762
  %v764 = vpop.f32.mrb[0].mxu0
  %v765 = vadd.f32 0.0, %v764
  %v766 = vpop.f32.mrb[0].mxu0
  %v767 = vadd.f32 0.0, %v766
  %v768 = vpop.f32.mrb[0].mxu0
  %v769 = vadd.f32 0.0, %v768
  %770 = vmatprep.mubr.bf16.mxu0 0
  %771 = vmatmul.mubr.bf16.gmra.mrb[0].mxu0 %v653
  %v772 = vpop.f32.mrb[0].mxu0
  %v773 = vadd.f32 0.0, %v772
  %v774 = vpop.f32.mrb[0].mxu0
  %v775 = vadd.f32 0.0, %v774
  %v776 = vpop.f32.mrb[0].mxu0
  %v777 = vadd.f32 0.0, %v776
  %v778 = vpop.f32.mrb[0].mxu0
  %v779 = vadd.f32 0.0, %v778
  %780 = vmatprep.mubr.bf16.mxu0 0
  %781 = vmatmul.mubr.bf16.gmra.mrb[0].mxu0 %v656
  %v782 = vpop.f32.mrb[0].mxu0
  %v783 = vadd.f32 0.0, %v782
  %v784 = vpop.f32.mrb[0].mxu0
  %v785 = vadd.f32 0.0, %v784
  %v786 = vpop.f32.mrb[0].mxu0
  %v787 = vadd.f32 0.0, %v786
  %v788 = vpop.f32.mrb[0].mxu0
  %v789 = vadd.f32 0.0, %v788
  %790 = vdwg.mxu0
  %v791 = vpack.c.bf16 %v697, %v693
  %v792 = vpack.c.bf16 %v699, %v695
  %v793 = vpack.c.bf16 %v707, %v703
  %v794 = vpack.c.bf16 %v709, %v705
  %v795 = vpack.c.bf16 %v717, %v713
  %v796 = vpack.c.bf16 %v719, %v715
  %v797 = vpack.c.bf16 %v727, %v723
  %v798 = vpack.c.bf16 %v729, %v725
  %v799 = vpack.c.bf16 %v737, %v733
  %v800 = vpack.c.bf16 %v739, %v735
  %v801 = vpack.c.bf16 %v747, %v743
  %v802 = vpack.c.bf16 %v749, %v745
  %v803 = vpack.c.bf16 %v757, %v753
  %v804 = vpack.c.bf16 %v759, %v755
  %v805 = vpack.c.bf16 %v767, %v763
  %v806 = vpack.c.bf16 %v769, %v765
  %v807 = vpack.c.bf16 %v777, %v773
  %v808 = vpack.c.bf16 %v779, %v775
  %v809 = vpack.c.bf16 %v787, %v783
  %v810 = vpack.c.bf16 %v789, %v785
  %811 = vst [vmem:[#allocation3] sm:$0xff] %v791
  %812 = vst.msk [vmem:[#allocation3 + $0x8] sm:$0xff] %vm123, %v792
  %813 = vst [vmem:[#allocation3 + $0x10] sm:$0xff] %v793
  %814 = vst.msk [vmem:[#allocation3 + $0x18] sm:$0xff] %vm123, %v794
  %815 = vst [vmem:[#allocation3 + $0x20] sm:$0xff] %v795
  %816 = vst.msk [vmem:[#allocation3 + $0x28] sm:$0xff] %vm123, %v796
  %817 = vst [vmem:[#allocation3 + $0x30] sm:$0xff] %v797
  %818 = vst.msk [vmem:[#allocation3 + $0x38] sm:$0xff] %vm123, %v798
  %819 = vst [vmem:[#allocation3 + $0x40] sm:$0xff] %v799
  %820 = vst.msk [vmem:[#allocation3 + $0x48] sm:$0xff] %vm123, %v800
  %821 = vst [vmem:[#allocation3 + $0x50] sm:$0xff] %v801
  %822 = vst.msk [vmem:[#allocation3 + $0x58] sm:$0xff] %vm123, %v802
  %823 = vst [vmem:[#allocation3 + $0x60] sm:$0xff] %v803
  %824 = vst.msk [vmem:[#allocation3 + $0x68] sm:$0xff] %vm123, %v804
  %825 = vst [vmem:[#allocation3 + $0x70] sm:$0xff] %v805
  %826 = vst.msk [vmem:[#allocation3 + $0x78] sm:$0xff] %vm123, %v806
  %827 = vst [vmem:[#allocation3 + $0x80] sm:$0xff] %v807
  %828 = vst.msk [vmem:[#allocation3 + $0x88] sm:$0xff] %vm123, %v808
  %829 = vst [vmem:[#allocation3 + $0x90] sm:$0xff] %v809
  %830 = vst.msk [vmem:[#allocation3 + $0x98] sm:$0xff] %vm123, %v810
  %v831 = vld [vmem:[%s3] sm:$0x3]
  %v833 = vlaneseq
  %v834 = vshrl.u32 %v833, 7
  %v835 = vsub.s32 0, %v834
  %v836 = vrot.slane %v831, %v835
  %v837 = vlaneseq
  %v838 = vshrl.u32 %v837, 7
  %v839 = vsub.s32 1, %v838
  %v840 = vrot.slane %v831, %v839
  %v843 = vld [vmem:[#allocation3] sm:$0xff]
  %v844 = vld [vmem:[#allocation3 + $0x8] sm:$0xff]
  %v845 = vld [vmem:[#allocation3 + $0x10] sm:$0xff]
  %v846 = vld [vmem:[#allocation3 + $0x18] sm:$0xff]
  %v847 = vld [vmem:[%s4] sm:$0xff]
  %v848 = vld [vmem:[%s4 + $0x8] sm:$0xff]
  %v849 = vld [vmem:[%s4 + $0x10] sm:$0xff]
  %v850 = vld [vmem:[%s4 + $0x18] sm:$0xff]
  %v851 = vld [vmem:[%s4 + $0x20] sm:$0xff]
  %v852 = vld [vmem:[%s4 + $0x28] sm:$0xff]
  %v853 = vld [vmem:[%s4 + $0x30] sm:$0xff]
  %v854 = vld [vmem:[%s4 + $0x38] sm:$0xff]
  %v855 = vld [vmem:[%s4 + $0x40] sm:$0xff]
  %v856 = vld [vmem:[%s4 + $0x48] sm:$0xff]
  %v857 = vld [vmem:[%s4 + $0x50] sm:$0xff]
  %v858 = vld [vmem:[%s4 + $0x58] sm:$0xff]
  %v859 = vld [vmem:[%s4 + $0x60] sm:$0xff]
  %v860 = vld [vmem:[%s4 + $0x68] sm:$0xff]
  %v861 = vld [vmem:[%s4 + $0x70] sm:$0xff]
  %v862 = vld [vmem:[%s4 + $0x78] sm:$0xff]
  %v863 = vld [vmem:[%s4 + $0x80] sm:$0xff]
  %v864 = vld [vmem:[%s4 + $0x88] sm:$0xff]
  %v865 = vld [vmem:[%s4 + $0x90] sm:$0xff]
  %v866 = vld [vmem:[%s4 + $0x98] sm:$0xff]
  %v867 = vld [vmem:[%s4 + $0xa0] sm:$0xff]
  %v868 = vld [vmem:[%s4 + $0xa8] sm:$0xff]
  %v869 = vld [vmem:[%s4 + $0xb0] sm:$0x33]
  %v893 = vunpack.c.l.b16 %v847
  %v894 = vunpack.c.h.b16 %v847
  %v895 = vunpack.c.l.b16 %v848
  %v896 = vunpack.c.h.b16 %v848
  %v897 = vunpack.c.l.b16 %v849
  %v898 = vunpack.c.h.b16 %v849
  %v899 = vunpack.c.l.b16 %v850
  %v900 = vunpack.c.h.b16 %v850
  %v901 = vunpack.c.l.b16 %v851
  %v902 = vunpack.c.h.b16 %v851
  %v903 = vunpack.c.l.b16 %v852
  %v904 = vunpack.c.h.b16 %v852
  %v905 = vunpack.c.l.b16 %v853
  %v906 = vunpack.c.h.b16 %v853
  %v907 = vunpack.c.l.b16 %v854
  %v908 = vunpack.c.h.b16 %v854
  %v909 = vunpack.c.l.b16 %v855
  %v910 = vunpack.c.h.b16 %v855
  %v911 = vunpack.c.l.b16 %v856
  %v912 = vunpack.c.h.b16 %v856
  %v913 = vunpack.c.l.b16 %v857
  %v914 = vunpack.c.h.b16 %v857
  %v915 = vunpack.c.l.b16 %v858
  %v916 = vunpack.c.h.b16 %v858
  %v917 = vunpack.c.l.b16 %v859
  %v918 = vunpack.c.h.b16 %v859
  %v919 = vunpack.c.l.b16 %v860
  %v920 = vunpack.c.h.b16 %v860
  %v921 = vunpack.c.l.b16 %v861
  %v922 = vunpack.c.h.b16 %v861
  %v923 = vunpack.c.l.b16 %v862
  %v924 = vunpack.c.h.b16 %v862
  %v925 = vunpack.c.l.b16 %v863
  %v926 = vunpack.c.h.b16 %v863
  %v927 = vunpack.c.l.b16 %v864
  %v928 = vunpack.c.h.b16 %v864
  %v929 = vunpack.c.l.b16 %v865
  %v930 = vunpack.c.h.b16 %v865
  %v931 = vunpack.c.l.b16 %v866
  %v932 = vunpack.c.h.b16 %v866
  %v933 = vunpack.c.l.b16 %v867
  %v934 = vunpack.c.h.b16 %v867
  %v935 = vunpack.c.l.b16 %v868
  %v936 = vunpack.c.h.b16 %v868
  %v937 = vunpack.c.l.b16 %v869
  %v938 = vunpack.c.h.b16 %v869
  %v939 = vpack.c.b16 %v895, %v893
  %v940 = vpack.c.b16 %v896, %v894
  %v941 = vpack.c.b16 %v899, %v897
  %v942 = vpack.c.b16 %v900, %v898
  %v943 = vpack.c.b16 %v903, %v901
  %v944 = vpack.c.b16 %v904, %v902
  %v945 = vpack.c.b16 %v907, %v905
  %v946 = vpack.c.b16 %v908, %v906
  %v947 = vpack.c.b16 %v911, %v909
  %v948 = vpack.c.b16 %v912, %v910
  %v949 = vpack.c.b16 %v915, %v913
  %v950 = vpack.c.b16 %v916, %v914
  %v951 = vpack.c.b16 %v919, %v917
  %v952 = vpack.c.b16 %v920, %v918
  %v953 = vpack.c.b16 %v923, %v921
  %v954 = vpack.c.b16 %v924, %v922
  %v955 = vpack.c.b16 %v927, %v925
  %v956 = vpack.c.b16 %v928, %v926
  %v957 = vpack.c.b16 %v931, %v929
  %v958 = vpack.c.b16 %v932, %v930
  %v959 = vpack.c.b16 %v935, %v933
  %v960 = vpack.c.b16 %v936, %v934
  %v961 = vpack.c.b16 %v937, %v937
  %v962 = vpack.c.b16 %v938, %v938
  %v986 = vsel %vm123, %v844, 0
  %v989 = vsel %vm123, %v846, 0
  %vm991 = vcmask 1041408
  %v993 = vsel %vm991, %v961, 0
  %v996 = vsel %vm991, %v962, 0
  %998 = vmatprep.subr.bf16.mxu0 %v940
  %999 = vmatpush1.bf16.msra.mxu0 %v939
  %1000 = vmatprep.subr.bf16.mxu0 %v942
  %1001 = vmatpush1.bf16.msra.mxu0 %v941
  %1002 = vmatprep.subr.bf16.mxu0 %v944
  %1003 = vmatpush1.bf16.msra.mxu0 %v943
  %1004 = vmatprep.subr.bf16.mxu0 %v946
  %1005 = vmatpush1.bf16.msra.mxu0 %v945
  %1006 = vmatprep.subr.bf16.mxu0 %v948
  %1007 = vmatpush1.bf16.msra.mxu0 %v947
  %1008 = vmatprep.subr.bf16.mxu0 %v950
  %1009 = vmatpush1.bf16.msra.mxu0 %v949
  %1010 = vmatprep.subr.bf16.mxu0 %v952
  %1011 = vmatpush1.bf16.msra.mxu0 %v951
  %1012 = vmatprep.subr.bf16.mxu0 %v954
  %1013 = vmatpush1.bf16.msra.mxu0 %v953
  %1014 = vmatprep.subr.bf16.mxu0 %v956
  %1015 = vmatpush1.bf16.msra.mxu0 %v955
  %1016 = vmatprep.subr.bf16.mxu0 %v958
  %1017 = vmatpush1.bf16.msra.mxu0 %v957
  %1018 = vmatprep.subr.bf16.mxu0 %v960
  %1019 = vmatpush1.bf16.msra.mxu0 %v959
  %1020 = vmatprep.subr.bf16.mxu0 %v996
  %1021 = vmatpush1.bf16.msra.mxu0 %v993
  %1022 = vmatprep.subr.bf16.mxu0 0
  %1023 = vmatpush1.bf16.msra.mxu0 0
  %1024 = vmatprep.subr.bf16.mxu0 0
  %1025 = vmatpush1.bf16.msra.mxu0 0
  %1026 = vmatprep.subr.bf16.mxu0 0
  %1027 = vmatpush1.bf16.msra.mxu0 0
  %1028 = vmatprep.subr.bf16.mxu0 0
  %1029 = vmatpush1.bf16.msra.mxu0 0
  %1030 = vmatprep.mubr.bf16.mxu0 %v986
  %1031 = vmatmul.mubr.bf16.gmra.mrb[0].mxu0 %v843
  %v1032 = vpop.f32.mrb[0].mxu0
  %v1033 = vadd.f32 0.0, %v1032
  %v1034 = vpop.f32.mrb[0].mxu0
  %v1035 = vadd.f32 0.0, %v1034
  %v1036 = vpop.f32.mrb[0].mxu0
  %v1037 = vadd.f32 0.0, %v1036
  %v1038 = vpop.f32.mrb[0].mxu0
  %v1039 = vadd.f32 0.0, %v1038
  %1040 = vmatprep.mubr.bf16.mxu0 %v989
  %1041 = vmatmul.mubr.bf16.gmra.mrb[0].mxu0 %v845
  %v1042 = vpop.f32.mrb[0].mxu0
  %v1043 = vadd.f32 0.0, %v1042
  %v1044 = vpop.f32.mrb[0].mxu0
  %v1045 = vadd.f32 0.0, %v1044
  %v1046 = vpop.f32.mrb[0].mxu0
  %v1047 = vadd.f32 0.0, %v1046
  %v1048 = vpop.f32.mrb[0].mxu0
  %v1049 = vadd.f32 0.0, %v1048
  %1050 = vdwg.mxu0
  %v1051 = vadd.f32 %v836, %v1033
  %v1052 = vadd.f32 %v840, %v1035
  %v1053 = vadd.f32 %v836, %v1037
  %v1054 = vadd.f32 %v840, %v1039
  %v1055 = vadd.f32 %v836, %v1043
  %v1056 = vadd.f32 %v840, %v1045
  %v1057 = vadd.f32 %v836, %v1047
  %v1058 = vadd.f32 %v840, %v1049
  %v1059 = vld [vmem:[#allocation3 + $0x20] sm:$0xff]
  %v1060 = vld [vmem:[#allocation3 + $0x28] sm:$0xff]
  %v1061 = vld [vmem:[#allocation3 + $0x30] sm:$0xff]
  %v1062 = vld [vmem:[#allocation3 + $0x38] sm:$0xff]
  %s1063 = scalar_lea.vmem %s4, 184
  %v1064 = vld [vmem:[%s1063] sm:$0xff]
  %v1065 = vld [vmem:[%s1063 + $0x8] sm:$0xff]
  %v1066 = vld [vmem:[%s1063 + $0x10] sm:$0xff]
  %v1067 = vld [vmem:[%s1063 + $0x18] sm:$0xff]
  %v1068 = vld [vmem:[%s1063 + $0x20] sm:$0xff]
  %v1069 = vld [vmem:[%s1063 + $0x28] sm:$0xff]
  %v1070 = vld [vmem:[%s1063 + $0x30] sm:$0xff]
  %v1071 = vld [vmem:[%s1063 + $0x38] sm:$0xff]
  %v1072 = vld [vmem:[%s1063 + $0x40] sm:$0xff]
  %v1073 = vld [vmem:[%s1063 + $0x48] sm:$0xff]
  %v1074 = vld [vmem:[%s1063 + $0x50] sm:$0xff]
  %v1075 = vld [vmem:[%s1063 + $0x58] sm:$0xff]
  %v1076 = vld [vmem:[%s1063 + $0x60] sm:$0xff]
  %v1077 = vld [vmem:[%s1063 + $0x68] sm:$0xff]
  %v1078 = vld [vmem:[%s1063 + $0x70] sm:$0xff]
  %v1079 = vld [vmem:[%s1063 + $0x78] sm:$0xff]
  %v1080 = vld [vmem:[%s1063 + $0x80] sm:$0xff]
  %v1081 = vld [vmem:[%s1063 + $0x88] sm:$0xff]
  %v1082 = vld [vmem:[%s1063 + $0x90] sm:$0xff]
  %v1083 = vld [vmem:[%s1063 + $0x98] sm:$0xff]
  %v1084 = vld [vmem:[%s1063 + $0xa0] sm:$0xff]
  %v1085 = vld [vmem:[%s1063 + $0xa8] sm:$0xff]
  %v1086 = vld [vmem:[%s1063 + $0xb0] sm:$0x33]
  %v1110 = vunpack.c.l.b16 %v1064
  %v1111 = vunpack.c.h.b16 %v1064
  %v1112 = vunpack.c.l.b16 %v1065
  %v1113 = vunpack.c.h.b16 %v1065
  %v1114 = vunpack.c.l.b16 %v1066
  %v1115 = vunpack.c.h.b16 %v1066
  %v1116 = vunpack.c.l.b16 %v1067
  %v1117 = vunpack.c.h.b16 %v1067
  %v1118 = vunpack.c.l.b16 %v1068
  %v1119 = vunpack.c.h.b16 %v1068
  %v1120 = vunpack.c.l.b16 %v1069
  %v1121 = vunpack.c.h.b16 %v1069
  %v1122 = vunpack.c.l.b16 %v1070
  %v1123 = vunpack.c.h.b16 %v1070
  %v1124 = vunpack.c.l.b16 %v1071
  %v1125 = vunpack.c.h.b16 %v1071
  %v1126 = vunpack.c.l.b16 %v1072
  %v1127 = vunpack.c.h.b16 %v1072
  %v1128 = vunpack.c.l.b16 %v1073
  %v1129 = vunpack.c.h.b16 %v1073
  %v1130 = vunpack.c.l.b16 %v1074
  %v1131 = vunpack.c.h.b16 %v1074
  %v1132 = vunpack.c.l.b16 %v1075
  %v1133 = vunpack.c.h.b16 %v1075
  %v1134 = vunpack.c.l.b16 %v1076
  %v1135 = vunpack.c.h.b16 %v1076
  %v1136 = vunpack.c.l.b16 %v1077
  %v1137 = vunpack.c.h.b16 %v1077
  %v1138 = vunpack.c.l.b16 %v1078
  %v1139 = vunpack.c.h.b16 %v1078
  %v1140 = vunpack.c.l.b16 %v1079
  %v1141 = vunpack.c.h.b16 %v1079
  %v1142 = vunpack.c.l.b16 %v1080
  %v1143 = vunpack.c.h.b16 %v1080
  %v1144 = vunpack.c.l.b16 %v1081
  %v1145 = vunpack.c.h.b16 %v1081
  %v1146 = vunpack.c.l.b16 %v1082
  %v1147 = vunpack.c.h.b16 %v1082
  %v1148 = vunpack.c.l.b16 %v1083
  %v1149 = vunpack.c.h.b16 %v1083
  %v1150 = vunpack.c.l.b16 %v1084
  %v1151 = vunpack.c.h.b16 %v1084
  %v1152 = vunpack.c.l.b16 %v1085
  %v1153 = vunpack.c.h.b16 %v1085
  %v1154 = vunpack.c.l.b16 %v1086
  %v1155 = vunpack.c.h.b16 %v1086
  %v1156 = vpack.c.b16 %v1112, %v1110
  %v1157 = vpack.c.b16 %v1113, %v1111
  %v1158 = vpack.c.b16 %v1116, %v1114
  %v1159 = vpack.c.b16 %v1117, %v1115
  %v1160 = vpack.c.b16 %v1120, %v1118
  %v1161 = vpack.c.b16 %v1121, %v1119
  %v1162 = vpack.c.b16 %v1124, %v1122
  %v1163 = vpack.c.b16 %v1125, %v1123
  %v1164 = vpack.c.b16 %v1128, %v1126
  %v1165 = vpack.c.b16 %v1129, %v1127
  %v1166 = vpack.c.b16 %v1132, %v1130
  %v1167 = vpack.c.b16 %v1133, %v1131
  %v1168 = vpack.c.b16 %v1136, %v1134
  %v1169 = vpack.c.b16 %v1137, %v1135
  %v1170 = vpack.c.b16 %v1140, %v1138
  %v1171 = vpack.c.b16 %v1141, %v1139
  %v1172 = vpack.c.b16 %v1144, %v1142
  %v1173 = vpack.c.b16 %v1145, %v1143
  %v1174 = vpack.c.b16 %v1148, %v1146
  %v1175 = vpack.c.b16 %v1149, %v1147
  %v1176 = vpack.c.b16 %v1152, %v1150
  %v1177 = vpack.c.b16 %v1153, %v1151
  %v1178 = vpack.c.b16 %v1154, %v1154
  %v1179 = vpack.c.b16 %v1155, %v1155
  %v1203 = vsel %vm123, %v1060, 0
  %v1206 = vsel %vm123, %v1062, 0
  %v1209 = vsel %vm991, %v1178, 0
  %v1212 = vsel %vm991, %v1179, 0
  %1214 = vmatprep.subr.bf16.mxu0 %v1157
  %1215 = vmatpush1.bf16.msra.mxu0 %v1156
  %1216 = vmatprep.subr.bf16.mxu0 %v1159
  %1217 = vmatpush1.bf16.msra.mxu0 %v1158
  %1218 = vmatprep.subr.bf16.mxu0 %v1161
  %1219 = vmatpush1.bf16.msra.mxu0 %v1160
  %1220 = vmatprep.subr.bf16.mxu0 %v1163
  %1221 = vmatpush1.bf16.msra.mxu0 %v1162
  %1222 = vmatprep.subr.bf16.mxu0 %v1165
  %1223 = vmatpush1.bf16.msra.mxu0 %v1164
  %1224 = vmatprep.subr.bf16.mxu0 %v1167
  %1225 = vmatpush1.bf16.msra.mxu0 %v1166
  %1226 = vmatprep.subr.bf16.mxu0 %v1169
  %1227 = vmatpush1.bf16.msra.mxu0 %v1168
  %1228 = vmatprep.subr.bf16.mxu0 %v1171
  %1229 = vmatpush1.bf16.msra.mxu0 %v1170
  %1230 = vmatprep.subr.bf16.mxu0 %v1173
  %1231 = vmatpush1.bf16.msra.mxu0 %v1172
  %1232 = vmatprep.subr.bf16.mxu0 %v1175
  %1233 = vmatpush1.bf16.msra.mxu0 %v1174
  %1234 = vmatprep.subr.bf16.mxu0 %v1177
  %1235 = vmatpush1.bf16.msra.mxu0 %v1176
  %1236 = vmatprep.subr.bf16.mxu0 %v1212
  %1237 = vmatpush1.bf16.msra.mxu0 %v1209
  %1238 = vmatprep.subr.bf16.mxu0 0
  %1239 = vmatpush1.bf16.msra.mxu0 0
  %1240 = vmatprep.subr.bf16.mxu0 0
  %1241 = vmatpush1.bf16.msra.mxu0 0
  %1242 = vmatprep.subr.bf16.mxu0 0
  %1243 = vmatpush1.bf16.msra.mxu0 0
  %1244 = vmatprep.subr.bf16.mxu0 0
  %1245 = vmatpush1.bf16.msra.mxu0 0
  %1246 = vmatprep.mubr.bf16.mxu0 %v1203
  %1247 = vmatmul.mubr.bf16.gmra.mrb[0].mxu0 %v1059
  %v1248 = vpop.f32.mrb[0].mxu0
  %v1249 = vadd.f32 0.0, %v1248
  %v1250 = vpop.f32.mrb[0].mxu0
  %v1251 = vadd.f32 0.0, %v1250
  %v1252 = vpop.f32.mrb[0].mxu0
  %v1253 = vadd.f32 0.0, %v1252
  %v1254 = vpop.f32.mrb[0].mxu0
  %v1255 = vadd.f32 0.0, %v1254
  %1256 = vmatprep.mubr.bf16.mxu0 %v1206
  %1257 = vmatmul.mubr.bf16.gmra.mrb[0].mxu0 %v1061
  %v1258 = vpop.f32.mrb[0].mxu0
  %v1259 = vadd.f32 0.0, %v1258
  %v1260 = vpop.f32.mrb[0].mxu0
  %v1261 = vadd.f32 0.0, %v1260
  %v1262 = vpop.f32.mrb[0].mxu0
  %v1263 = vadd.f32 0.0, %v1262
  %v1264 = vpop.f32.mrb[0].mxu0
  %v1265 = vadd.f32 0.0, %v1264
  %1266 = vdwg.mxu0
  %v1267 = vadd.f32 %v1051, %v1249
  %v1268 = vadd.f32 %v1052, %v1251
  %v1269 = vadd.f32 %v1053, %v1253
  %v1270 = vadd.f32 %v1054, %v1255
  %v1271 = vadd.f32 %v1055, %v1259
  %v1272 = vadd.f32 %v1056, %v1261
  %v1273 = vadd.f32 %v1057, %v1263
  %v1274 = vadd.f32 %v1058, %v1265
  %v1275 = vld [vmem:[#allocation3 + $0x40] sm:$0xff]
  %v1276 = vld [vmem:[#allocation3 + $0x48] sm:$0xff]
  %v1277 = vld [vmem:[#allocation3 + $0x50] sm:$0xff]
  %v1278 = vld [vmem:[#allocation3 + $0x58] sm:$0xff]
  %s1279 = scalar_lea.vmem %s4, 368
  %v1280 = vld [vmem:[%s1279] sm:$0xff]
  %v1281 = vld [vmem:[%s1279 + $0x8] sm:$0xff]
  %v1282 = vld [vmem:[%s1279 + $0x10] sm:$0xff]
  %v1283 = vld [vmem:[%s1279 + $0x18] sm:$0xff]
  %v1284 = vld [vmem:[%s1279 + $0x20] sm:$0xff]
  %v1285 = vld [vmem:[%s1279 + $0x28] sm:$0xff]
  %v1286 = vld [vmem:[%s1279 + $0x30] sm:$0xff]
  %v1287 = vld [vmem:[%s1279 + $0x38] sm:$0xff]
  %v1288 = vld [vmem:[%s1279 + $0x40] sm:$0xff]
  %v1289 = vld [vmem:[%s1279 + $0x48] sm:$0xff]
  %v1290 = vld [vmem:[%s1279 + $0x50] sm:$0xff]
  %v1291 = vld [vmem:[%s1279 + $0x58] sm:$0xff]
  %v1292 = vld [vmem:[%s1279 + $0x60] sm:$0xff]
  %v1293 = vld [vmem:[%s1279 + $0x68] sm:$0xff]
  %v1294 = vld [vmem:[%s1279 + $0x70] sm:$0xff]
  %v1295 = vld [vmem:[%s1279 + $0x78] sm:$0xff]
  %v1296 = vld [vmem:[%s1279 + $0x80] sm:$0xff]
  %v1297 = vld [vmem:[%s1279 + $0x88] sm:$0xff]
  %v1298 = vld [vmem:[%s1279 + $0x90] sm:$0xff]
  %v1299 = vld [vmem:[%s1279 + $0x98] sm:$0xff]
  %v1300 = vld [vmem:[%s1279 + $0xa0] sm:$0xff]
  %v1301 = vld [vmem:[%s1279 + $0xa8] sm:$0xff]
  %v1302 = vld [vmem:[%s1279 + $0xb0] sm:$0x33]
  %v1326 = vunpack.c.l.b16 %v1280
  %v1327 = vunpack.c.h.b16 %v1280
  %v1328 = vunpack.c.l.b16 %v1281
  %v1329 = vunpack.c.h.b16 %v1281
  %v1330 = vunpack.c.l.b16 %v1282
  %v1331 = vunpack.c.h.b16 %v1282
  %v1332 = vunpack.c.l.b16 %v1283
  %v1333 = vunpack.c.h.b16 %v1283
  %v1334 = vunpack.c.l.b16 %v1284
  %v1335 = vunpack.c.h.b16 %v1284
  %v1336 = vunpack.c.l.b16 %v1285
  %v1337 = vunpack.c.h.b16 %v1285
  %v1338 = vunpack.c.l.b16 %v1286
  %v1339 = vunpack.c.h.b16 %v1286
  %v1340 = vunpack.c.l.b16 %v1287
  %v1341 = vunpack.c.h.b16 %v1287
  %v1342 = vunpack.c.l.b16 %v1288
  %v1343 = vunpack.c.h.b16 %v1288
  %v1344 = vunpack.c.l.b16 %v1289
  %v1345 = vunpack.c.h.b16 %v1289
  %v1346 = vunpack.c.l.b16 %v1290
  %v1347 = vunpack.c.h.b16 %v1290
  %v1348 = vunpack.c.l.b16 %v1291
  %v1349 = vunpack.c.h.b16 %v1291
  %v1350 = vunpack.c.l.b16 %v1292
  %v1351 = vunpack.c.h.b16 %v1292
  %v1352 = vunpack.c.l.b16 %v1293
  %v1353 = vunpack.c.h.b16 %v1293
  %v1354 = vunpack.c.l.b16 %v1294
  %v1355 = vunpack.c.h.b16 %v1294
  %v1356 = vunpack.c.l.b16 %v1295
  %v1357 = vunpack.c.h.b16 %v1295
  %v1358 = vunpack.c.l.b16 %v1296
  %v1359 = vunpack.c.h.b16 %v1296
  %v1360 = vunpack.c.l.b16 %v1297
  %v1361 = vunpack.c.h.b16 %v1297
  %v1362 = vunpack.c.l.b16 %v1298
  %v1363 = vunpack.c.h.b16 %v1298
  %v1364 = vunpack.c.l.b16 %v1299
  %v1365 = vunpack.c.h.b16 %v1299
  %v1366 = vunpack.c.l.b16 %v1300
  %v1367 = vunpack.c.h.b16 %v1300
  %v1368 = vunpack.c.l.b16 %v1301
  %v1369 = vunpack.c.h.b16 %v1301
  %v1370 = vunpack.c.l.b16 %v1302
  %v1371 = vunpack.c.h.b16 %v1302
  %v1372 = vpack.c.b16 %v1328, %v1326
  %v1373 = vpack.c.b16 %v1329, %v1327
  %v1374 = vpack.c.b16 %v1332, %v1330
  %v1375 = vpack.c.b16 %v1333, %v1331
  %v1376 = vpack.c.b16 %v1336, %v1334
  %v1377 = vpack.c.b16 %v1337, %v1335
  %v1378 = vpack.c.b16 %v1340, %v1338
  %v1379 = vpack.c.b16 %v1341, %v1339
  %v1380 = vpack.c.b16 %v1344, %v1342
  %v1381 = vpack.c.b16 %v1345, %v1343
  %v1382 = vpack.c.b16 %v1348, %v1346
  %v1383 = vpack.c.b16 %v1349, %v1347
  %v1384 = vpack.c.b16 %v1352, %v1350
  %v1385 = vpack.c.b16 %v1353, %v1351
  %v1386 = vpack.c.b16 %v1356, %v1354
  %v1387 = vpack.c.b16 %v1357, %v1355
  %v1388 = vpack.c.b16 %v1360, %v1358
  %v1389 = vpack.c.b16 %v1361, %v1359
  %v1390 = vpack.c.b16 %v1364, %v1362
  %v1391 = vpack.c.b16 %v1365, %v1363
  %v1392 = vpack.c.b16 %v1368, %v1366
  %v1393 = vpack.c.b16 %v1369, %v1367
  %v1394 = vpack.c.b16 %v1370, %v1370
  %v1395 = vpack.c.b16 %v1371, %v1371
  %v1419 = vsel %vm123, %v1276, 0
  %v1422 = vsel %vm123, %v1278, 0
  %v1425 = vsel %vm991, %v1394, 0
  %v1428 = vsel %vm991, %v1395, 0
  %1430 = vmatprep.subr.bf16.mxu0 %v1373
  %1431 = vmatpush1.bf16.msra.mxu0 %v1372
  %1432 = vmatprep.subr.bf16.mxu0 %v1375
  %1433 = vmatpush1.bf16.msra.mxu0 %v1374
  %1434 = vmatprep.subr.bf16.mxu0 %v1377
  %1435 = vmatpush1.bf16.msra.mxu0 %v1376
  %1436 = vmatprep.subr.bf16.mxu0 %v1379
  %1437 = vmatpush1.bf16.msra.mxu0 %v1378
  %1438 = vmatprep.subr.bf16.mxu0 %v1381
  %1439 = vmatpush1.bf16.msra.mxu0 %v1380
  %1440 = vmatprep.subr.bf16.mxu0 %v1383
  %1441 = vmatpush1.bf16.msra.mxu0 %v1382
  %1442 = vmatprep.subr.bf16.mxu0 %v1385
  %1443 = vmatpush1.bf16.msra.mxu0 %v1384
  %1444 = vmatprep.subr.bf16.mxu0 %v1387
  %1445 = vmatpush1.bf16.msra.mxu0 %v1386
  %1446 = vmatprep.subr.bf16.mxu0 %v1389
  %1447 = vmatpush1.bf16.msra.mxu0 %v1388
  %1448 = vmatprep.subr.bf16.mxu0 %v1391
  %1449 = vmatpush1.bf16.msra.mxu0 %v1390
  %1450 = vmatprep.subr.bf16.mxu0 %v1393
  %1451 = vmatpush1.bf16.msra.mxu0 %v1392
  %1452 = vmatprep.subr.bf16.mxu0 %v1428
  %1453 = vmatpush1.bf16.msra.mxu0 %v1425
  %1454 = vmatprep.subr.bf16.mxu0 0
  %1455 = vmatpush1.bf16.msra.mxu0 0
  %1456 = vmatprep.subr.bf16.mxu0 0
  %1457 = vmatpush1.bf16.msra.mxu0 0
  %1458 = vmatprep.subr.bf16.mxu0 0
  %1459 = vmatpush1.bf16.msra.mxu0 0
  %1460 = vmatprep.subr.bf16.mxu0 0
  %1461 = vmatpush1.bf16.msra.mxu0 0
  %1462 = vmatprep.mubr.bf16.mxu0 %v1419
  %1463 = vmatmul.mubr.bf16.gmra.mrb[0].mxu0 %v1275
  %v1464 = vpop.f32.mrb[0].mxu0
  %v1465 = vadd.f32 0.0, %v1464
  %v1466 = vpop.f32.mrb[0].mxu0
  %v1467 = vadd.f32 0.0, %v1466
  %v1468 = vpop.f32.mrb[0].mxu0
  %v1469 = vadd.f32 0.0, %v1468
  %v1470 = vpop.f32.mrb[0].mxu0
  %v1471 = vadd.f32 0.0, %v1470
  %1472 = vmatprep.mubr.bf16.mxu0 %v1422
  %1473 = vmatmul.mubr.bf16.gmra.mrb[0].mxu0 %v1277
  %v1474 = vpop.f32.mrb[0].mxu0
  %v1475 = vadd.f32 0.0, %v1474
  %v1476 = vpop.f32.mrb[0].mxu0
  %v1477 = vadd.f32 0.0, %v1476
  %v1478 = vpop.f32.mrb[0].mxu0
  %v1479 = vadd.f32 0.0, %v1478
  %v1480 = vpop.f32.mrb[0].mxu0
  %v1481 = vadd.f32 0.0, %v1480
  %1482 = vdwg.mxu0
  %v1483 = vadd.f32 %v1267, %v1465
  %v1484 = vadd.f32 %v1268, %v1467
  %v1485 = vadd.f32 %v1269, %v1469
  %v1486 = vadd.f32 %v1270, %v1471
  %v1487 = vadd.f32 %v1271, %v1475
  %v1488 = vadd.f32 %v1272, %v1477
  %v1489 = vadd.f32 %v1273, %v1479
  %v1490 = vadd.f32 %v1274, %v1481
  %v1491 = vld [vmem:[#allocation3 + $0x60] sm:$0xff]
  %v1492 = vld [vmem:[#allocation3 + $0x68] sm:$0xff]
  %v1493 = vld [vmem:[#allocation3 + $0x70] sm:$0xff]
  %v1494 = vld [vmem:[#allocation3 + $0x78] sm:$0xff]
  %s1495 = scalar_lea.vmem %s4, 552
  %v1496 = vld [vmem:[%s1495] sm:$0xff]
  %v1497 = vld [vmem:[%s1495 + $0x8] sm:$0xff]
  %v1498 = vld [vmem:[%s1495 + $0x10] sm:$0xff]
  %v1499 = vld [vmem:[%s1495 + $0x18] sm:$0xff]
  %v1500 = vld [vmem:[%s1495 + $0x20] sm:$0xff]
  %v1501 = vld [vmem:[%s1495 + $0x28] sm:$0xff]
  %v1502 = vld [vmem:[%s1495 + $0x30] sm:$0xff]
  %v1503 = vld [vmem:[%s1495 + $0x38] sm:$0xff]
  %v1504 = vld [vmem:[%s1495 + $0x40] sm:$0xff]
  %v1505 = vld [vmem:[%s1495 + $0x48] sm:$0xff]
  %v1506 = vld [vmem:[%s1495 + $0x50] sm:$0xff]
  %v1507 = vld [vmem:[%s1495 + $0x58] sm:$0xff]
  %v1508 = vld [vmem:[%s1495 + $0x60] sm:$0xff]
  %v1509 = vld [vmem:[%s1495 + $0x68] sm:$0xff]
  %v1510 = vld [vmem:[%s1495 + $0x70] sm:$0xff]
  %v1511 = vld [vmem:[%s1495 + $0x78] sm:$0xff]
  %v1512 = vld [vmem:[%s1495 + $0x80] sm:$0xff]
  %v1513 = vld [vmem:[%s1495 + $0x88] sm:$0xff]
  %v1514 = vld [vmem:[%s1495 + $0x90] sm:$0xff]
  %v1515 = vld [vmem:[%s1495 + $0x98] sm:$0xff]
  %v1516 = vld [vmem:[%s1495 + $0xa0] sm:$0xff]
  %v1517 = vld [vmem:[%s1495 + $0xa8] sm:$0xff]
  %v1518 = vld [vmem:[%s1495 + $0xb0] sm:$0x33]
  %v1542 = vunpack.c.l.b16 %v1496
  %v1543 = vunpack.c.h.b16 %v1496
  %v1544 = vunpack.c.l.b16 %v1497
  %v1545 = vunpack.c.h.b16 %v1497
  %v1546 = vunpack.c.l.b16 %v1498
  %v1547 = vunpack.c.h.b16 %v1498
  %v1548 = vunpack.c.l.b16 %v1499
  %v1549 = vunpack.c.h.b16 %v1499
  %v1550 = vunpack.c.l.b16 %v1500
  %v1551 = vunpack.c.h.b16 %v1500
  %v1552 = vunpack.c.l.b16 %v1501
  %v1553 = vunpack.c.h.b16 %v1501
  %v1554 = vunpack.c.l.b16 %v1502
  %v1555 = vunpack.c.h.b16 %v1502
  %v1556 = vunpack.c.l.b16 %v1503
  %v1557 = vunpack.c.h.b16 %v1503
  %v1558 = vunpack.c.l.b16 %v1504
  %v1559 = vunpack.c.h.b16 %v1504
  %v1560 = vunpack.c.l.b16 %v1505
  %v1561 = vunpack.c.h.b16 %v1505
  %v1562 = vunpack.c.l.b16 %v1506
  %v1563 = vunpack.c.h.b16 %v1506
  %v1564 = vunpack.c.l.b16 %v1507
  %v1565 = vunpack.c.h.b16 %v1507
  %v1566 = vunpack.c.l.b16 %v1508
  %v1567 = vunpack.c.h.b16 %v1508
  %v1568 = vunpack.c.l.b16 %v1509
  %v1569 = vunpack.c.h.b16 %v1509
  %v1570 = vunpack.c.l.b16 %v1510
  %v1571 = vunpack.c.h.b16 %v1510
  %v1572 = vunpack.c.l.b16 %v1511
  %v1573 = vunpack.c.h.b16 %v1511
  %v1574 = vunpack.c.l.b16 %v1512
  %v1575 = vunpack.c.h.b16 %v1512
  %v1576 = vunpack.c.l.b16 %v1513
  %v1577 = vunpack.c.h.b16 %v1513
  %v1578 = vunpack.c.l.b16 %v1514
  %v1579 = vunpack.c.h.b16 %v1514
  %v1580 = vunpack.c.l.b16 %v1515
  %v1581 = vunpack.c.h.b16 %v1515
  %v1582 = vunpack.c.l.b16 %v1516
  %v1583 = vunpack.c.h.b16 %v1516
  %v1584 = vunpack.c.l.b16 %v1517
  %v1585 = vunpack.c.h.b16 %v1517
  %v1586 = vunpack.c.l.b16 %v1518
  %v1587 = vunpack.c.h.b16 %v1518
  %v1588 = vpack.c.b16 %v1544, %v1542
  %v1589 = vpack.c.b16 %v1545, %v1543
  %v1590 = vpack.c.b16 %v1548, %v1546
  %v1591 = vpack.c.b16 %v1549, %v1547
  %v1592 = vpack.c.b16 %v1552, %v1550
  %v1593 = vpack.c.b16 %v1553, %v1551
  %v1594 = vpack.c.b16 %v1556, %v1554
  %v1595 = vpack.c.b16 %v1557, %v1555
  %v1596 = vpack.c.b16 %v1560, %v1558
  %v1597 = vpack.c.b16 %v1561, %v1559
  %v1598 = vpack.c.b16 %v1564, %v1562
  %v1599 = vpack.c.b16 %v1565, %v1563
  %v1600 = vpack.c.b16 %v1568, %v1566
  %v1601 = vpack.c.b16 %v1569, %v1567
  %v1602 = vpack.c.b16 %v1572, %v1570
  %v1603 = vpack.c.b16 %v1573, %v1571
  %v1604 = vpack.c.b16 %v1576, %v1574
  %v1605 = vpack.c.b16 %v1577, %v1575
  %v1606 = vpack.c.b16 %v1580, %v1578
  %v1607 = vpack.c.b16 %v1581, %v1579
  %v1608 = vpack.c.b16 %v1584, %v1582
  %v1609 = vpack.c.b16 %v1585, %v1583
  %v1610 = vpack.c.b16 %v1586, %v1586
  %v1611 = vpack.c.b16 %v1587, %v1587
  %v1635 = vsel %vm123, %v1492, 0
  %v1638 = vsel %vm123, %v1494, 0
  %v1641 = vsel %vm991, %v1610, 0
  %v1644 = vsel %vm991, %v1611, 0
  %1646 = vmatprep.subr.bf16.mxu0 %v1589
  %1647 = vmatpush1.bf16.msra.mxu0 %v1588
  %1648 = vmatprep.subr.bf16.mxu0 %v1591
  %1649 = vmatpush1.bf16.msra.mxu0 %v1590
  %1650 = vmatprep.subr.bf16.mxu0 %v1593
  %1651 = vmatpush1.bf16.msra.mxu0 %v1592
  %1652 = vmatprep.subr.bf16.mxu0 %v1595
  %1653 = vmatpush1.bf16.msra.mxu0 %v1594
  %1654 = vmatprep.subr.bf16.mxu0 %v1597
  %1655 = vmatpush1.bf16.msra.mxu0 %v1596
  %1656 = vmatprep.subr.bf16.mxu0 %v1599
  %1657 = vmatpush1.bf16.msra.mxu0 %v1598
  %1658 = vmatprep.subr.bf16.mxu0 %v1601
  %1659 = vmatpush1.bf16.msra.mxu0 %v1600
  %1660 = vmatprep.subr.bf16.mxu0 %v1603
  %1661 = vmatpush1.bf16.msra.mxu0 %v1602
  %1662 = vmatprep.subr.bf16.mxu0 %v1605
  %1663 = vmatpush1.bf16.msra.mxu0 %v1604
  %1664 = vmatprep.subr.bf16.mxu0 %v1607
  %1665 = vmatpush1.bf16.msra.mxu0 %v1606
  %1666 = vmatprep.subr.bf16.mxu0 %v1609
  %1667 = vmatpush1.bf16.msra.mxu0 %v1608
  %1668 = vmatprep.subr.bf16.mxu0 %v1644
  %1669 = vmatpush1.bf16.msra.mxu0 %v1641
  %1670 = vmatprep.subr.bf16.mxu0 0
  %1671 = vmatpush1.bf16.msra.mxu0 0
  %1672 = vmatprep.subr.bf16.mxu0 0
  %1673 = vmatpush1.bf16.msra.mxu0 0
  %1674 = vmatprep.subr.bf16.mxu0 0
  %1675 = vmatpush1.bf16.msra.mxu0 0
  %1676 = vmatprep.subr.bf16.mxu0 0
  %1677 = vmatpush1.bf16.msra.mxu0 0
  %1678 = vmatprep.mubr.bf16.mxu0 %v1635
  %1679 = vmatmul.mubr.bf16.gmra.mrb[0].mxu0 %v1491
  %v1680 = vpop.f32.mrb[0].mxu0
  %v1681 = vadd.f32 0.0, %v1680
  %v1682 = vpop.f32.mrb[0].mxu0
  %v1683 = vadd.f32 0.0, %v1682
  %v1684 = vpop.f32.mrb[0].mxu0
  %v1685 = vadd.f32 0.0, %v1684
  %v1686 = vpop.f32.mrb[0].mxu0
  %v1687 = vadd.f32 0.0, %v1686
  %1688 = vmatprep.mubr.bf16.mxu0 %v1638
  %1689 = vmatmul.mubr.bf16.gmra.mrb[0].mxu0 %v1493
  %v1690 = vpop.f32.mrb[0].mxu0
  %v1691 = vadd.f32 0.0, %v1690
  %v1692 = vpop.f32.mrb[0].mxu0
  %v1693 = vadd.f32 0.0, %v1692
  %v1694 = vpop.f32.mrb[0].mxu0
  %v1695 = vadd.f32 0.0, %v1694
  %v1696 = vpop.f32.mrb[0].mxu0
  %v1697 = vadd.f32 0.0, %v1696
  %1698 = vdwg.mxu0
  %v1699 = vadd.f32 %v1483, %v1681
  %v1700 = vadd.f32 %v1484, %v1683
  %v1701 = vadd.f32 %v1485, %v1685
  %v1702 = vadd.f32 %v1486, %v1687
  %v1703 = vadd.f32 %v1487, %v1691
  %v1704 = vadd.f32 %v1488, %v1693
  %v1705 = vadd.f32 %v1489, %v1695
  %v1706 = vadd.f32 %v1490, %v1697
  %v1707 = vld [vmem:[#allocation3 + $0x80] sm:$0xff]
  %v1708 = vld [vmem:[#allocation3 + $0x88] sm:$0xff]
  %v1709 = vld [vmem:[#allocation3 + $0x90] sm:$0xff]
  %v1710 = vld [vmem:[#allocation3 + $0x98] sm:$0xff]
  %s1711 = scalar_lea.vmem %s4, 736
  %v1712 = vld [vmem:[%s1711] sm:$0xff]
  %v1713 = vld [vmem:[%s1711 + $0x8] sm:$0xff]
  %v1714 = vld [vmem:[%s1711 + $0x10] sm:$0xff]
  %v1715 = vld [vmem:[%s1711 + $0x18] sm:$0xff]
  %v1716 = vld [vmem:[%s1711 + $0x20] sm:$0xff]
  %v1717 = vld [vmem:[%s1711 + $0x28] sm:$0xff]
  %v1718 = vld [vmem:[%s1711 + $0x30] sm:$0xff]
  %v1719 = vld [vmem:[%s1711 + $0x38] sm:$0xff]
  %v1720 = vld [vmem:[%s1711 + $0x40] sm:$0xff]
  %v1721 = vld [vmem:[%s1711 + $0x48] sm:$0xff]
  %v1722 = vld [vmem:[%s1711 + $0x50] sm:$0xff]
  %v1723 = vld [vmem:[%s1711 + $0x58] sm:$0xff]
  %v1724 = vld [vmem:[%s1711 + $0x60] sm:$0xff]
  %v1725 = vld [vmem:[%s1711 + $0x68] sm:$0xff]
  %v1726 = vld [vmem:[%s1711 + $0x70] sm:$0xff]
  %v1727 = vld [vmem:[%s1711 + $0x78] sm:$0xff]
  %v1728 = vld [vmem:[%s1711 + $0x80] sm:$0xff]
  %v1729 = vld [vmem:[%s1711 + $0x88] sm:$0xff]
  %v1730 = vld [vmem:[%s1711 + $0x90] sm:$0xff]
  %v1731 = vld [vmem:[%s1711 + $0x98] sm:$0xff]
  %v1732 = vld [vmem:[%s1711 + $0xa0] sm:$0xff]
  %v1733 = vld [vmem:[%s1711 + $0xa8] sm:$0xff]
  %v1734 = vld [vmem:[%s1711 + $0xb0] sm:$0x33]
  %v1758 = vunpack.c.l.b16 %v1712
  %v1759 = vunpack.c.h.b16 %v1712
  %v1760 = vunpack.c.l.b16 %v1713
  %v1761 = vunpack.c.h.b16 %v1713
  %v1762 = vunpack.c.l.b16 %v1714
  %v1763 = vunpack.c.h.b16 %v1714
  %v1764 = vunpack.c.l.b16 %v1715
  %v1765 = vunpack.c.h.b16 %v1715
  %v1766 = vunpack.c.l.b16 %v1716
  %v1767 = vunpack.c.h.b16 %v1716
  %v1768 = vunpack.c.l.b16 %v1717
  %v1769 = vunpack.c.h.b16 %v1717
  %v1770 = vunpack.c.l.b16 %v1718
  %v1771 = vunpack.c.h.b16 %v1718
  %v1772 = vunpack.c.l.b16 %v1719
  %v1773 = vunpack.c.h.b16 %v1719
  %v1774 = vunpack.c.l.b16 %v1720
  %v1775 = vunpack.c.h.b16 %v1720
  %v1776 = vunpack.c.l.b16 %v1721
  %v1777 = vunpack.c.h.b16 %v1721
  %v1778 = vunpack.c.l.b16 %v1722
  %v1779 = vunpack.c.h.b16 %v1722
  %v1780 = vunpack.c.l.b16 %v1723
  %v1781 = vunpack.c.h.b16 %v1723
  %v1782 = vunpack.c.l.b16 %v1724
  %v1783 = vunpack.c.h.b16 %v1724
  %v1784 = vunpack.c.l.b16 %v1725
  %v1785 = vunpack.c.h.b16 %v1725
  %v1786 = vunpack.c.l.b16 %v1726
  %v1787 = vunpack.c.h.b16 %v1726
  %v1788 = vunpack.c.l.b16 %v1727
  %v1789 = vunpack.c.h.b16 %v1727
  %v1790 = vunpack.c.l.b16 %v1728
  %v1791 = vunpack.c.h.b16 %v1728
  %v1792 = vunpack.c.l.b16 %v1729
  %v1793 = vunpack.c.h.b16 %v1729
  %v1794 = vunpack.c.l.b16 %v1730
  %v1795 = vunpack.c.h.b16 %v1730
  %v1796 = vunpack.c.l.b16 %v1731
  %v1797 = vunpack.c.h.b16 %v1731
  %v1798 = vunpack.c.l.b16 %v1732
  %v1799 = vunpack.c.h.b16 %v1732
  %v1800 = vunpack.c.l.b16 %v1733
  %v1801 = vunpack.c.h.b16 %v1733
  %v1802 = vunpack.c.l.b16 %v1734
  %v1803 = vunpack.c.h.b16 %v1734
  %v1804 = vpack.c.b16 %v1760, %v1758
  %v1805 = vpack.c.b16 %v1761, %v1759
  %v1806 = vpack.c.b16 %v1764, %v1762
  %v1807 = vpack.c.b16 %v1765, %v1763
  %v1808 = vpack.c.b16 %v1768, %v1766
  %v1809 = vpack.c.b16 %v1769, %v1767
  %v1810 = vpack.c.b16 %v1772, %v1770
  %v1811 = vpack.c.b16 %v1773, %v1771
  %v1812 = vpack.c.b16 %v1776, %v1774
  %v1813 = vpack.c.b16 %v1777, %v1775
  %v1814 = vpack.c.b16 %v1780, %v1778
  %v1815 = vpack.c.b16 %v1781, %v1779
  %v1816 = vpack.c.b16 %v1784, %v1782
  %v1817 = vpack.c.b16 %v1785, %v1783
  %v1818 = vpack.c.b16 %v1788, %v1786
  %v1819 = vpack.c.b16 %v1789, %v1787
  %v1820 = vpack.c.b16 %v1792, %v1790
  %v1821 = vpack.c.b16 %v1793, %v1791
  %v1822 = vpack.c.b16 %v1796, %v1794
  %v1823 = vpack.c.b16 %v1797, %v1795
  %v1824 = vpack.c.b16 %v1800, %v1798
  %v1825 = vpack.c.b16 %v1801, %v1799
  %v1826 = vpack.c.b16 %v1802, %v1802
  %v1827 = vpack.c.b16 %v1803, %v1803
  %v1851 = vsel %vm123, %v1708, 0
  %v1854 = vsel %vm123, %v1710, 0
  %v1857 = vsel %vm991, %v1826, 0
  %v1860 = vsel %vm991, %v1827, 0
  %1862 = vmatprep.subr.bf16.mxu0 %v1805
  %1863 = vmatpush1.bf16.msra.mxu0 %v1804
  %1864 = vmatprep.subr.bf16.mxu0 %v1807
  %1865 = vmatpush1.bf16.msra.mxu0 %v1806
  %1866 = vmatprep.subr.bf16.mxu0 %v1809
  %1867 = vmatpush1.bf16.msra.mxu0 %v1808
  %1868 = vmatprep.subr.bf16.mxu0 %v1811
  %1869 = vmatpush1.bf16.msra.mxu0 %v1810
  %1870 = vmatprep.subr.bf16.mxu0 %v1813
  %1871 = vmatpush1.bf16.msra.mxu0 %v1812
  %1872 = vmatprep.subr.bf16.mxu0 %v1815
  %1873 = vmatpush1.bf16.msra.mxu0 %v1814
  %1874 = vmatprep.subr.bf16.mxu0 %v1817
  %1875 = vmatpush1.bf16.msra.mxu0 %v1816
  %1876 = vmatprep.subr.bf16.mxu0 %v1819
  %1877 = vmatpush1.bf16.msra.mxu0 %v1818
  %1878 = vmatprep.subr.bf16.mxu0 %v1821
  %1879 = vmatpush1.bf16.msra.mxu0 %v1820
  %1880 = vmatprep.subr.bf16.mxu0 %v1823
  %1881 = vmatpush1.bf16.msra.mxu0 %v1822
  %1882 = vmatprep.subr.bf16.mxu0 %v1825
  %1883 = vmatpush1.bf16.msra.mxu0 %v1824
  %1884 = vmatprep.subr.bf16.mxu0 %v1860
  %1885 = vmatpush1.bf16.msra.mxu0 %v1857
  %1886 = vmatprep.subr.bf16.mxu0 0
  %1887 = vmatpush1.bf16.msra.mxu0 0
  %1888 = vmatprep.subr.bf16.mxu0 0
  %1889 = vmatpush1.bf16.msra.mxu0 0
  %1890 = vmatprep.subr.bf16.mxu0 0
  %1891 = vmatpush1.bf16.msra.mxu0 0
  %1892 = vmatprep.subr.bf16.mxu0 0
  %1893 = vmatpush1.bf16.msra.mxu0 0
  %1894 = vmatprep.mubr.bf16.mxu0 %v1851
  %1895 = vmatmul.mubr.bf16.gmra.mrb[0].mxu0 %v1707
  %v1896 = vpop.f32.mrb[0].mxu0
  %v1897 = vadd.f32 0.0, %v1896
  %v1898 = vpop.f32.mrb[0].mxu0
  %v1899 = vadd.f32 0.0, %v1898
  %v1900 = vpop.f32.mrb[0].mxu0
  %v1901 = vadd.f32 0.0, %v1900
  %v1902 = vpop.f32.mrb[0].mxu0
  %v1903 = vadd.f32 0.0, %v1902
  %1904 = vmatprep.mubr.bf16.mxu0 %v1854
  %1905 = vmatmul.mubr.bf16.gmra.mrb[0].mxu0 %v1709
  %v1906 = vpop.f32.mrb[0].mxu0
  %v1907 = vadd.f32 0.0, %v1906
  %v1908 = vpop.f32.mrb[0].mxu0
  %v1909 = vadd.f32 0.0, %v1908
  %v1910 = vpop.f32.mrb[0].mxu0
  %v1911 = vadd.f32 0.0, %v1910
  %v1912 = vpop.f32.mrb[0].mxu0
  %v1913 = vadd.f32 0.0, %v1912
  %1914 = vdwg.mxu0
  %v1915 = vadd.f32 %v1699, %v1897
  %v1916 = vadd.f32 %v1700, %v1899
  %v1917 = vadd.f32 %v1701, %v1901
  %v1918 = vadd.f32 %v1702, %v1903
  %v1919 = vadd.f32 %v1703, %v1907
  %v1920 = vadd.f32 %v1704, %v1909
  %v1921 = vadd.f32 %v1705, %v1911
  %v1922 = vadd.f32 %v1706, %v1913
  %v1923 = vpack.c.bf16 %v1917, %v1915
  %v1924 = vpack.c.bf16 %v1918, %v1916
  %v1925 = vpack.c.bf16 %v1921, %v1919
  %v1926 = vpack.c.bf16 %v1922, %v1920
  %v1927 = vld [vmem:[%s5] sm:$0xff]
  %v1928 = vld [vmem:[%s5 + $0x8] sm:$0xff]
  %v1929 = vld [vmem:[%s5 + $0x10] sm:$0xff]
  %v1930 = vld [vmem:[%s5 + $0x18] sm:$0xff]
  %v1931 = vld [vmem:[%s5 + $0x20] sm:$0xff]
  %v1932 = vld [vmem:[%s5 + $0x28] sm:$0xff]
  %v1933 = vld [vmem:[%s5 + $0x30] sm:$0xff]
  %v1934 = vld [vmem:[%s5 + $0x38] sm:$0xff]
  %v1935 = vld [vmem:[%s5 + $0x40] sm:$0xff]
  %v1936 = vld [vmem:[%s5 + $0x48] sm:$0xff]
  %v1937 = vld [vmem:[%s5 + $0x50] sm:$0xff]
  %v1938 = vld [vmem:[%s5 + $0x58] sm:$0xff]
  %v1939 = vld [vmem:[%s5 + $0x60] sm:$0xff]
  %v1940 = vld [vmem:[%s5 + $0x68] sm:$0xff]
  %v1941 = vld [vmem:[%s5 + $0x70] sm:$0xff]
  %v1942 = vld [vmem:[%s5 + $0x78] sm:$0xff]
  %v1943 = vld [vmem:[%s5 + $0x80] sm:$0xff]
  %v1944 = vld [vmem:[%s5 + $0x88] sm:$0xff]
  %v1945 = vld [vmem:[%s5 + $0x90] sm:$0xff]
  %v1946 = vld [vmem:[%s5 + $0x98] sm:$0xff]
  %v1947 = vld [vmem:[%s5 + $0xa0] sm:$0xff]
  %v1948 = vld [vmem:[%s5 + $0xa8] sm:$0xff]
  %v1949 = vld [vmem:[%s5 + $0xb0] sm:$0xff]
  %v1950 = vld [vmem:[%s5 + $0xb8] sm:$0xff]
  %v1975 = vunpack.c.l.b16 %v1927
  %v1976 = vunpack.c.h.b16 %v1927
  %v1977 = vunpack.c.l.b16 %v1928
  %v1978 = vunpack.c.h.b16 %v1928
  %v1979 = vunpack.c.l.b16 %v1929
  %v1980 = vunpack.c.h.b16 %v1929
  %v1981 = vunpack.c.l.b16 %v1930
  %v1982 = vunpack.c.h.b16 %v1930
  %v1983 = vunpack.c.l.b16 %v1931
  %v1984 = vunpack.c.h.b16 %v1931
  %v1985 = vunpack.c.l.b16 %v1932
  %v1986 = vunpack.c.h.b16 %v1932
  %v1987 = vunpack.c.l.b16 %v1933
  %v1988 = vunpack.c.h.b16 %v1933
  %v1989 = vunpack.c.l.b16 %v1934
  %v1990 = vunpack.c.h.b16 %v1934
  %v1991 = vunpack.c.l.b16 %v1935
  %v1992 = vunpack.c.h.b16 %v1935
  %v1993 = vunpack.c.l.b16 %v1936
  %v1994 = vunpack.c.h.b16 %v1936
  %v1995 = vunpack.c.l.b16 %v1937
  %v1996 = vunpack.c.h.b16 %v1937
  %v1997 = vunpack.c.l.b16 %v1938
  %v1998 = vunpack.c.h.b16 %v1938
  %v1999 = vunpack.c.l.b16 %v1939
  %v2000 = vunpack.c.h.b16 %v1939
  %v2001 = vunpack.c.l.b16 %v1940
  %v2002 = vunpack.c.h.b16 %v1940
  %v2003 = vunpack.c.l.b16 %v1941
  %v2004 = vunpack.c.h.b16 %v1941
  %v2005 = vunpack.c.l.b16 %v1942
  %v2006 = vunpack.c.h.b16 %v1942
  %v2007 = vunpack.c.l.b16 %v1943
  %v2008 = vunpack.c.h.b16 %v1943
  %v2009 = vunpack.c.l.b16 %v1944
  %v2010 = vunpack.c.h.b16 %v1944
  %v2011 = vunpack.c.l.b16 %v1945
  %v2012 = vunpack.c.h.b16 %v1945
  %v2013 = vunpack.c.l.b16 %v1946
  %v2014 = vunpack.c.h.b16 %v1946
  %v2015 = vunpack.c.l.b16 %v1947
  %v2016 = vunpack.c.h.b16 %v1947
  %v2017 = vunpack.c.l.b16 %v1948
  %v2018 = vunpack.c.h.b16 %v1948
  %v2019 = vunpack.c.l.b16 %v1949
  %v2020 = vunpack.c.h.b16 %v1949
  %v2021 = vunpack.c.l.b16 %v1950
  %v2022 = vunpack.c.h.b16 %v1950
  %v2023 = vpack.c.b16 %v1977, %v1975
  %v2024 = vpack.c.b16 %v1978, %v1976
  %v2025 = vpack.c.b16 %v1981, %v1979
  %v2026 = vpack.c.b16 %v1982, %v1980
  %v2027 = vpack.c.b16 %v1985, %v1983
  %v2028 = vpack.c.b16 %v1986, %v1984
  %v2029 = vpack.c.b16 %v1989, %v1987
  %v2030 = vpack.c.b16 %v1990, %v1988
  %v2031 = vpack.c.b16 %v1993, %v1991
  %v2032 = vpack.c.b16 %v1994, %v1992
  %v2033 = vpack.c.b16 %v1997, %v1995
  %v2034 = vpack.c.b16 %v1998, %v1996
  %v2035 = vpack.c.b16 %v2001, %v1999
  %v2036 = vpack.c.b16 %v2002, %v2000
  %v2037 = vpack.c.b16 %v2005, %v2003
  %v2038 = vpack.c.b16 %v2006, %v2004
  %v2039 = vpack.c.b16 %v2009, %v2007
  %v2040 = vpack.c.b16 %v2010, %v2008
  %v2041 = vpack.c.b16 %v2013, %v2011
  %v2042 = vpack.c.b16 %v2014, %v2012
  %v2043 = vpack.c.b16 %v2017, %v2015
  %v2044 = vpack.c.b16 %v2018, %v2016
  %v2045 = vpack.c.b16 %v2021, %v2019
  %v2046 = vpack.c.b16 %v2022, %v2020
  %vm2071 = vcmask 523264
  %v2073 = vsel %vm2071, %v1924, 0
  %v2076 = vsel %vm2071, %v1926, 0
  %2078 = vmatprep.subr.bf16.mxu0 %v2024
  %2079 = vmatpush1.bf16.msra.mxu0 %v2023
  %2080 = vmatprep.subr.bf16.mxu0 %v2026
  %2081 = vmatpush1.bf16.msra.mxu0 %v2025
  %2082 = vmatprep.subr.bf16.mxu0 %v2028
  %2083 = vmatpush1.bf16.msra.mxu0 %v2027
  %2084 = vmatprep.subr.bf16.mxu0 %v2030
  %2085 = vmatpush1.bf16.msra.mxu0 %v2029
  %2086 = vmatprep.subr.bf16.mxu0 %v2032
  %2087 = vmatpush1.bf16.msra.mxu0 %v2031
  %2088 = vmatprep.subr.bf16.mxu0 %v2034
  %2089 = vmatpush1.bf16.msra.mxu0 %v2033
  %2090 = vmatprep.subr.bf16.mxu0 %v2036
  %2091 = vmatpush1.bf16.msra.mxu0 %v2035
  %2092 = vmatprep.subr.bf16.mxu0 %v2038
  %2093 = vmatpush1.bf16.msra.mxu0 %v2037
  %2094 = vmatprep.subr.bf16.mxu0 %v2040
  %2095 = vmatpush1.bf16.msra.mxu0 %v2039
  %2096 = vmatprep.subr.bf16.mxu0 %v2042
  %2097 = vmatpush1.bf16.msra.mxu0 %v2041
  %2098 = vmatprep.subr.bf16.mxu0 %v2044
  %2099 = vmatpush1.bf16.msra.mxu0 %v2043
  %2100 = vmatprep.subr.bf16.mxu0 %v2046
  %2101 = vmatpush1.bf16.msra.mxu0 %v2045
  %2102 = vmatprep.subr.bf16.mxu0 0
  %2103 = vmatpush1.bf16.msra.mxu0 0
  %2104 = vmatprep.subr.bf16.mxu0 0
  %2105 = vmatpush1.bf16.msra.mxu0 0
  %2106 = vmatprep.subr.bf16.mxu0 0
  %2107 = vmatpush1.bf16.msra.mxu0 0
  %2108 = vmatprep.subr.bf16.mxu0 0
  %2109 = vmatpush1.bf16.msra.mxu0 0
  %2110 = vmatprep.mubr.bf16.mxu0 %v2073
  %2111 = vmatmul.mubr.bf16.gmra.mrb[0].mxu0 %v1923
  %v2112 = vpop.f32.mrb[0].mxu0
  %v2113 = vadd.f32 0.0, %v2112
  %v2114 = vpop.f32.mrb[0].mxu0
  %v2115 = vadd.f32 0.0, %v2114
  %v2116 = vpop.f32.mrb[0].mxu0
  %v2117 = vadd.f32 0.0, %v2116
  %v2118 = vpop.f32.mrb[0].mxu0
  %v2119 = vadd.f32 0.0, %v2118
  %2120 = vmatprep.mubr.bf16.mxu0 %v2076
  %2121 = vmatmul.mubr.bf16.gmra.mrb[0].mxu0 %v1925
  %v2122 = vpop.f32.mrb[0].mxu0
  %v2123 = vadd.f32 0.0, %v2122
  %v2124 = vpop.f32.mrb[0].mxu0
  %v2125 = vadd.f32 0.0, %v2124
  %v2126 = vpop.f32.mrb[0].mxu0
  %v2127 = vadd.f32 0.0, %v2126
  %v2128 = vpop.f32.mrb[0].mxu0
  %v2129 = vadd.f32 0.0, %v2128
  %2130 = vdwg.mxu0
  %v2131 = vpack.c.bf16 %v2117, %v2113
  %v2132 = vpack.c.bf16 %v2119, %v2115
  %v2133 = vpack.c.bf16 %v2127, %v2123
  %v2134 = vpack.c.bf16 %v2129, %v2125
  %2135 = vst [vmem:[#allocation4] sm:$0xff] %v2131
  %vm2136 = vcmask 15360
  %2137 = vst.msk [vmem:[#allocation4 + $0x8] sm:$0xff] %vm2136, %v2132
  %2138 = vst [vmem:[#allocation4 + $0x10] sm:$0xff] %v2133
  %2139 = vst.msk [vmem:[#allocation4 + $0x18] sm:$0xff] %vm2136, %v2134
  %s2140 = scalar_lea.vmem %s5, 192
  %v2141 = vld [vmem:[%s2140] sm:$0xff]
  %v2142 = vld [vmem:[%s2140 + $0x8] sm:$0xff]
  %v2143 = vld [vmem:[%s2140 + $0x10] sm:$0xff]
  %v2144 = vld [vmem:[%s2140 + $0x18] sm:$0xff]
  %v2145 = vld [vmem:[%s2140 + $0x20] sm:$0xff]
  %v2146 = vld [vmem:[%s2140 + $0x28] sm:$0xff]
  %v2147 = vld [vmem:[%s2140 + $0x30] sm:$0xff]
  %v2148 = vld [vmem:[%s2140 + $0x38] sm:$0xff]
  %v2149 = vld [vmem:[%s2140 + $0x40] sm:$0xff]
  %v2150 = vld [vmem:[%s2140 + $0x48] sm:$0xff]
  %v2151 = vld [vmem:[%s2140 + $0x50] sm:$0xff]
  %v2152 = vld [vmem:[%s2140 + $0x58] sm:$0xff]
  %v2153 = vld [vmem:[%s2140 + $0x60] sm:$0xff]
  %v2154 = vld [vmem:[%s2140 + $0x68] sm:$0xff]
  %v2155 = vld [vmem:[%s2140 + $0x70] sm:$0xff]
  %v2156 = vld [vmem:[%s2140 + $0x78] sm:$0xff]
  %v2157 = vld [vmem:[%s2140 + $0x80] sm:$0xff]
  %v2158 = vld [vmem:[%s2140 + $0x88] sm:$0xff]
  %v2159 = vld [vmem:[%s2140 + $0x90] sm:$0xff]
  %v2160 = vld [vmem:[%s2140 + $0x98] sm:$0xff]
  %v2161 = vld [vmem:[%s2140 + $0xa0] sm:$0xff]
  %v2162 = vld [vmem:[%s2140 + $0xa8] sm:$0xff]
  %v2163 = vld [vmem:[%s2140 + $0xb0] sm:$0xff]
  %v2164 = vld [vmem:[%s2140 + $0xb8] sm:$0xff]
  %v2189 = vunpack.c.l.b16 %v2141
  %v2190 = vunpack.c.h.b16 %v2141
  %v2191 = vunpack.c.l.b16 %v2142
  %v2192 = vunpack.c.h.b16 %v2142
  %v2193 = vunpack.c.l.b16 %v2143
  %v2194 = vunpack.c.h.b16 %v2143
  %v2195 = vunpack.c.l.b16 %v2144
  %v2196 = vunpack.c.h.b16 %v2144
  %v2197 = vunpack.c.l.b16 %v2145
  %v2198 = vunpack.c.h.b16 %v2145
  %v2199 = vunpack.c.l.b16 %v2146
  %v2200 = vunpack.c.h.b16 %v2146
  %v2201 = vunpack.c.l.b16 %v2147
  %v2202 = vunpack.c.h.b16 %v2147
  %v2203 = vunpack.c.l.b16 %v2148
  %v2204 = vunpack.c.h.b16 %v2148
  %v2205 = vunpack.c.l.b16 %v2149
  %v2206 = vunpack.c.h.b16 %v2149
  %v2207 = vunpack.c.l.b16 %v2150
  %v2208 = vunpack.c.h.b16 %v2150
  %v2209 = vunpack.c.l.b16 %v2151
  %v2210 = vunpack.c.h.b16 %v2151
  %v2211 = vunpack.c.l.b16 %v2152
  %v2212 = vunpack.c.h.b16 %v2152
  %v2213 = vunpack.c.l.b16 %v2153
  %v2214 = vunpack.c.h.b16 %v2153
  %v2215 = vunpack.c.l.b16 %v2154
  %v2216 = vunpack.c.h.b16 %v2154
  %v2217 = vunpack.c.l.b16 %v2155
  %v2218 = vunpack.c.h.b16 %v2155
  %v2219 = vunpack.c.l.b16 %v2156
  %v2220 = vunpack.c.h.b16 %v2156
  %v2221 = vunpack.c.l.b16 %v2157
  %v2222 = vunpack.c.h.b16 %v2157
  %v2223 = vunpack.c.l.b16 %v2158
  %v2224 = vunpack.c.h.b16 %v2158
  %v2225 = vunpack.c.l.b16 %v2159
  %v2226 = vunpack.c.h.b16 %v2159
  %v2227 = vunpack.c.l.b16 %v2160
  %v2228 = vunpack.c.h.b16 %v2160
  %v2229 = vunpack.c.l.b16 %v2161
  %v2230 = vunpack.c.h.b16 %v2161
  %v2231 = vunpack.c.l.b16 %v2162
  %v2232 = vunpack.c.h.b16 %v2162
  %v2233 = vunpack.c.l.b16 %v2163
  %v2234 = vunpack.c.h.b16 %v2163
  %v2235 = vunpack.c.l.b16 %v2164
  %v2236 = vunpack.c.h.b16 %v2164
  %v2237 = vpack.c.b16 %v2191, %v2189
  %v2238 = vpack.c.b16 %v2192, %v2190
  %v2239 = vpack.c.b16 %v2195, %v2193
  %v2240 = vpack.c.b16 %v2196, %v2194
  %v2241 = vpack.c.b16 %v2199, %v2197
  %v2242 = vpack.c.b16 %v2200, %v2198
  %v2243 = vpack.c.b16 %v2203, %v2201
  %v2244 = vpack.c.b16 %v2204, %v2202
  %v2245 = vpack.c.b16 %v2207, %v2205
  %v2246 = vpack.c.b16 %v2208, %v2206
  %v2247 = vpack.c.b16 %v2211, %v2209
  %v2248 = vpack.c.b16 %v2212, %v2210
  %v2249 = vpack.c.b16 %v2215, %v2213
  %v2250 = vpack.c.b16 %v2216, %v2214
  %v2251 = vpack.c.b16 %v2219, %v2217
  %v2252 = vpack.c.b16 %v2220, %v2218
  %v2253 = vpack.c.b16 %v2223, %v2221
  %v2254 = vpack.c.b16 %v2224, %v2222
  %v2255 = vpack.c.b16 %v2227, %v2225
  %v2256 = vpack.c.b16 %v2228, %v2226
  %v2257 = vpack.c.b16 %v2231, %v2229
  %v2258 = vpack.c.b16 %v2232, %v2230
  %v2259 = vpack.c.b16 %v2235, %v2233
  %v2260 = vpack.c.b16 %v2236, %v2234
  %2285 = vmatprep.subr.bf16.mxu0 %v2238
  %2286 = vmatpush1.bf16.msra.mxu0 %v2237
  %2287 = vmatprep.subr.bf16.mxu0 %v2240
  %2288 = vmatpush1.bf16.msra.mxu0 %v2239
  %2289 = vmatprep.subr.bf16.mxu0 %v2242
  %2290 = vmatpush1.bf16.msra.mxu0 %v2241
  %2291 = vmatprep.subr.bf16.mxu0 %v2244
  %2292 = vmatpush1.bf16.msra.mxu0 %v2243
  %2293 = vmatprep.subr.bf16.mxu0 %v2246
  %2294 = vmatpush1.bf16.msra.mxu0 %v2245
  %2295 = vmatprep.subr.bf16.mxu0 %v2248
  %2296 = vmatpush1.bf16.msra.mxu0 %v2247
  %2297 = vmatprep.subr.bf16.mxu0 %v2250
  %2298 = vmatpush1.bf16.msra.mxu0 %v2249
  %2299 = vmatprep.subr.bf16.mxu0 %v2252
  %2300 = vmatpush1.bf16.msra.mxu0 %v2251
  %2301 = vmatprep.subr.bf16.mxu0 %v2254
  %2302 = vmatpush1.bf16.msra.mxu0 %v2253
  %2303 = vmatprep.subr.bf16.mxu0 %v2256
  %2304 = vmatpush1.bf16.msra.mxu0 %v2255
  %2305 = vmatprep.subr.bf16.mxu0 %v2258
  %2306 = vmatpush1.bf16.msra.mxu0 %v2257
  %2307 = vmatprep.subr.bf16.mxu0 %v2260
  %2308 = vmatpush1.bf16.msra.mxu0 %v2259
  %2309 = vmatprep.subr.bf16.mxu0 0
  %2310 = vmatpush1.bf16.msra.mxu0 0
  %2311 = vmatprep.subr.bf16.mxu0 0
  %2312 = vmatpush1.bf16.msra.mxu0 0
  %2313 = vmatprep.subr.bf16.mxu0 0
  %2314 = vmatpush1.bf16.msra.mxu0 0
  %2315 = vmatprep.subr.bf16.mxu0 0
  %2316 = vmatpush1.bf16.msra.mxu0 0
  %2317 = vmatprep.mubr.bf16.mxu0 %v2073
  %2318 = vmatmul.mubr.bf16.gmra.mrb[0].mxu0 %v1923
  %v2319 = vpop.f32.mrb[0].mxu0
  %v2320 = vadd.f32 0.0, %v2319
  %v2321 = vpop.f32.mrb[0].mxu0
  %v2322 = vadd.f32 0.0, %v2321
  %v2323 = vpop.f32.mrb[0].mxu0
  %v2324 = vadd.f32 0.0, %v2323
  %v2325 = vpop.f32.mrb[0].mxu0
  %v2326 = vadd.f32 0.0, %v2325
  %2327 = vmatprep.mubr.bf16.mxu0 %v2076
  %2328 = vmatmul.mubr.bf16.gmra.mrb[0].mxu0 %v1925
  %v2329 = vpop.f32.mrb[0].mxu0
  %v2330 = vadd.f32 0.0, %v2329
  %v2331 = vpop.f32.mrb[0].mxu0
  %v2332 = vadd.f32 0.0, %v2331
  %v2333 = vpop.f32.mrb[0].mxu0
  %v2334 = vadd.f32 0.0, %v2333
  %v2335 = vpop.f32.mrb[0].mxu0
  %v2336 = vadd.f32 0.0, %v2335
  %2337 = vdwg.mxu0
  %v2338 = vpack.c.bf16 %v2324, %v2320
  %v2339 = vpack.c.bf16 %v2326, %v2322
  %v2340 = vpack.c.bf16 %v2334, %v2330
  %v2341 = vpack.c.bf16 %v2336, %v2332
  %2342 = vst [vmem:[#allocation4 + $0x20] sm:$0xff] %v2338
  %2343 = vst.msk [vmem:[#allocation4 + $0x28] sm:$0xff] %vm2136, %v2339
  %2344 = vst [vmem:[#allocation4 + $0x30] sm:$0xff] %v2340
  %2345 = vst.msk [vmem:[#allocation4 + $0x38] sm:$0xff] %vm2136, %v2341
  %s2346 = scalar_lea.vmem %s5, 384
  %v2347 = vld [vmem:[%s2346] sm:$0xff]
  %v2348 = vld [vmem:[%s2346 + $0x8] sm:$0xff]
  %v2349 = vld [vmem:[%s2346 + $0x10] sm:$0xff]
  %v2350 = vld [vmem:[%s2346 + $0x18] sm:$0xff]
  %v2351 = vld [vmem:[%s2346 + $0x20] sm:$0xff]
  %v2352 = vld [vmem:[%s2346 + $0x28] sm:$0xff]
  %v2353 = vld [vmem:[%s2346 + $0x30] sm:$0xff]
  %v2354 = vld [vmem:[%s2346 + $0x38] sm:$0xff]
  %v2355 = vld [vmem:[%s2346 + $0x40] sm:$0xff]
  %v2356 = vld [vmem:[%s2346 + $0x48] sm:$0xff]
  %v2357 = vld [vmem:[%s2346 + $0x50] sm:$0xff]
  %v2358 = vld [vmem:[%s2346 + $0x58] sm:$0xff]
  %v2359 = vld [vmem:[%s2346 + $0x60] sm:$0xff]
  %v2360 = vld [vmem:[%s2346 + $0x68] sm:$0xff]
  %v2361 = vld [vmem:[%s2346 + $0x70] sm:$0xff]
  %v2362 = vld [vmem:[%s2346 + $0x78] sm:$0xff]
  %v2363 = vld [vmem:[%s2346 + $0x80] sm:$0xff]
  %v2364 = vld [vmem:[%s2346 + $0x88] sm:$0xff]
  %v2365 = vld [vmem:[%s2346 + $0x90] sm:$0xff]
  %v2366 = vld [vmem:[%s2346 + $0x98] sm:$0xff]
  %v2367 = vld [vmem:[%s2346 + $0xa0] sm:$0xff]
  %v2368 = vld [vmem:[%s2346 + $0xa8] sm:$0xff]
  %v2369 = vld [vmem:[%s2346 + $0xb0] sm:$0xff]
  %v2370 = vld [vmem:[%s2346 + $0xb8] sm:$0xff]
  %v2395 = vunpack.c.l.b16 %v2347
  %v2396 = vunpack.c.h.b16 %v2347
  %v2397 = vunpack.c.l.b16 %v2348
  %v2398 = vunpack.c.h.b16 %v2348
  %v2399 = vunpack.c.l.b16 %v2349
  %v2400 = vunpack.c.h.b16 %v2349
  %v2401 = vunpack.c.l.b16 %v2350
  %v2402 = vunpack.c.h.b16 %v2350
  %v2403 = vunpack.c.l.b16 %v2351
  %v2404 = vunpack.c.h.b16 %v2351
  %v2405 = vunpack.c.l.b16 %v2352
  %v2406 = vunpack.c.h.b16 %v2352
  %v2407 = vunpack.c.l.b16 %v2353
  %v2408 = vunpack.c.h.b16 %v2353
  %v2409 = vunpack.c.l.b16 %v2354
  %v2410 = vunpack.c.h.b16 %v2354
  %v2411 = vunpack.c.l.b16 %v2355
  %v2412 = vunpack.c.h.b16 %v2355
  %v2413 = vunpack.c.l.b16 %v2356
  %v2414 = vunpack.c.h.b16 %v2356
  %v2415 = vunpack.c.l.b16 %v2357
  %v2416 = vunpack.c.h.b16 %v2357
  %v2417 = vunpack.c.l.b16 %v2358
  %v2418 = vunpack.c.h.b16 %v2358
  %v2419 = vunpack.c.l.b16 %v2359
  %v2420 = vunpack.c.h.b16 %v2359
  %v2421 = vunpack.c.l.b16 %v2360
  %v2422 = vunpack.c.h.b16 %v2360
  %v2423 = vunpack.c.l.b16 %v2361
  %v2424 = vunpack.c.h.b16 %v2361
  %v2425 = vunpack.c.l.b16 %v2362
  %v2426 = vunpack.c.h.b16 %v2362
  %v2427 = vunpack.c.l.b16 %v2363
  %v2428 = vunpack.c.h.b16 %v2363
  %v2429 = vunpack.c.l.b16 %v2364
  %v2430 = vunpack.c.h.b16 %v2364
  %v2431 = vunpack.c.l.b16 %v2365
  %v2432 = vunpack.c.h.b16 %v2365
  %v2433 = vunpack.c.l.b16 %v2366
  %v2434 = vunpack.c.h.b16 %v2366
  %v2435 = vunpack.c.l.b16 %v2367
  %v2436 = vunpack.c.h.b16 %v2367
  %v2437 = vunpack.c.l.b16 %v2368
  %v2438 = vunpack.c.h.b16 %v2368
  %v2439 = vunpack.c.l.b16 %v2369
  %v2440 = vunpack.c.h.b16 %v2369
  %v2441 = vunpack.c.l.b16 %v2370
  %v2442 = vunpack.c.h.b16 %v2370
  %v2443 = vpack.c.b16 %v2397, %v2395
  %v2444 = vpack.c.b16 %v2398, %v2396
  %v2445 = vpack.c.b16 %v2401, %v2399
  %v2446 = vpack.c.b16 %v2402, %v2400
  %v2447 = vpack.c.b16 %v2405, %v2403
  %v2448 = vpack.c.b16 %v2406, %v2404
  %v2449 = vpack.c.b16 %v2409, %v2407
  %v2450 = vpack.c.b16 %v2410, %v2408
  %v2451 = vpack.c.b16 %v2413, %v2411
  %v2452 = vpack.c.b16 %v2414, %v2412
  %v2453 = vpack.c.b16 %v2417, %v2415
  %v2454 = vpack.c.b16 %v2418, %v2416
  %v2455 = vpack.c.b16 %v2421, %v2419
  %v2456 = vpack.c.b16 %v2422, %v2420
  %v2457 = vpack.c.b16 %v2425, %v2423
  %v2458 = vpack.c.b16 %v2426, %v2424
  %v2459 = vpack.c.b16 %v2429, %v2427
  %v2460 = vpack.c.b16 %v2430, %v2428
  %v2461 = vpack.c.b16 %v2433, %v2431
  %v2462 = vpack.c.b16 %v2434, %v2432
  %v2463 = vpack.c.b16 %v2437, %v2435
  %v2464 = vpack.c.b16 %v2438, %v2436
  %v2465 = vpack.c.b16 %v2441, %v2439
  %v2466 = vpack.c.b16 %v2442, %v2440
  %2491 = vmatprep.subr.bf16.mxu0 %v2444
  %2492 = vmatpush1.bf16.msra.mxu0 %v2443
  %2493 = vmatprep.subr.bf16.mxu0 %v2446
  %2494 = vmatpush1.bf16.msra.mxu0 %v2445
  %2495 = vmatprep.subr.bf16.mxu0 %v2448
  %2496 = vmatpush1.bf16.msra.mxu0 %v2447
  %2497 = vmatprep.subr.bf16.mxu0 %v2450
  %2498 = vmatpush1.bf16.msra.mxu0 %v2449
  %2499 = vmatprep.subr.bf16.mxu0 %v2452
  %2500 = vmatpush1.bf16.msra.mxu0 %v2451
  %2501 = vmatprep.subr.bf16.mxu0 %v2454
  %2502 = vmatpush1.bf16.msra.mxu0 %v2453
  %2503 = vmatprep.subr.bf16.mxu0 %v2456
  %2504 = vmatpush1.bf16.msra.mxu0 %v2455
  %2505 = vmatprep.subr.bf16.mxu0 %v2458
  %2506 = vmatpush1.bf16.msra.mxu0 %v2457
  %2507 = vmatprep.subr.bf16.mxu0 %v2460
  %2508 = vmatpush1.bf16.msra.mxu0 %v2459
  %2509 = vmatprep.subr.bf16.mxu0 %v2462
  %2510 = vmatpush1.bf16.msra.mxu0 %v2461
  %2511 = vmatprep.subr.bf16.mxu0 %v2464
  %2512 = vmatpush1.bf16.msra.mxu0 %v2463
  %2513 = vmatprep.subr.bf16.mxu0 %v2466
  %2514 = vmatpush1.bf16.msra.mxu0 %v2465
  %2515 = vmatprep.subr.bf16.mxu0 0
  %2516 = vmatpush1.bf16.msra.mxu0 0
  %2517 = vmatprep.subr.bf16.mxu0 0
  %2518 = vmatpush1.bf16.msra.mxu0 0
  %2519 = vmatprep.subr.bf16.mxu0 0
  %2520 = vmatpush1.bf16.msra.mxu0 0
  %2521 = vmatprep.subr.bf16.mxu0 0
  %2522 = vmatpush1.bf16.msra.mxu0 0
  %2523 = vmatprep.mubr.bf16.mxu0 %v2073
  %2524 = vmatmul.mubr.bf16.gmra.mrb[0].mxu0 %v1923
  %v2525 = vpop.f32.mrb[0].mxu0
  %v2526 = vadd.f32 0.0, %v2525
  %v2527 = vpop.f32.mrb[0].mxu0
  %v2528 = vadd.f32 0.0, %v2527
  %v2529 = vpop.f32.mrb[0].mxu0
  %v2530 = vadd.f32 0.0, %v2529
  %v2531 = vpop.f32.mrb[0].mxu0
  %v2532 = vadd.f32 0.0, %v2531
  %2533 = vmatprep.mubr.bf16.mxu0 %v2076
  %2534 = vmatmul.mubr.bf16.gmra.mrb[0].mxu0 %v1925
  %v2535 = vpop.f32.mrb[0].mxu0
  %v2536 = vadd.f32 0.0, %v2535
  %v2537 = vpop.f32.mrb[0].mxu0
  %v2538 = vadd.f32 0.0, %v2537
  %v2539 = vpop.f32.mrb[0].mxu0
  %v2540 = vadd.f32 0.0, %v2539
  %v2541 = vpop.f32.mrb[0].mxu0
  %v2542 = vadd.f32 0.0, %v2541
  %2543 = vdwg.mxu0
  %v2544 = vpack.c.bf16 %v2530, %v2526
  %v2545 = vpack.c.bf16 %v2532, %v2528
  %v2546 = vpack.c.bf16 %v2540, %v2536
  %v2547 = vpack.c.bf16 %v2542, %v2538
  %2548 = vst [vmem:[#allocation4 + $0x40] sm:$0xff] %v2544
  %2549 = vst.msk [vmem:[#allocation4 + $0x48] sm:$0xff] %vm2136, %v2545
  %2550 = vst [vmem:[#allocation4 + $0x50] sm:$0xff] %v2546
  %2551 = vst.msk [vmem:[#allocation4 + $0x58] sm:$0xff] %vm2136, %v2547
  %v2552 = vld [vmem:[%s6] sm:$0xf]
  %v2553 = vld [vmem:[%s6 + $0x4] sm:$0xf]
  %v2554 = vld [vmem:[%s6 + $0x8] sm:$0xf]
  %v2555 = vld [vmem:[%s6 + $0xc] sm:$0xf]
  %v2556 = vld [vmem:[%s6 + $0x10] sm:$0xf]
  %v2557 = vld [vmem:[%s6 + $0x14] sm:$0xf]
  %v2558 = vld [vmem:[%s6 + $0x18] sm:$0xf]
  %v2559 = vld [vmem:[%s6 + $0x1c] sm:$0xf]
  %v2560 = vld [vmem:[%s6 + $0x20] sm:$0x1]
  %v2561 = vld [vmem:[#allocation4] sm:$0xff]
  %v2562 = vld [vmem:[#allocation4 + $0x8] sm:$0xff]
  %v2563 = vld [vmem:[#allocation4 + $0x10] sm:$0xff]
  %v2564 = vld [vmem:[#allocation4 + $0x18] sm:$0xff]
  %v2565 = vld [vmem:[#allocation4 + $0x20] sm:$0xff]
  %v2566 = vld [vmem:[#allocation4 + $0x28] sm:$0xff]
  %v2567 = vld [vmem:[#allocation4 + $0x30] sm:$0xff]
  %v2568 = vld [vmem:[#allocation4 + $0x38] sm:$0xff]
  %v2569 = vld [vmem:[#allocation4 + $0x40] sm:$0xff]
  %v2570 = vld [vmem:[#allocation4 + $0x48] sm:$0xff]
  %v2571 = vld [vmem:[#allocation4 + $0x50] sm:$0xff]
  %v2572 = vld [vmem:[#allocation4 + $0x58] sm:$0xff]
  %v2573 = vld [vmem:[%s7] sm:$0x3]
  %v2575 = vlaneseq
  %v2576 = vshrl.u32 %v2575, 7
  %v2577 = vsub.s32 0, %v2576
  %v2578 = vrot.slane %v2573, %v2577
  %v2579 = vlaneseq
  %v2580 = vshrl.u32 %v2579, 7
  %v2581 = vsub.s32 1, %v2580
  %v2582 = vrot.slane %v2573, %v2581
  %v2594 = vunpack.c.l.b16 %v2552
  %v2595 = vunpack.c.l.b16 %v2553
  %v2596 = vunpack.c.l.b16 %v2554
  %v2597 = vunpack.c.l.b16 %v2555
  %v2598 = vunpack.c.l.b16 %v2556
  %v2599 = vunpack.c.l.b16 %v2557
  %v2600 = vunpack.c.l.b16 %v2558
  %v2601 = vunpack.c.l.b16 %v2559
  %v2602 = vunpack.c.l.b16 %v2560
  %v2603 = vpack.c.b16 %v2595, %v2594
  %v2604 = vpack.c.b16 %v2597, %v2596
  %v2605 = vpack.c.b16 %v2599, %v2598
  %v2606 = vpack.c.b16 %v2601, %v2600
  %v2607 = vpack.c.b16 %v2602, %v2602
  %v2609 = vsel %vm627, %v2603, 0
  %v2612 = vsel %vm627, %v2604, 0
  %v2615 = vsel %vm627, %v2605, 0
  %v2618 = vsel %vm627, %v2606, 0
  %v2621 = vsel %vm627, %v2607, 0
  %2623 = vmatprep.subr.bf16.mxu0 %v2562
  %2624 = vmatpush1.bf16.msra.mxu0 %v2561
  %2625 = vmatprep.subr.bf16.mxu0 %v2564
  %2626 = vmatpush1.bf16.msra.mxu0 %v2563
  %2627 = vmatprep.subr.bf16.mxu0 %v2566
  %2628 = vmatpush1.bf16.msra.mxu0 %v2565
  %2629 = vmatprep.subr.bf16.mxu0 %v2568
  %2630 = vmatpush1.bf16.msra.mxu0 %v2567
  %2631 = vmatprep.subr.bf16.mxu0 %v2570
  %2632 = vmatpush1.bf16.msra.mxu0 %v2569
  %2633 = vmatprep.subr.bf16.mxu0 %v2572
  %2634 = vmatpush1.bf16.msra.mxu0 %v2571
  %2635 = vmatprep.subr.bf16.mxu0 0
  %2636 = vmatpush1.bf16.msra.mxu0 0
  %2637 = vmatprep.subr.bf16.mxu0 0
  %2638 = vmatpush1.bf16.msra.mxu0 0
  %2639 = vmatprep.subr.bf16.mxu0 0
  %2640 = vmatpush1.bf16.msra.mxu0 0
  %2641 = vmatprep.subr.bf16.mxu0 0
  %2642 = vmatpush1.bf16.msra.mxu0 0
  %2643 = vmatprep.subr.bf16.mxu0 0
  %2644 = vmatpush1.bf16.msra.mxu0 0
  %2645 = vmatprep.subr.bf16.mxu0 0
  %2646 = vmatpush1.bf16.msra.mxu0 0
  %2647 = vmatprep.subr.bf16.mxu0 0
  %2648 = vmatpush1.bf16.msra.mxu0 0
  %2649 = vmatprep.subr.bf16.mxu0 0
  %2650 = vmatpush1.bf16.msra.mxu0 0
  %2651 = vmatprep.subr.bf16.mxu0 0
  %2652 = vmatpush1.bf16.msra.mxu0 0
  %2653 = vmatprep.subr.bf16.mxu0 0
  %2654 = vmatpush1.bf16.msra.mxu0 0
  %2655 = vmatprep.mubr.bf16.mxu0 0
  %2656 = vmatmul.mubr.bf16.gmra.mrb[0].mxu0 %v2609
  %v2657 = vpop.f32.mrb[0].mxu0
  %v2658 = vadd.f32 %v2578, %v2657
  %v2659 = vpop.f32.mrb[0].mxu0
  %v2660 = vadd.f32 %v2582, %v2659
  %v2661 = vpop.f32.mrb[0].mxu0
  %v2662 = vadd.f32 %v2578, %v2661
  %v2663 = vpop.f32.mrb[0].mxu0
  %v2664 = vadd.f32 %v2582, %v2663
  %2665 = vmatprep.mubr.bf16.mxu0 0
  %2666 = vmatmul.mubr.bf16.gmra.mrb[0].mxu0 %v2612
  %v2667 = vpop.f32.mrb[0].mxu0
  %v2668 = vadd.f32 %v2578, %v2667
  %v2669 = vpop.f32.mrb[0].mxu0
  %v2670 = vadd.f32 %v2582, %v2669
  %v2671 = vpop.f32.mrb[0].mxu0
  %v2672 = vadd.f32 %v2578, %v2671
  %v2673 = vpop.f32.mrb[0].mxu0
  %v2674 = vadd.f32 %v2582, %v2673
  %2675 = vmatprep.mubr.bf16.mxu0 0
  %2676 = vmatmul.mubr.bf16.gmra.mrb[0].mxu0 %v2615
  %v2677 = vpop.f32.mrb[0].mxu0
  %v2678 = vadd.f32 %v2578, %v2677
  %v2679 = vpop.f32.mrb[0].mxu0
  %v2680 = vadd.f32 %v2582, %v2679
  %v2681 = vpop.f32.mrb[0].mxu0
  %v2682 = vadd.f32 %v2578, %v2681
  %v2683 = vpop.f32.mrb[0].mxu0
  %v2684 = vadd.f32 %v2582, %v2683
  %2685 = vmatprep.mubr.bf16.mxu0 0
  %2686 = vmatmul.mubr.bf16.gmra.mrb[0].mxu0 %v2618
  %v2687 = vpop.f32.mrb[0].mxu0
  %v2688 = vadd.f32 %v2578, %v2687
  %v2689 = vpop.f32.mrb[0].mxu0
  %v2690 = vadd.f32 %v2582, %v2689
  %v2691 = vpop.f32.mrb[0].mxu0
  %v2692 = vadd.f32 %v2578, %v2691
  %v2693 = vpop.f32.mrb[0].mxu0
  %v2694 = vadd.f32 %v2582, %v2693
  %2695 = vmatprep.mubr.bf16.mxu0 0
  %2696 = vmatmul.mubr.bf16.gmra.mrb[0].mxu0 %v2621
  %v2697 = vpop.f32.mrb[0].mxu0
  %v2698 = vadd.f32 %v2578, %v2697
  %v2699 = vpop.f32.mrb[0].mxu0
  %v2700 = vadd.f32 %v2582, %v2699
  %v2701 = vpop.f32.mrb[0].mxu0
  %v2702 = vpop.f32.mrb[0].mxu0
  %2703 = vdwg.mxu0
  %2704 = vst [vmem:[%s8] sm:$0xff] %v2658
  %2705 = vst.msk [vmem:[%s8 + $0x8] sm:$0xff] %vm2136, %v2660
  %2706 = vst [vmem:[%s8 + $0x10] sm:$0xff] %v2662
  %2707 = vst.msk [vmem:[%s8 + $0x18] sm:$0xff] %vm2136, %v2664
  %2708 = vst [vmem:[%s8 + $0x20] sm:$0xff] %v2668
  %2709 = vst.msk [vmem:[%s8 + $0x28] sm:$0xff] %vm2136, %v2670
  %2710 = vst [vmem:[%s8 + $0x30] sm:$0xff] %v2672
  %2711 = vst.msk [vmem:[%s8 + $0x38] sm:$0xff] %vm2136, %v2674
  %2712 = vst [vmem:[%s8 + $0x40] sm:$0xff] %v2678
  %2713 = vst.msk [vmem:[%s8 + $0x48] sm:$0xff] %vm2136, %v2680
  %2714 = vst [vmem:[%s8 + $0x50] sm:$0xff] %v2682
  %2715 = vst.msk [vmem:[%s8 + $0x58] sm:$0xff] %vm2136, %v2684
  %2716 = vst [vmem:[%s8 + $0x60] sm:$0xff] %v2688
  %2717 = vst.msk [vmem:[%s8 + $0x68] sm:$0xff] %vm2136, %v2690
  %2718 = vst [vmem:[%s8 + $0x70] sm:$0xff] %v2692
  %2719 = vst.msk [vmem:[%s8 + $0x78] sm:$0xff] %vm2136, %v2694
  %2720 = vst [vmem:[%s8 + $0x80] sm:$0x1] %v2698
  %vm2721 = vcmask 8192
  %2722 = vst.msk [vmem:[%s8 + $0x88] sm:$0x1] %vm2721, %v2700
  %s2723 = scalar_lea.vmem %s0, 8
  %v2724 = vld [vmem:[%s2723] sm:$0xf]
  %v2725 = vld [vmem:[%s2723 + $0x4] sm:$0xf]
  %v2726 = vld [vmem:[%s1] sm:$0xff]
  %v2727 = vld [vmem:[%s1 + $0x8] sm:$0xff]
  %v2728 = vld [vmem:[%s1 + $0x10] sm:$0xff]
  %v2729 = vld [vmem:[%s1 + $0x18] sm:$0xff]
  %v2730 = vld [vmem:[%s1 + $0x20] sm:$0xff]
  %v2731 = vld [vmem:[%s1 + $0x28] sm:$0xff]
  %v2734 = vunpack.c.l.b16 %v2724
  %v2735 = vunpack.c.l.b16 %v2725
  %v2736 = vpack.c.b16 %v2735, %v2734
  %v2743 = vunpack.c.l.b16 %v2726
  %v2744 = vunpack.c.h.b16 %v2726
  %v2745 = vunpack.c.l.b16 %v2727
  %v2746 = vunpack.c.h.b16 %v2727
  %v2747 = vunpack.c.l.b16 %v2728
  %v2748 = vunpack.c.h.b16 %v2728
  %v2749 = vunpack.c.l.b16 %v2729
  %v2750 = vunpack.c.h.b16 %v2729
  %v2751 = vunpack.c.l.b16 %v2730
  %v2752 = vunpack.c.h.b16 %v2730
  %v2753 = vunpack.c.l.b16 %v2731
  %v2754 = vunpack.c.h.b16 %v2731
  %v2755 = vpack.c.b16 %v2745, %v2743
  %v2756 = vpack.c.b16 %v2746, %v2744
  %v2757 = vpack.c.b16 %v2749, %v2747
  %v2758 = vpack.c.b16 %v2750, %v2748
  %v2759 = vpack.c.b16 %v2753, %v2751
  %v2760 = vpack.c.b16 %v2754, %v2752
  %v2768 = vsel %vm73, %v2736, 0
  %2770 = vmatprep.subr.bf16.mxu0 %v2756
  %2771 = vmatpush1.bf16.msra.mxu0 %v2755
  %2772 = vmatprep.subr.bf16.mxu0 %v2758
  %2773 = vmatpush1.bf16.msra.mxu0 %v2757
  %2774 = vmatprep.subr.bf16.mxu0 %v2760
  %2775 = vmatpush1.bf16.msra.mxu0 %v2759
  %2776 = vmatprep.subr.bf16.mxu0 0
  %2777 = vmatpush1.bf16.msra.mxu0 0
  %2778 = vmatprep.subr.bf16.mxu0 0
  %2779 = vmatpush1.bf16.msra.mxu0 0
  %2780 = vmatprep.subr.bf16.mxu0 0
  %2781 = vmatpush1.bf16.msra.mxu0 0
  %2782 = vmatprep.subr.bf16.mxu0 0
  %2783 = vmatpush1.bf16.msra.mxu0 0
  %2784 = vmatprep.subr.bf16.mxu0 0
  %2785 = vmatpush1.bf16.msra.mxu0 0
  %2786 = vmatprep.subr.bf16.mxu0 0
  %2787 = vmatpush1.bf16.msra.mxu0 0
  %2788 = vmatprep.subr.bf16.mxu0 0
  %2789 = vmatpush1.bf16.msra.mxu0 0
  %2790 = vmatprep.subr.bf16.mxu0 0
  %2791 = vmatpush1.bf16.msra.mxu0 0
  %2792 = vmatprep.subr.bf16.mxu0 0
  %2793 = vmatpush1.bf16.msra.mxu0 0
  %2794 = vmatprep.subr.bf16.mxu0 0
  %2795 = vmatpush1.bf16.msra.mxu0 0
  %2796 = vmatprep.subr.bf16.mxu0 0
  %2797 = vmatpush1.bf16.msra.mxu0 0
  %2798 = vmatprep.subr.bf16.mxu0 0
  %2799 = vmatpush1.bf16.msra.mxu0 0
  %2800 = vmatprep.subr.bf16.mxu0 0
  %2801 = vmatpush1.bf16.msra.mxu0 0
  %2802 = vmatprep.mubr.bf16.mxu0 0
  %2803 = vmatmul.mubr.bf16.gmra.mrb[0].mxu0 %v2768
  %v2804 = vpop.f32.mrb[0].mxu0
  %v2805 = vadd.f32 0.0, %v2804
  %v2806 = vpop.f32.mrb[0].mxu0
  %v2807 = vadd.f32 0.0, %v2806
  %v2808 = vpop.f32.mrb[0].mxu0
  %v2809 = vadd.f32 0.0, %v2808
  %v2810 = vpop.f32.mrb[0].mxu0
  %v2811 = vadd.f32 0.0, %v2810
  %2812 = vdwg.mxu0
  %v2813 = vpack.c.bf16 %v2809, %v2805
  %v2814 = vpack.c.bf16 %v2811, %v2807
  %s2815 = scalar_lea.vmem [#allocation2], 96
  %2816 = vst [vmem:[%s2815] sm:$0xff] %v2813
  %2817 = vst.msk [vmem:[%s2815 + $0x8] sm:$0xff] %vm123, %v2814
  %v2818 = vld [vmem:[%s125] sm:$0xff]
  %v2819 = vld [vmem:[%s125 + $0x8] sm:$0xff]
  %v2820 = vld [vmem:[%s125 + $0x10] sm:$0xff]
  %v2821 = vld [vmem:[%s125 + $0x18] sm:$0xff]
  %v2822 = vld [vmem:[%s125 + $0x20] sm:$0xff]
  %v2823 = vld [vmem:[%s125 + $0x28] sm:$0xff]
  %v2830 = vunpack.c.l.b16 %v2818
  %v2831 = vunpack.c.h.b16 %v2818
  %v2832 = vunpack.c.l.b16 %v2819
  %v2833 = vunpack.c.h.b16 %v2819
  %v2834 = vunpack.c.l.b16 %v2820
  %v2835 = vunpack.c.h.b16 %v2820
  %v2836 = vunpack.c.l.b16 %v2821
  %v2837 = vunpack.c.h.b16 %v2821
  %v2838 = vunpack.c.l.b16 %v2822
  %v2839 = vunpack.c.h.b16 %v2822
  %v2840 = vunpack.c.l.b16 %v2823
  %v2841 = vunpack.c.h.b16 %v2823
  %v2842 = vpack.c.b16 %v2832, %v2830
  %v2843 = vpack.c.b16 %v2833, %v2831
  %v2844 = vpack.c.b16 %v2836, %v2834
  %v2845 = vpack.c.b16 %v2837, %v2835
  %v2846 = vpack.c.b16 %v2840, %v2838
  %v2847 = vpack.c.b16 %v2841, %v2839
  %2854 = vmatprep.subr.bf16.mxu0 %v2843
  %2855 = vmatpush1.bf16.msra.mxu0 %v2842
  %2856 = vmatprep.subr.bf16.mxu0 %v2845
  %2857 = vmatpush1.bf16.msra.mxu0 %v2844
  %2858 = vmatprep.subr.bf16.mxu0 %v2847
  %2859 = vmatpush1.bf16.msra.mxu0 %v2846
  %2860 = vmatprep.subr.bf16.mxu0 0
  %2861 = vmatpush1.bf16.msra.mxu0 0
  %2862 = vmatprep.subr.bf16.mxu0 0
  %2863 = vmatpush1.bf16.msra.mxu0 0
  %2864 = vmatprep.subr.bf16.mxu0 0
  %2865 = vmatpush1.bf16.msra.mxu0 0
  %2866 = vmatprep.subr.bf16.mxu0 0
  %2867 = vmatpush1.bf16.msra.mxu0 0
  %2868 = vmatprep.subr.bf16.mxu0 0
  %2869 = vmatpush1.bf16.msra.mxu0 0
  %2870 = vmatprep.subr.bf16.mxu0 0
  %2871 = vmatpush1.bf16.msra.mxu0 0
  %2872 = vmatprep.subr.bf16.mxu0 0
  %2873 = vmatpush1.bf16.msra.mxu0 0
  %2874 = vmatprep.subr.bf16.mxu0 0
  %2875 = vmatpush1.bf16.msra.mxu0 0
  %2876 = vmatprep.subr.bf16.mxu0 0
  %2877 = vmatpush1.bf16.msra.mxu0 0
  %2878 = vmatprep.subr.bf16.mxu0 0
  %2879 = vmatpush1.bf16.msra.mxu0 0
  %2880 = vmatprep.subr.bf16.mxu0 0
  %2881 = vmatpush1.bf16.msra.mxu0 0
  %2882 = vmatprep.subr.bf16.mxu0 0
  %2883 = vmatpush1.bf16.msra.mxu0 0
  %2884 = vmatprep.subr.bf16.mxu0 0
  %2885 = vmatpush1.bf16.msra.mxu0 0
  %2886 = vmatprep.mubr.bf16.mxu0 0
  %2887 = vmatmul.mubr.bf16.gmra.mrb[0].mxu0 %v2768
  %v2888 = vpop.f32.mrb[0].mxu0
  %v2889 = vadd.f32 0.0, %v2888
  %v2890 = vpop.f32.mrb[0].mxu0
  %v2891 = vadd.f32 0.0, %v2890
  %v2892 = vpop.f32.mrb[0].mxu0
  %v2893 = vadd.f32 0.0, %v2892
  %v2894 = vpop.f32.mrb[0].mxu0
  %v2895 = vadd.f32 0.0, %v2894
  %2896 = vdwg.mxu0
  %v2897 = vpack.c.bf16 %v2893, %v2889
  %v2898 = vpack.c.bf16 %v2895, %v2891
  %2899 = vst [vmem:[%s2815 + $0x10] sm:$0xff] %v2897
  %2900 = vst.msk [vmem:[%s2815 + $0x18] sm:$0xff] %vm123, %v2898
  %v2901 = vld [vmem:[%s209] sm:$0xff]
  %v2902 = vld [vmem:[%s209 + $0x8] sm:$0xff]
  %v2903 = vld [vmem:[%s209 + $0x10] sm:$0xff]
  %v2904 = vld [vmem:[%s209 + $0x18] sm:$0xff]
  %v2905 = vld [vmem:[%s209 + $0x20] sm:$0xff]
  %v2906 = vld [vmem:[%s209 + $0x28] sm:$0xff]
  %v2913 = vunpack.c.l.b16 %v2901
  %v2914 = vunpack.c.h.b16 %v2901
  %v2915 = vunpack.c.l.b16 %v2902
  %v2916 = vunpack.c.h.b16 %v2902
  %v2917 = vunpack.c.l.b16 %v2903
  %v2918 = vunpack.c.h.b16 %v2903
  %v2919 = vunpack.c.l.b16 %v2904
  %v2920 = vunpack.c.h.b16 %v2904
  %v2921 = vunpack.c.l.b16 %v2905
  %v2922 = vunpack.c.h.b16 %v2905
  %v2923 = vunpack.c.l.b16 %v2906
  %v2924 = vunpack.c.h.b16 %v2906
  %v2925 = vpack.c.b16 %v2915, %v2913
  %v2926 = vpack.c.b16 %v2916, %v2914
  %v2927 = vpack.c.b16 %v2919, %v2917
  %v2928 = vpack.c.b16 %v2920, %v2918
  %v2929 = vpack.c.b16 %v2923, %v2921
  %v2930 = vpack.c.b16 %v2924, %v2922
  %2937 = vmatprep.subr.bf16.mxu0 %v2926
  %2938 = vmatpush1.bf16.msra.mxu0 %v2925
  %2939 = vmatprep.subr.bf16.mxu0 %v2928
  %2940 = vmatpush1.bf16.msra.mxu0 %v2927
  %2941 = vmatprep.subr.bf16.mxu0 %v2930
  %2942 = vmatpush1.bf16.msra.mxu0 %v2929
  %2943 = vmatprep.subr.bf16.mxu0 0
  %2944 = vmatpush1.bf16.msra.mxu0 0
  %2945 = vmatprep.subr.bf16.mxu0 0
  %2946 = vmatpush1.bf16.msra.mxu0 0
  %2947 = vmatprep.subr.bf16.mxu0 0
  %2948 = vmatpush1.bf16.msra.mxu0 0
  %2949 = vmatprep.subr.bf16.mxu0 0
  %2950 = vmatpush1.bf16.msra.mxu0 0
  %2951 = vmatprep.subr.bf16.mxu0 0
  %2952 = vmatpush1.bf16.msra.mxu0 0
  %2953 = vmatprep.subr.bf16.mxu0 0
  %2954 = vmatpush1.bf16.msra.mxu0 0
  %2955 = vmatprep.subr.bf16.mxu0 0
  %2956 = vmatpush1.bf16.msra.mxu0 0
  %2957 = vmatprep.subr.bf16.mxu0 0
  %2958 = vmatpush1.bf16.msra.mxu0 0
  %2959 = vmatprep.subr.bf16.mxu0 0
  %2960 = vmatpush1.bf16.msra.mxu0 0
  %2961 = vmatprep.subr.bf16.mxu0 0
  %2962 = vmatpush1.bf16.msra.mxu0 0
  %2963 = vmatprep.subr.bf16.mxu0 0
  %2964 = vmatpush1.bf16.msra.mxu0 0
  %2965 = vmatprep.subr.bf16.mxu0 0
  %2966 = vmatpush1.bf16.msra.mxu0 0
  %2967 = vmatprep.subr.bf16.mxu0 0
  %2968 = vmatpush1.bf16.msra.mxu0 0
  %2969 = vmatprep.mubr.bf16.mxu0 0
  %2970 = vmatmul.mubr.bf16.gmra.mrb[0].mxu0 %v2768
  %v2971 = vpop.f32.mrb[0].mxu0
  %v2972 = vadd.f32 0.0, %v2971
  %v2973 = vpop.f32.mrb[0].mxu0
  %v2974 = vadd.f32 0.0, %v2973
  %v2975 = vpop.f32.mrb[0].mxu0
  %v2976 = vadd.f32 0.0, %v2975
  %v2977 = vpop.f32.mrb[0].mxu0
  %v2978 = vadd.f32 0.0, %v2977
  %2979 = vdwg.mxu0
  %v2980 = vpack.c.bf16 %v2976, %v2972
  %v2981 = vpack.c.bf16 %v2978, %v2974
  %2982 = vst [vmem:[%s2815 + $0x20] sm:$0xff] %v2980
  %2983 = vst.msk [vmem:[%s2815 + $0x28] sm:$0xff] %vm123, %v2981
  %v2984 = vld [vmem:[%s293] sm:$0xff]
  %v2985 = vld [vmem:[%s293 + $0x8] sm:$0xff]
  %v2986 = vld [vmem:[%s293 + $0x10] sm:$0xff]
  %v2987 = vld [vmem:[%s293 + $0x18] sm:$0xff]
  %v2988 = vld [vmem:[%s293 + $0x20] sm:$0xff]
  %v2989 = vld [vmem:[%s293 + $0x28] sm:$0xff]
  %v2996 = vunpack.c.l.b16 %v2984
  %v2997 = vunpack.c.h.b16 %v2984
  %v2998 = vunpack.c.l.b16 %v2985
  %v2999 = vunpack.c.h.b16 %v2985
  %v3000 = vunpack.c.l.b16 %v2986
  %v3001 = vunpack.c.h.b16 %v2986
  %v3002 = vunpack.c.l.b16 %v2987
  %v3003 = vunpack.c.h.b16 %v2987
  %v3004 = vunpack.c.l.b16 %v2988
  %v3005 = vunpack.c.h.b16 %v2988
  %v3006 = vunpack.c.l.b16 %v2989
  %v3007 = vunpack.c.h.b16 %v2989
  %v3008 = vpack.c.b16 %v2998, %v2996
  %v3009 = vpack.c.b16 %v2999, %v2997
  %v3010 = vpack.c.b16 %v3002, %v3000
  %v3011 = vpack.c.b16 %v3003, %v3001
  %v3012 = vpack.c.b16 %v3006, %v3004
  %v3013 = vpack.c.b16 %v3007, %v3005
  %3020 = vmatprep.subr.bf16.mxu0 %v3009
  %3021 = vmatpush1.bf16.msra.mxu0 %v3008
  %3022 = vmatprep.subr.bf16.mxu0 %v3011
  %3023 = vmatpush1.bf16.msra.mxu0 %v3010
  %3024 = vmatprep.subr.bf16.mxu0 %v3013
  %3025 = vmatpush1.bf16.msra.mxu0 %v3012
  %3026 = vmatprep.subr.bf16.mxu0 0
  %3027 = vmatpush1.bf16.msra.mxu0 0
  %3028 = vmatprep.subr.bf16.mxu0 0
  %3029 = vmatpush1.bf16.msra.mxu0 0
  %3030 = vmatprep.subr.bf16.mxu0 0
  %3031 = vmatpush1.bf16.msra.mxu0 0
  %3032 = vmatprep.subr.bf16.mxu0 0
  %3033 = vmatpush1.bf16.msra.mxu0 0
  %3034 = vmatprep.subr.bf16.mxu0 0
  %3035 = vmatpush1.bf16.msra.mxu0 0
  %3036 = vmatprep.subr.bf16.mxu0 0
  %3037 = vmatpush1.bf16.msra.mxu0 0
  %3038 = vmatprep.subr.bf16.mxu0 0
  %3039 = vmatpush1.bf16.msra.mxu0 0
  %3040 = vmatprep.subr.bf16.mxu0 0
  %3041 = vmatpush1.bf16.msra.mxu0 0
  %3042 = vmatprep.subr.bf16.mxu0 0
  %3043 = vmatpush1.bf16.msra.mxu0 0
  %3044 = vmatprep.subr.bf16.mxu0 0
  %3045 = vmatpush1.bf16.msra.mxu0 0
  %3046 = vmatprep.subr.bf16.mxu0 0
  %3047 = vmatpush1.bf16.msra.mxu0 0
  %3048 = vmatprep.subr.bf16.mxu0 0
  %3049 = vmatpush1.bf16.msra.mxu0 0
  %3050 = vmatprep.subr.bf16.mxu0 0
  %3051 = vmatpush1.bf16.msra.mxu0 0
  %3052 = vmatprep.mubr.bf16.mxu0 0
  %3053 = vmatmul.mubr.bf16.gmra.mrb[0].mxu0 %v2768
  %v3054 = vpop.f32.mrb[0].mxu0
  %v3055 = vadd.f32 0.0, %v3054
  %v3056 = vpop.f32.mrb[0].mxu0
  %v3057 = vadd.f32 0.0, %v3056
  %v3058 = vpop.f32.mrb[0].mxu0
  %v3059 = vadd.f32 0.0, %v3058
  %v3060 = vpop.f32.mrb[0].mxu0
  %v3061 = vadd.f32 0.0, %v3060
  %3062 = vdwg.mxu0
  %v3063 = vpack.c.bf16 %v3059, %v3055
  %v3064 = vpack.c.bf16 %v3061, %v3057
  %3065 = vst [vmem:[%s2815 + $0x30] sm:$0xff] %v3063
  %3066 = vst.msk [vmem:[%s2815 + $0x38] sm:$0xff] %vm123, %v3064
  %v3067 = vld [vmem:[%s377] sm:$0xff]
  %v3068 = vld [vmem:[%s377 + $0x8] sm:$0xff]
  %v3069 = vld [vmem:[%s377 + $0x10] sm:$0xff]
  %v3070 = vld [vmem:[%s377 + $0x18] sm:$0xff]
  %v3071 = vld [vmem:[%s377 + $0x20] sm:$0xff]
  %v3072 = vld [vmem:[%s377 + $0x28] sm:$0xff]
  %v3079 = vunpack.c.l.b16 %v3067
  %v3080 = vunpack.c.h.b16 %v3067
  %v3081 = vunpack.c.l.b16 %v3068
  %v3082 = vunpack.c.h.b16 %v3068
  %v3083 = vunpack.c.l.b16 %v3069
  %v3084 = vunpack.c.h.b16 %v3069
  %v3085 = vunpack.c.l.b16 %v3070
  %v3086 = vunpack.c.h.b16 %v3070
  %v3087 = vunpack.c.l.b16 %v3071
  %v3088 = vunpack.c.h.b16 %v3071
  %v3089 = vunpack.c.l.b16 %v3072
  %v3090 = vunpack.c.h.b16 %v3072
  %v3091 = vpack.c.b16 %v3081, %v3079
  %v3092 = vpack.c.b16 %v3082, %v3080
  %v3093 = vpack.c.b16 %v3085, %v3083
  %v3094 = vpack.c.b16 %v3086, %v3084
  %v3095 = vpack.c.b16 %v3089, %v3087
  %v3096 = vpack.c.b16 %v3090, %v3088
  %3103 = vmatprep.subr.bf16.mxu0 %v3092
  %3104 = vmatpush1.bf16.msra.mxu0 %v3091
  %3105 = vmatprep.subr.bf16.mxu0 %v3094
  %3106 = vmatpush1.bf16.msra.mxu0 %v3093
  %3107 = vmatprep.subr.bf16.mxu0 %v3096
  %3108 = vmatpush1.bf16.msra.mxu0 %v3095
  %3109 = vmatprep.subr.bf16.mxu0 0
  %3110 = vmatpush1.bf16.msra.mxu0 0
  %3111 = vmatprep.subr.bf16.mxu0 0
  %3112 = vmatpush1.bf16.msra.mxu0 0
  %3113 = vmatprep.subr.bf16.mxu0 0
  %3114 = vmatpush1.bf16.msra.mxu0 0
  %3115 = vmatprep.subr.bf16.mxu0 0
  %3116 = vmatpush1.bf16.msra.mxu0 0
  %3117 = vmatprep.subr.bf16.mxu0 0
  %3118 = vmatpush1.bf16.msra.mxu0 0
  %3119 = vmatprep.subr.bf16.mxu0 0
  %3120 = vmatpush1.bf16.msra.mxu0 0
  %3121 = vmatprep.subr.bf16.mxu0 0
  %3122 = vmatpush1.bf16.msra.mxu0 0
  %3123 = vmatprep.subr.bf16.mxu0 0
  %3124 = vmatpush1.bf16.msra.mxu0 0
  %3125 = vmatprep.subr.bf16.mxu0 0
  %3126 = vmatpush1.bf16.msra.mxu0 0
  %3127 = vmatprep.subr.bf16.mxu0 0
  %3128 = vmatpush1.bf16.msra.mxu0 0
  %3129 = vmatprep.subr.bf16.mxu0 0
  %3130 = vmatpush1.bf16.msra.mxu0 0
  %3131 = vmatprep.subr.bf16.mxu0 0
  %3132 = vmatpush1.bf16.msra.mxu0 0
  %3133 = vmatprep.subr.bf16.mxu0 0
  %3134 = vmatpush1.bf16.msra.mxu0 0
  %3135 = vmatprep.mubr.bf16.mxu0 0
  %3136 = vmatmul.mubr.bf16.gmra.mrb[0].mxu0 %v2768
  %v3137 = vpop.f32.mrb[0].mxu0
  %v3138 = vadd.f32 0.0, %v3137
  %v3139 = vpop.f32.mrb[0].mxu0
  %v3140 = vadd.f32 0.0, %v3139
  %v3141 = vpop.f32.mrb[0].mxu0
  %v3142 = vadd.f32 0.0, %v3141
  %v3143 = vpop.f32.mrb[0].mxu0
  %v3144 = vadd.f32 0.0, %v3143
  %3145 = vdwg.mxu0
  %v3146 = vpack.c.bf16 %v3142, %v3138
  %v3147 = vpack.c.bf16 %v3144, %v3140
  %3148 = vst [vmem:[%s2815 + $0x40] sm:$0xff] %v3146
  %3149 = vst.msk [vmem:[%s2815 + $0x48] sm:$0xff] %vm123, %v3147
  %v3150 = vld [vmem:[%s461] sm:$0xff]
  %v3151 = vld [vmem:[%s461 + $0x8] sm:$0xff]
  %v3152 = vld [vmem:[%s461 + $0x10] sm:$0xff]
  %v3153 = vld [vmem:[%s461 + $0x18] sm:$0xff]
  %v3154 = vld [vmem:[%s461 + $0x20] sm:$0xff]
  %v3155 = vld [vmem:[%s461 + $0x28] sm:$0xff]
  %v3162 = vunpack.c.l.b16 %v3150
  %v3163 = vunpack.c.h.b16 %v3150
  %v3164 = vunpack.c.l.b16 %v3151
  %v3165 = vunpack.c.h.b16 %v3151
  %v3166 = vunpack.c.l.b16 %v3152
  %v3167 = vunpack.c.h.b16 %v3152
  %v3168 = vunpack.c.l.b16 %v3153
  %v3169 = vunpack.c.h.b16 %v3153
  %v3170 = vunpack.c.l.b16 %v3154
  %v3171 = vunpack.c.h.b16 %v3154
  %v3172 = vunpack.c.l.b16 %v3155
  %v3173 = vunpack.c.h.b16 %v3155
  %v3174 = vpack.c.b16 %v3164, %v3162
  %v3175 = vpack.c.b16 %v3165, %v3163
  %v3176 = vpack.c.b16 %v3168, %v3166
  %v3177 = vpack.c.b16 %v3169, %v3167
  %v3178 = vpack.c.b16 %v3172, %v3170
  %v3179 = vpack.c.b16 %v3173, %v3171
  %3186 = vmatprep.subr.bf16.mxu0 %v3175
  %3187 = vmatpush1.bf16.msra.mxu0 %v3174
  %3188 = vmatprep.subr.bf16.mxu0 %v3177
  %3189 = vmatpush1.bf16.msra.mxu0 %v3176
  %3190 = vmatprep.subr.bf16.mxu0 %v3179
  %3191 = vmatpush1.bf16.msra.mxu0 %v3178
  %3192 = vmatprep.subr.bf16.mxu0 0
  %3193 = vmatpush1.bf16.msra.mxu0 0
  %3194 = vmatprep.subr.bf16.mxu0 0
  %3195 = vmatpush1.bf16.msra.mxu0 0
  %3196 = vmatprep.subr.bf16.mxu0 0
  %3197 = vmatpush1.bf16.msra.mxu0 0
  %3198 = vmatprep.subr.bf16.mxu0 0
  %3199 = vmatpush1.bf16.msra.mxu0 0
  %3200 = vmatprep.subr.bf16.mxu0 0
  %3201 = vmatpush1.bf16.msra.mxu0 0
  %3202 = vmatprep.subr.bf16.mxu0 0
  %3203 = vmatpush1.bf16.msra.mxu0 0
  %3204 = vmatprep.subr.bf16.mxu0 0
  %3205 = vmatpush1.bf16.msra.mxu0 0
  %3206 = vmatprep.subr.bf16.mxu0 0
  %3207 = vmatpush1.bf16.msra.mxu0 0
  %3208 = vmatprep.subr.bf16.mxu0 0
  %3209 = vmatpush1.bf16.msra.mxu0 0
  %3210 = vmatprep.subr.bf16.mxu0 0
  %3211 = vmatpush1.bf16.msra.mxu0 0
  %3212 = vmatprep.subr.bf16.mxu0 0
  %3213 = vmatpush1.bf16.msra.mxu0 0
  %3214 = vmatprep.subr.bf16.mxu0 0
  %3215 = vmatpush1.bf16.msra.mxu0 0
  %3216 = vmatprep.subr.bf16.mxu0 0
  %3217 = vmatpush1.bf16.msra.mxu0 0
  %3218 = vmatprep.mubr.bf16.mxu0 0
  %3219 = vmatmul.mubr.bf16.gmra.mrb[0].mxu0 %v2768
  %v3220 = vpop.f32.mrb[0].mxu0
  %v3221 = vadd.f32 0.0, %v3220
  %v3222 = vpop.f32.mrb[0].mxu0
  %v3223 = vadd.f32 0.0, %v3222
  %v3224 = vpop.f32.mrb[0].mxu0
  %v3225 = vadd.f32 0.0, %v3224
  %v3226 = vpop.f32.mrb[0].mxu0
  %v3227 = vadd.f32 0.0, %v3226
  %3228 = vdwg.mxu0
  %v3229 = vpack.c.bf16 %v3225, %v3221
  %v3230 = vpack.c.bf16 %v3227, %v3223
  %3231 = vst [vmem:[%s2815 + $0x50] sm:$0xff] %v3229
  %3232 = vst.msk [vmem:[%s2815 + $0x58] sm:$0xff] %vm123, %v3230
  %v3233 = vld [vmem:[%s2] sm:$0xf]
  %v3234 = vld [vmem:[%s2 + $0x4] sm:$0xf]
  %v3235 = vld [vmem:[%s2 + $0x8] sm:$0xf]
  %v3236 = vld [vmem:[%s2 + $0xc] sm:$0xf]
  %v3237 = vld [vmem:[%s2 + $0x10] sm:$0xf]
  %v3238 = vld [vmem:[%s2 + $0x14] sm:$0xf]
  %v3239 = vld [vmem:[%s2 + $0x18] sm:$0xf]
  %v3240 = vld [vmem:[%s2 + $0x1c] sm:$0xf]
  %v3241 = vld [vmem:[%s2 + $0x20] sm:$0xf]
  %v3242 = vld [vmem:[%s2 + $0x24] sm:$0xf]
  %v3243 = vld [vmem:[%s2 + $0x28] sm:$0xf]
  %v3244 = vld [vmem:[%s2 + $0x2c] sm:$0xf]
  %v3245 = vld [vmem:[%s2 + $0x30] sm:$0xf]
  %v3246 = vld [vmem:[%s2 + $0x34] sm:$0xf]
  %v3247 = vld [vmem:[%s2 + $0x38] sm:$0xf]
  %v3248 = vld [vmem:[%s2 + $0x3c] sm:$0xf]
  %v3249 = vld [vmem:[%s2 + $0x40] sm:$0xf]
  %v3250 = vld [vmem:[%s2 + $0x44] sm:$0xf]
  %v3251 = vld [vmem:[%s2 + $0x48] sm:$0xf]
  %v3252 = vld [vmem:[%s2 + $0x4c] sm:$0xf]
  %v3253 = vld [vmem:[%s2815] sm:$0xff]
  %v3254 = vld [vmem:[%s2815 + $0x8] sm:$0xff]
  %v3255 = vld [vmem:[%s2815 + $0x10] sm:$0xff]
  %v3256 = vld [vmem:[%s2815 + $0x18] sm:$0xff]
  %v3257 = vld [vmem:[%s2815 + $0x20] sm:$0xff]
  %v3258 = vld [vmem:[%s2815 + $0x28] sm:$0xff]
  %v3259 = vld [vmem:[%s2815 + $0x30] sm:$0xff]
  %v3260 = vld [vmem:[%s2815 + $0x38] sm:$0xff]
  %v3261 = vld [vmem:[%s2815 + $0x40] sm:$0xff]
  %v3262 = vld [vmem:[%s2815 + $0x48] sm:$0xff]
  %v3263 = vld [vmem:[%s2815 + $0x50] sm:$0xff]
  %v3264 = vld [vmem:[%s2815 + $0x58] sm:$0xff]
  %v3285 = vunpack.c.l.b16 %v3233
  %v3286 = vunpack.c.l.b16 %v3234
  %v3287 = vunpack.c.l.b16 %v3235
  %v3288 = vunpack.c.l.b16 %v3236
  %v3289 = vunpack.c.l.b16 %v3237
  %v3290 = vunpack.c.l.b16 %v3238
  %v3291 = vunpack.c.l.b16 %v3239
  %v3292 = vunpack.c.l.b16 %v3240
  %v3293 = vunpack.c.l.b16 %v3241
  %v3294 = vunpack.c.l.b16 %v3242
  %v3295 = vunpack.c.l.b16 %v3243
  %v3296 = vunpack.c.l.b16 %v3244
  %v3297 = vunpack.c.l.b16 %v3245
  %v3298 = vunpack.c.l.b16 %v3246
  %v3299 = vunpack.c.l.b16 %v3247
  %v3300 = vunpack.c.l.b16 %v3248
  %v3301 = vunpack.c.l.b16 %v3249
  %v3302 = vunpack.c.l.b16 %v3250
  %v3303 = vunpack.c.l.b16 %v3251
  %v3304 = vunpack.c.l.b16 %v3252
  %v3305 = vpack.c.b16 %v3286, %v3285
  %v3306 = vpack.c.b16 %v3288, %v3287
  %v3307 = vpack.c.b16 %v3290, %v3289
  %v3308 = vpack.c.b16 %v3292, %v3291
  %v3309 = vpack.c.b16 %v3294, %v3293
  %v3310 = vpack.c.b16 %v3296, %v3295
  %v3311 = vpack.c.b16 %v3298, %v3297
  %v3312 = vpack.c.b16 %v3300, %v3299
  %v3313 = vpack.c.b16 %v3302, %v3301
  %v3314 = vpack.c.b16 %v3304, %v3303
  %v3316 = vsel %vm627, %v3305, 0
  %v3319 = vsel %vm627, %v3306, 0
  %v3322 = vsel %vm627, %v3307, 0
  %v3325 = vsel %vm627, %v3308, 0
  %v3328 = vsel %vm627, %v3309, 0
  %v3331 = vsel %vm627, %v3310, 0
  %v3334 = vsel %vm627, %v3311, 0
  %v3337 = vsel %vm627, %v3312, 0
  %v3340 = vsel %vm627, %v3313, 0
  %v3343 = vsel %vm627, %v3314, 0
  %3345 = vmatprep.subr.bf16.mxu0 %v3254
  %3346 = vmatpush1.bf16.msra.mxu0 %v3253
  %3347 = vmatprep.subr.bf16.mxu0 %v3256
  %3348 = vmatpush1.bf16.msra.mxu0 %v3255
  %3349 = vmatprep.subr.bf16.mxu0 %v3258
  %3350 = vmatpush1.bf16.msra.mxu0 %v3257
  %3351 = vmatprep.subr.bf16.mxu0 %v3260
  %3352 = vmatpush1.bf16.msra.mxu0 %v3259
  %3353 = vmatprep.subr.bf16.mxu0 %v3262
  %3354 = vmatpush1.bf16.msra.mxu0 %v3261
  %3355 = vmatprep.subr.bf16.mxu0 %v3264
  %3356 = vmatpush1.bf16.msra.mxu0 %v3263
  %3357 = vmatprep.subr.bf16.mxu0 0
  %3358 = vmatpush1.bf16.msra.mxu0 0
  %3359 = vmatprep.subr.bf16.mxu0 0
  %3360 = vmatpush1.bf16.msra.mxu0 0
  %3361 = vmatprep.subr.bf16.mxu0 0
  %3362 = vmatpush1.bf16.msra.mxu0 0
  %3363 = vmatprep.subr.bf16.mxu0 0
  %3364 = vmatpush1.bf16.msra.mxu0 0
  %3365 = vmatprep.subr.bf16.mxu0 0
  %3366 = vmatpush1.bf16.msra.mxu0 0
  %3367 = vmatprep.subr.bf16.mxu0 0
  %3368 = vmatpush1.bf16.msra.mxu0 0
  %3369 = vmatprep.subr.bf16.mxu0 0
  %3370 = vmatpush1.bf16.msra.mxu0 0
  %3371 = vmatprep.subr.bf16.mxu0 0
  %3372 = vmatpush1.bf16.msra.mxu0 0
  %3373 = vmatprep.subr.bf16.mxu0 0
  %3374 = vmatpush1.bf16.msra.mxu0 0
  %3375 = vmatprep.subr.bf16.mxu0 0
  %3376 = vmatpush1.bf16.msra.mxu0 0
  %3377 = vmatprep.mubr.bf16.mxu0 0
  %3378 = vmatmul.mubr.bf16.gmra.mrb[0].mxu0 %v3316
  %v3379 = vpop.f32.mrb[0].mxu0
  %v3380 = vadd.f32 0.0, %v3379
  %v3381 = vpop.f32.mrb[0].mxu0
  %v3382 = vadd.f32 0.0, %v3381
  %v3383 = vpop.f32.mrb[0].mxu0
  %v3384 = vadd.f32 0.0, %v3383
  %v3385 = vpop.f32.mrb[0].mxu0
  %v3386 = vadd.f32 0.0, %v3385
  %3387 = vmatprep.mubr.bf16.mxu0 0
  %3388 = vmatmul.mubr.bf16.gmra.mrb[0].mxu0 %v3319
  %v3389 = vpop.f32.mrb[0].mxu0
  %v3390 = vadd.f32 0.0, %v3389
  %v3391 = vpop.f32.mrb[0].mxu0
  %v3392 = vadd.f32 0.0, %v3391
  %v3393 = vpop.f32.mrb[0].mxu0
  %v3394 = vadd.f32 0.0, %v3393
  %v3395 = vpop.f32.mrb[0].mxu0
  %v3396 = vadd.f32 0.0, %v3395
  %3397 = vmatprep.mubr.bf16.mxu0 0
  %3398 = vmatmul.mubr.bf16.gmra.mrb[0].mxu0 %v3322
  %v3399 = vpop.f32.mrb[0].mxu0
  %v3400 = vadd.f32 0.0, %v3399
  %v3401 = vpop.f32.mrb[0].mxu0
  %v3402 = vadd.f32 0.0, %v3401
  %v3403 = vpop.f32.mrb[0].mxu0
  %v3404 = vadd.f32 0.0, %v3403
  %v3405 = vpop.f32.mrb[0].mxu0
  %v3406 = vadd.f32 0.0, %v3405
  %3407 = vmatprep.mubr.bf16.mxu0 0
  %3408 = vmatmul.mubr.bf16.gmra.mrb[0].mxu0 %v3325
  %v3409 = vpop.f32.mrb[0].mxu0
  %v3410 = vadd.f32 0.0, %v3409
  %v3411 = vpop.f32.mrb[0].mxu0
  %v3412 = vadd.f32 0.0, %v3411
  %v3413 = vpop.f32.mrb[0].mxu0
  %v3414 = vadd.f32 0.0, %v3413
  %v3415 = vpop.f32.mrb[0].mxu0
  %v3416 = vadd.f32 0.0, %v3415
  %3417 = vmatprep.mubr.bf16.mxu0 0
  %3418 = vmatmul.mubr.bf16.gmra.mrb[0].mxu0 %v3328
  %v3419 = vpop.f32.mrb[0].mxu0
  %v3420 = vadd.f32 0.0, %v3419
  %v3421 = vpop.f32.mrb[0].mxu0
  %v3422 = vadd.f32 0.0, %v3421
  %v3423 = vpop.f32.mrb[0].mxu0
  %v3424 = vadd.f32 0.0, %v3423
  %v3425 = vpop.f32.mrb[0].mxu0
  %v3426 = vadd.f32 0.0, %v3425
  %3427 = vmatprep.mubr.bf16.mxu0 0
  %3428 = vmatmul.mubr.bf16.gmra.mrb[0].mxu0 %v3331
  %v3429 = vpop.f32.mrb[0].mxu0
  %v3430 = vadd.f32 0.0, %v3429
  %v3431 = vpop.f32.mrb[0].mxu0
  %v3432 = vadd.f32 0.0, %v3431
  %v3433 = vpop.f32.mrb[0].mxu0
  %v3434 = vadd.f32 0.0, %v3433
  %v3435 = vpop.f32.mrb[0].mxu0
  %v3436 = vadd.f32 0.0, %v3435
  %3437 = vmatprep.mubr.bf16.mxu0 0
  %3438 = vmatmul.mubr.bf16.gmra.mrb[0].mxu0 %v3334
  %v3439 = vpop.f32.mrb[0].mxu0
  %v3440 = vadd.f32 0.0, %v3439
  %v3441 = vpop.f32.mrb[0].mxu0
  %v3442 = vadd.f32 0.0, %v3441
  %v3443 = vpop.f32.mrb[0].mxu0
  %v3444 = vadd.f32 0.0, %v3443
  %v3445 = vpop.f32.mrb[0].mxu0
  %v3446 = vadd.f32 0.0, %v3445
  %3447 = vmatprep.mubr.bf16.mxu0 0
  %3448 = vmatmul.mubr.bf16.gmra.mrb[0].mxu0 %v3337
  %v3449 = vpop.f32.mrb[0].mxu0
  %v3450 = vadd.f32 0.0, %v3449
  %v3451 = vpop.f32.mrb[0].mxu0
  %v3452 = vadd.f32 0.0, %v3451
  %v3453 = vpop.f32.mrb[0].mxu0
  %v3454 = vadd.f32 0.0, %v3453
  %v3455 = vpop.f32.mrb[0].mxu0
  %v3456 = vadd.f32 0.0, %v3455
  %3457 = vmatprep.mubr.bf16.mxu0 0
  %3458 = vmatmul.mubr.bf16.gmra.mrb[0].mxu0 %v3340
  %v3459 = vpop.f32.mrb[0].mxu0
  %v3460 = vadd.f32 0.0, %v3459
  %v3461 = vpop.f32.mrb[0].mxu0
  %v3462 = vadd.f32 0.0, %v3461
  %v3463 = vpop.f32.mrb[0].mxu0
  %v3464 = vadd.f32 0.0, %v3463
  %v3465 = vpop.f32.mrb[0].mxu0
  %v3466 = vadd.f32 0.0, %v3465
  %3467 = vmatprep.mubr.bf16.mxu0 0
  %3468 = vmatmul.mubr.bf16.gmra.mrb[0].mxu0 %v3343
  %v3469 = vpop.f32.mrb[0].mxu0
  %v3470 = vadd.f32 0.0, %v3469
  %v3471 = vpop.f32.mrb[0].mxu0
  %v3472 = vadd.f32 0.0, %v3471
  %v3473 = vpop.f32.mrb[0].mxu0
  %v3474 = vadd.f32 0.0, %v3473
  %v3475 = vpop.f32.mrb[0].mxu0
  %v3476 = vadd.f32 0.0, %v3475
  %3477 = vdwg.mxu0
  %v3478 = vpack.c.bf16 %v3384, %v3380
  %v3479 = vpack.c.bf16 %v3386, %v3382
  %v3480 = vpack.c.bf16 %v3394, %v3390
  %v3481 = vpack.c.bf16 %v3396, %v3392
  %v3482 = vpack.c.bf16 %v3404, %v3400
  %v3483 = vpack.c.bf16 %v3406, %v3402
  %v3484 = vpack.c.bf16 %v3414, %v3410
  %v3485 = vpack.c.bf16 %v3416, %v3412
  %v3486 = vpack.c.bf16 %v3424, %v3420
  %v3487 = vpack.c.bf16 %v3426, %v3422
  %v3488 = vpack.c.bf16 %v3434, %v3430
  %v3489 = vpack.c.bf16 %v3436, %v3432
  %v3490 = vpack.c.bf16 %v3444, %v3440
  %v3491 = vpack.c.bf16 %v3446, %v3442
  %v3492 = vpack.c.bf16 %v3454, %v3450
  %v3493 = vpack.c.bf16 %v3456, %v3452
  %v3494 = vpack.c.bf16 %v3464, %v3460
  %v3495 = vpack.c.bf16 %v3466, %v3462
  %v3496 = vpack.c.bf16 %v3474, %v3470
  %v3497 = vpack.c.bf16 %v3476, %v3472
  %s3498 = scalar_lea.vmem [#allocation3], 160
  %3499 = vst [vmem:[%s3498] sm:$0xff] %v3478
  %3500 = vst.msk [vmem:[%s3498 + $0x8] sm:$0xff] %vm123, %v3479
  %3501 = vst [vmem:[%s3498 + $0x10] sm:$0xff] %v3480
  %3502 = vst.msk [vmem:[%s3498 + $0x18] sm:$0xff] %vm123, %v3481
  %3503 = vst [vmem:[%s3498 + $0x20] sm:$0xff] %v3482
  %3504 = vst.msk [vmem:[%s3498 + $0x28] sm:$0xff] %vm123, %v3483
  %3505 = vst [vmem:[%s3498 + $0x30] sm:$0xff] %v3484
  %3506 = vst.msk [vmem:[%s3498 + $0x38] sm:$0xff] %vm123, %v3485
  %3507 = vst [vmem:[%s3498 + $0x40] sm:$0xff] %v3486
  %3508 = vst.msk [vmem:[%s3498 + $0x48] sm:$0xff] %vm123, %v3487
  %3509 = vst [vmem:[%s3498 + $0x50] sm:$0xff] %v3488
  %3510 = vst.msk [vmem:[%s3498 + $0x58] sm:$0xff] %vm123, %v3489
  %3511 = vst [vmem:[%s3498 + $0x60] sm:$0xff] %v3490
  %3512 = vst.msk [vmem:[%s3498 + $0x68] sm:$0xff] %vm123, %v3491
  %3513 = vst [vmem:[%s3498 + $0x70] sm:$0xff] %v3492
  %3514 = vst.msk [vmem:[%s3498 + $0x78] sm:$0xff] %vm123, %v3493
  %3515 = vst [vmem:[%s3498 + $0x80] sm:$0xff] %v3494
  %3516 = vst.msk [vmem:[%s3498 + $0x88] sm:$0xff] %vm123, %v3495
  %3517 = vst [vmem:[%s3498 + $0x90] sm:$0xff] %v3496
  %3518 = vst.msk [vmem:[%s3498 + $0x98] sm:$0xff] %vm123, %v3497
  %v3519 = vld [vmem:[%s3] sm:$0x3]
  %v3521 = vlaneseq
  %v3522 = vshrl.u32 %v3521, 7
  %v3523 = vsub.s32 0, %v3522
  %v3524 = vrot.slane %v3519, %v3523
  %v3525 = vlaneseq
  %v3526 = vshrl.u32 %v3525, 7
  %v3527 = vsub.s32 1, %v3526
  %v3528 = vrot.slane %v3519, %v3527
  %v3531 = vld [vmem:[%s3498] sm:$0xff]
  %v3532 = vld [vmem:[%s3498 + $0x8] sm:$0xff]
  %v3533 = vld [vmem:[%s3498 + $0x10] sm:$0xff]
  %v3534 = vld [vmem:[%s3498 + $0x18] sm:$0xff]
  %v3535 = vld [vmem:[%s4] sm:$0xff]
  %v3536 = vld [vmem:[%s4 + $0x8] sm:$0xff]
  %v3537 = vld [vmem:[%s4 + $0x10] sm:$0xff]
  %v3538 = vld [vmem:[%s4 + $0x18] sm:$0xff]
  %v3539 = vld [vmem:[%s4 + $0x20] sm:$0xff]
  %v3540 = vld [vmem:[%s4 + $0x28] sm:$0xff]
  %v3541 = vld [vmem:[%s4 + $0x30] sm:$0xff]
  %v3542 = vld [vmem:[%s4 + $0x38] sm:$0xff]
  %v3543 = vld [vmem:[%s4 + $0x40] sm:$0xff]
  %v3544 = vld [vmem:[%s4 + $0x48] sm:$0xff]
  %v3545 = vld [vmem:[%s4 + $0x50] sm:$0xff]
  %v3546 = vld [vmem:[%s4 + $0x58] sm:$0xff]
  %v3547 = vld [vmem:[%s4 + $0x60] sm:$0xff]
  %v3548 = vld [vmem:[%s4 + $0x68] sm:$0xff]
  %v3549 = vld [vmem:[%s4 + $0x70] sm:$0xff]
  %v3550 = vld [vmem:[%s4 + $0x78] sm:$0xff]
  %v3551 = vld [vmem:[%s4 + $0x80] sm:$0xff]
  %v3552 = vld [vmem:[%s4 + $0x88] sm:$0xff]
  %v3553 = vld [vmem:[%s4 + $0x90] sm:$0xff]
  %v3554 = vld [vmem:[%s4 + $0x98] sm:$0xff]
  %v3555 = vld [vmem:[%s4 + $0xa0] sm:$0xff]
  %v3556 = vld [vmem:[%s4 + $0xa8] sm:$0xff]
  %v3557 = vld [vmem:[%s4 + $0xb0] sm:$0x33]
  %v3581 = vunpack.c.l.b16 %v3535
  %v3582 = vunpack.c.h.b16 %v3535
  %v3583 = vunpack.c.l.b16 %v3536
  %v3584 = vunpack.c.h.b16 %v3536
  %v3585 = vunpack.c.l.b16 %v3537
  %v3586 = vunpack.c.h.b16 %v3537
  %v3587 = vunpack.c.l.b16 %v3538
  %v3588 = vunpack.c.h.b16 %v3538
  %v3589 = vunpack.c.l.b16 %v3539
  %v3590 = vunpack.c.h.b16 %v3539
  %v3591 = vunpack.c.l.b16 %v3540
  %v3592 = vunpack.c.h.b16 %v3540
  %v3593 = vunpack.c.l.b16 %v3541
  %v3594 = vunpack.c.h.b16 %v3541
  %v3595 = vunpack.c.l.b16 %v3542
  %v3596 = vunpack.c.h.b16 %v3542
  %v3597 = vunpack.c.l.b16 %v3543
  %v3598 = vunpack.c.h.b16 %v3543
  %v3599 = vunpack.c.l.b16 %v3544
  %v3600 = vunpack.c.h.b16 %v3544
  %v3601 = vunpack.c.l.b16 %v3545
  %v3602 = vunpack.c.h.b16 %v3545
  %v3603 = vunpack.c.l.b16 %v3546
  %v3604 = vunpack.c.h.b16 %v3546
  %v3605 = vunpack.c.l.b16 %v3547
  %v3606 = vunpack.c.h.b16 %v3547
  %v3607 = vunpack.c.l.b16 %v3548
  %v3608 = vunpack.c.h.b16 %v3548
  %v3609 = vunpack.c.l.b16 %v3549
  %v3610 = vunpack.c.h.b16 %v3549
  %v3611 = vunpack.c.l.b16 %v3550
  %v3612 = vunpack.c.h.b16 %v3550
  %v3613 = vunpack.c.l.b16 %v3551
  %v3614 = vunpack.c.h.b16 %v3551
  %v3615 = vunpack.c.l.b16 %v3552
  %v3616 = vunpack.c.h.b16 %v3552
  %v3617 = vunpack.c.l.b16 %v3553
  %v3618 = vunpack.c.h.b16 %v3553
  %v3619 = vunpack.c.l.b16 %v3554
  %v3620 = vunpack.c.h.b16 %v3554
  %v3621 = vunpack.c.l.b16 %v3555
  %v3622 = vunpack.c.h.b16 %v3555
  %v3623 = vunpack.c.l.b16 %v3556
  %v3624 = vunpack.c.h.b16 %v3556
  %v3625 = vunpack.c.l.b16 %v3557
  %v3626 = vunpack.c.h.b16 %v3557
  %v3627 = vpack.c.b16 %v3583, %v3581
  %v3628 = vpack.c.b16 %v3584, %v3582
  %v3629 = vpack.c.b16 %v3587, %v3585
  %v3630 = vpack.c.b16 %v3588, %v3586
  %v3631 = vpack.c.b16 %v3591, %v3589
  %v3632 = vpack.c.b16 %v3592, %v3590
  %v3633 = vpack.c.b16 %v3595, %v3593
  %v3634 = vpack.c.b16 %v3596, %v3594
  %v3635 = vpack.c.b16 %v3599, %v3597
  %v3636 = vpack.c.b16 %v3600, %v3598
  %v3637 = vpack.c.b16 %v3603, %v3601
  %v3638 = vpack.c.b16 %v3604, %v3602
  %v3639 = vpack.c.b16 %v3607, %v3605
  %v3640 = vpack.c.b16 %v3608, %v3606
  %v3641 = vpack.c.b16 %v3611, %v3609
  %v3642 = vpack.c.b16 %v3612, %v3610
  %v3643 = vpack.c.b16 %v3615, %v3613
  %v3644 = vpack.c.b16 %v3616, %v3614
  %v3645 = vpack.c.b16 %v3619, %v3617
  %v3646 = vpack.c.b16 %v3620, %v3618
  %v3647 = vpack.c.b16 %v3623, %v3621
  %v3648 = vpack.c.b16 %v3624, %v3622
  %v3649 = vpack.c.b16 %v3625, %v3625
  %v3650 = vpack.c.b16 %v3626, %v3626
  %v3674 = vsel %vm123, %v3532, 0
  %v3677 = vsel %vm123, %v3534, 0
  %v3680 = vsel %vm991, %v3649, 0
  %v3683 = vsel %vm991, %v3650, 0
  %3685 = vmatprep.subr.bf16.mxu0 %v3628
  %3686 = vmatpush1.bf16.msra.mxu0 %v3627
  %3687 = vmatprep.subr.bf16.mxu0 %v3630
  %3688 = vmatpush1.bf16.msra.mxu0 %v3629
  %3689 = vmatprep.subr.bf16.mxu0 %v3632
  %3690 = vmatpush1.bf16.msra.mxu0 %v3631
  %3691 = vmatprep.subr.bf16.mxu0 %v3634
  %3692 = vmatpush1.bf16.msra.mxu0 %v3633
  %3693 = vmatprep.subr.bf16.mxu0 %v3636
  %3694 = vmatpush1.bf16.msra.mxu0 %v3635
  %3695 = vmatprep.subr.bf16.mxu0 %v3638
  %3696 = vmatpush1.bf16.msra.mxu0 %v3637
  %3697 = vmatprep.subr.bf16.mxu0 %v3640
  %3698 = vmatpush1.bf16.msra.mxu0 %v3639
  %3699 = vmatprep.subr.bf16.mxu0 %v3642
  %3700 = vmatpush1.bf16.msra.mxu0 %v3641
  %3701 = vmatprep.subr.bf16.mxu0 %v3644
  %3702 = vmatpush1.bf16.msra.mxu0 %v3643
  %3703 = vmatprep.subr.bf16.mxu0 %v3646
  %3704 = vmatpush1.bf16.msra.mxu0 %v3645
  %3705 = vmatprep.subr.bf16.mxu0 %v3648
  %3706 = vmatpush1.bf16.msra.mxu0 %v3647
  %3707 = vmatprep.subr.bf16.mxu0 %v3683
  %3708 = vmatpush1.bf16.msra.mxu0 %v3680
  %3709 = vmatprep.subr.bf16.mxu0 0
  %3710 = vmatpush1.bf16.msra.mxu0 0
  %3711 = vmatprep.subr.bf16.mxu0 0
  %3712 = vmatpush1.bf16.msra.mxu0 0
  %3713 = vmatprep.subr.bf16.mxu0 0
  %3714 = vmatpush1.bf16.msra.mxu0 0
  %3715 = vmatprep.subr.bf16.mxu0 0
  %3716 = vmatpush1.bf16.msra.mxu0 0
  %3717 = vmatprep.mubr.bf16.mxu0 %v3674
  %3718 = vmatmul.mubr.bf16.gmra.mrb[0].mxu0 %v3531
  %v3719 = vpop.f32.mrb[0].mxu0
  %v3720 = vadd.f32 0.0, %v3719
  %v3721 = vpop.f32.mrb[0].mxu0
  %v3722 = vadd.f32 0.0, %v3721
  %v3723 = vpop.f32.mrb[0].mxu0
  %v3724 = vadd.f32 0.0, %v3723
  %v3725 = vpop.f32.mrb[0].mxu0
  %v3726 = vadd.f32 0.0, %v3725
  %3727 = vmatprep.mubr.bf16.mxu0 %v3677
  %3728 = vmatmul.mubr.bf16.gmra.mrb[0].mxu0 %v3533
  %v3729 = vpop.f32.mrb[0].mxu0
  %v3730 = vadd.f32 0.0, %v3729
  %v3731 = vpop.f32.mrb[0].mxu0
  %v3732 = vadd.f32 0.0, %v3731
  %v3733 = vpop.f32.mrb[0].mxu0
  %v3734 = vadd.f32 0.0, %v3733
  %v3735 = vpop.f32.mrb[0].mxu0
  %v3736 = vadd.f32 0.0, %v3735
  %3737 = vdwg.mxu0
  %v3738 = vadd.f32 %v3524, %v3720
  %v3739 = vadd.f32 %v3528, %v3722
  %v3740 = vadd.f32 %v3524, %v3724
  %v3741 = vadd.f32 %v3528, %v3726
  %v3742 = vadd.f32 %v3524, %v3730
  %v3743 = vadd.f32 %v3528, %v3732
  %v3744 = vadd.f32 %v3524, %v3734
  %v3745 = vadd.f32 %v3528, %v3736
  %v3746 = vld [vmem:[%s3498 + $0x20] sm:$0xff]
  %v3747 = vld [vmem:[%s3498 + $0x28] sm:$0xff]
  %v3748 = vld [vmem:[%s3498 + $0x30] sm:$0xff]
  %v3749 = vld [vmem:[%s3498 + $0x38] sm:$0xff]
  %v3750 = vld [vmem:[%s1063] sm:$0xff]
  %v3751 = vld [vmem:[%s1063 + $0x8] sm:$0xff]
  %v3752 = vld [vmem:[%s1063 + $0x10] sm:$0xff]
  %v3753 = vld [vmem:[%s1063 + $0x18] sm:$0xff]
  %v3754 = vld [vmem:[%s1063 + $0x20] sm:$0xff]
  %v3755 = vld [vmem:[%s1063 + $0x28] sm:$0xff]
  %v3756 = vld [vmem:[%s1063 + $0x30] sm:$0xff]
  %v3757 = vld [vmem:[%s1063 + $0x38] sm:$0xff]
  %v3758 = vld [vmem:[%s1063 + $0x40] sm:$0xff]
  %v3759 = vld [vmem:[%s1063 + $0x48] sm:$0xff]
  %v3760 = vld [vmem:[%s1063 + $0x50] sm:$0xff]
  %v3761 = vld [vmem:[%s1063 + $0x58] sm:$0xff]
  %v3762 = vld [vmem:[%s1063 + $0x60] sm:$0xff]
  %v3763 = vld [vmem:[%s1063 + $0x68] sm:$0xff]
  %v3764 = vld [vmem:[%s1063 + $0x70] sm:$0xff]
  %v3765 = vld [vmem:[%s1063 + $0x78] sm:$0xff]
  %v3766 = vld [vmem:[%s1063 + $0x80] sm:$0xff]
  %v3767 = vld [vmem:[%s1063 + $0x88] sm:$0xff]
  %v3768 = vld [vmem:[%s1063 + $0x90] sm:$0xff]
  %v3769 = vld [vmem:[%s1063 + $0x98] sm:$0xff]
  %v3770 = vld [vmem:[%s1063 + $0xa0] sm:$0xff]
  %v3771 = vld [vmem:[%s1063 + $0xa8] sm:$0xff]
  %v3772 = vld [vmem:[%s1063 + $0xb0] sm:$0x33]
  %v3796 = vunpack.c.l.b16 %v3750
  %v3797 = vunpack.c.h.b16 %v3750
  %v3798 = vunpack.c.l.b16 %v3751
  %v3799 = vunpack.c.h.b16 %v3751
  %v3800 = vunpack.c.l.b16 %v3752
  %v3801 = vunpack.c.h.b16 %v3752
  %v3802 = vunpack.c.l.b16 %v3753
  %v3803 = vunpack.c.h.b16 %v3753
  %v3804 = vunpack.c.l.b16 %v3754
  %v3805 = vunpack.c.h.b16 %v3754
  %v3806 = vunpack.c.l.b16 %v3755
  %v3807 = vunpack.c.h.b16 %v3755
  %v3808 = vunpack.c.l.b16 %v3756
  %v3809 = vunpack.c.h.b16 %v3756
  %v3810 = vunpack.c.l.b16 %v3757
  %v3811 = vunpack.c.h.b16 %v3757
  %v3812 = vunpack.c.l.b16 %v3758
  %v3813 = vunpack.c.h.b16 %v3758
  %v3814 = vunpack.c.l.b16 %v3759
  %v3815 = vunpack.c.h.b16 %v3759
  %v3816 = vunpack.c.l.b16 %v3760
  %v3817 = vunpack.c.h.b16 %v3760
  %v3818 = vunpack.c.l.b16 %v3761
  %v3819 = vunpack.c.h.b16 %v3761
  %v3820 = vunpack.c.l.b16 %v3762
  %v3821 = vunpack.c.h.b16 %v3762
  %v3822 = vunpack.c.l.b16 %v3763
  %v3823 = vunpack.c.h.b16 %v3763
  %v3824 = vunpack.c.l.b16 %v3764
  %v3825 = vunpack.c.h.b16 %v3764
  %v3826 = vunpack.c.l.b16 %v3765
  %v3827 = vunpack.c.h.b16 %v3765
  %v3828 = vunpack.c.l.b16 %v3766
  %v3829 = vunpack.c.h.b16 %v3766
  %v3830 = vunpack.c.l.b16 %v3767
  %v3831 = vunpack.c.h.b16 %v3767
  %v3832 = vunpack.c.l.b16 %v3768
  %v3833 = vunpack.c.h.b16 %v3768
  %v3834 = vunpack.c.l.b16 %v3769
  %v3835 = vunpack.c.h.b16 %v3769
  %v3836 = vunpack.c.l.b16 %v3770
  %v3837 = vunpack.c.h.b16 %v3770
  %v3838 = vunpack.c.l.b16 %v3771
  %v3839 = vunpack.c.h.b16 %v3771
  %v3840 = vunpack.c.l.b16 %v3772
  %v3841 = vunpack.c.h.b16 %v3772
  %v3842 = vpack.c.b16 %v3798, %v3796
  %v3843 = vpack.c.b16 %v3799, %v3797
  %v3844 = vpack.c.b16 %v3802, %v3800
  %v3845 = vpack.c.b16 %v3803, %v3801
  %v3846 = vpack.c.b16 %v3806, %v3804
  %v3847 = vpack.c.b16 %v3807, %v3805
  %v3848 = vpack.c.b16 %v3810, %v3808
  %v3849 = vpack.c.b16 %v3811, %v3809
  %v3850 = vpack.c.b16 %v3814, %v3812
  %v3851 = vpack.c.b16 %v3815, %v3813
  %v3852 = vpack.c.b16 %v3818, %v3816
  %v3853 = vpack.c.b16 %v3819, %v3817
  %v3854 = vpack.c.b16 %v3822, %v3820
  %v3855 = vpack.c.b16 %v3823, %v3821
  %v3856 = vpack.c.b16 %v3826, %v3824
  %v3857 = vpack.c.b16 %v3827, %v3825
  %v3858 = vpack.c.b16 %v3830, %v3828
  %v3859 = vpack.c.b16 %v3831, %v3829
  %v3860 = vpack.c.b16 %v3834, %v3832
  %v3861 = vpack.c.b16 %v3835, %v3833
  %v3862 = vpack.c.b16 %v3838, %v3836
  %v3863 = vpack.c.b16 %v3839, %v3837
  %v3864 = vpack.c.b16 %v3840, %v3840
  %v3865 = vpack.c.b16 %v3841, %v3841
  %v3889 = vsel %vm123, %v3747, 0
  %v3892 = vsel %vm123, %v3749, 0
  %v3895 = vsel %vm991, %v3864, 0
  %v3898 = vsel %vm991, %v3865, 0
  %3900 = vmatprep.subr.bf16.mxu0 %v3843
  %3901 = vmatpush1.bf16.msra.mxu0 %v3842
  %3902 = vmatprep.subr.bf16.mxu0 %v3845
  %3903 = vmatpush1.bf16.msra.mxu0 %v3844
  %3904 = vmatprep.subr.bf16.mxu0 %v3847
  %3905 = vmatpush1.bf16.msra.mxu0 %v3846
  %3906 = vmatprep.subr.bf16.mxu0 %v3849
  %3907 = vmatpush1.bf16.msra.mxu0 %v3848
  %3908 = vmatprep.subr.bf16.mxu0 %v3851
  %3909 = vmatpush1.bf16.msra.mxu0 %v3850
  %3910 = vmatprep.subr.bf16.mxu0 %v3853
  %3911 = vmatpush1.bf16.msra.mxu0 %v3852
  %3912 = vmatprep.subr.bf16.mxu0 %v3855
  %3913 = vmatpush1.bf16.msra.mxu0 %v3854
  %3914 = vmatprep.subr.bf16.mxu0 %v3857
  %3915 = vmatpush1.bf16.msra.mxu0 %v3856
  %3916 = vmatprep.subr.bf16.mxu0 %v3859
  %3917 = vmatpush1.bf16.msra.mxu0 %v3858
  %3918 = vmatprep.subr.bf16.mxu0 %v3861
  %3919 = vmatpush1.bf16.msra.mxu0 %v3860
  %3920 = vmatprep.subr.bf16.mxu0 %v3863
  %3921 = vmatpush1.bf16.msra.mxu0 %v3862
  %3922 = vmatprep.subr.bf16.mxu0 %v3898
  %3923 = vmatpush1.bf16.msra.mxu0 %v3895
  %3924 = vmatprep.subr.bf16.mxu0 0
  %3925 = vmatpush1.bf16.msra.mxu0 0
  %3926 = vmatprep.subr.bf16.mxu0 0
  %3927 = vmatpush1.bf16.msra.mxu0 0
  %3928 = vmatprep.subr.bf16.mxu0 0
  %3929 = vmatpush1.bf16.msra.mxu0 0
  %3930 = vmatprep.subr.bf16.mxu0 0
  %3931 = vmatpush1.bf16.msra.mxu0 0
  %3932 = vmatprep.mubr.bf16.mxu0 %v3889
  %3933 = vmatmul.mubr.bf16.gmra.mrb[0].mxu0 %v3746
  %v3934 = vpop.f32.mrb[0].mxu0
  %v3935 = vadd.f32 0.0, %v3934
  %v3936 = vpop.f32.mrb[0].mxu0
  %v3937 = vadd.f32 0.0, %v3936
  %v3938 = vpop.f32.mrb[0].mxu0
  %v3939 = vadd.f32 0.0, %v3938
  %v3940 = vpop.f32.mrb[0].mxu0
  %v3941 = vadd.f32 0.0, %v3940
  %3942 = vmatprep.mubr.bf16.mxu0 %v3892
  %3943 = vmatmul.mubr.bf16.gmra.mrb[0].mxu0 %v3748
  %v3944 = vpop.f32.mrb[0].mxu0
  %v3945 = vadd.f32 0.0, %v3944
  %v3946 = vpop.f32.mrb[0].mxu0
  %v3947 = vadd.f32 0.0, %v3946
  %v3948 = vpop.f32.mrb[0].mxu0
  %v3949 = vadd.f32 0.0, %v3948
  %v3950 = vpop.f32.mrb[0].mxu0
  %v3951 = vadd.f32 0.0, %v3950
  %3952 = vdwg.mxu0
  %v3953 = vadd.f32 %v3738, %v3935
  %v3954 = vadd.f32 %v3739, %v3937
  %v3955 = vadd.f32 %v3740, %v3939
  %v3956 = vadd.f32 %v3741, %v3941
  %v3957 = vadd.f32 %v3742, %v3945
  %v3958 = vadd.f32 %v3743, %v3947
  %v3959 = vadd.f32 %v3744, %v3949
  %v3960 = vadd.f32 %v3745, %v3951
  %v3961 = vld [vmem:[%s3498 + $0x40] sm:$0xff]
  %v3962 = vld [vmem:[%s3498 + $0x48] sm:$0xff]
  %v3963 = vld [vmem:[%s3498 + $0x50] sm:$0xff]
  %v3964 = vld [vmem:[%s3498 + $0x58] sm:$0xff]
  %v3965 = vld [vmem:[%s1279] sm:$0xff]
  %v3966 = vld [vmem:[%s1279 + $0x8] sm:$0xff]
  %v3967 = vld [vmem:[%s1279 + $0x10] sm:$0xff]
  %v3968 = vld [vmem:[%s1279 + $0x18] sm:$0xff]
  %v3969 = vld [vmem:[%s1279 + $0x20] sm:$0xff]
  %v3970 = vld [vmem:[%s1279 + $0x28] sm:$0xff]
  %v3971 = vld [vmem:[%s1279 + $0x30] sm:$0xff]
  %v3972 = vld [vmem:[%s1279 + $0x38] sm:$0xff]
  %v3973 = vld [vmem:[%s1279 + $0x40] sm:$0xff]
  %v3974 = vld [vmem:[%s1279 + $0x48] sm:$0xff]
  %v3975 = vld [vmem:[%s1279 + $0x50] sm:$0xff]
  %v3976 = vld [vmem:[%s1279 + $0x58] sm:$0xff]
  %v3977 = vld [vmem:[%s1279 + $0x60] sm:$0xff]
  %v3978 = vld [vmem:[%s1279 + $0x68] sm:$0xff]
  %v3979 = vld [vmem:[%s1279 + $0x70] sm:$0xff]
  %v3980 = vld [vmem:[%s1279 + $0x78] sm:$0xff]
  %v3981 = vld [vmem:[%s1279 + $0x80] sm:$0xff]
  %v3982 = vld [vmem:[%s1279 + $0x88] sm:$0xff]
  %v3983 = vld [vmem:[%s1279 + $0x90] sm:$0xff]
  %v3984 = vld [vmem:[%s1279 + $0x98] sm:$0xff]
  %v3985 = vld [vmem:[%s1279 + $0xa0] sm:$0xff]
  %v3986 = vld [vmem:[%s1279 + $0xa8] sm:$0xff]
  %v3987 = vld [vmem:[%s1279 + $0xb0] sm:$0x33]
  %v4011 = vunpack.c.l.b16 %v3965
  %v4012 = vunpack.c.h.b16 %v3965
  %v4013 = vunpack.c.l.b16 %v3966
  %v4014 = vunpack.c.h.b16 %v3966
  %v4015 = vunpack.c.l.b16 %v3967
  %v4016 = vunpack.c.h.b16 %v3967
  %v4017 = vunpack.c.l.b16 %v3968
  %v4018 = vunpack.c.h.b16 %v3968
  %v4019 = vunpack.c.l.b16 %v3969
  %v4020 = vunpack.c.h.b16 %v3969
  %v4021 = vunpack.c.l.b16 %v3970
  %v4022 = vunpack.c.h.b16 %v3970
  %v4023 = vunpack.c.l.b16 %v3971
  %v4024 = vunpack.c.h.b16 %v3971
  %v4025 = vunpack.c.l.b16 %v3972
  %v4026 = vunpack.c.h.b16 %v3972
  %v4027 = vunpack.c.l.b16 %v3973
  %v4028 = vunpack.c.h.b16 %v3973
  %v4029 = vunpack.c.l.b16 %v3974
  %v4030 = vunpack.c.h.b16 %v3974
  %v4031 = vunpack.c.l.b16 %v3975
  %v4032 = vunpack.c.h.b16 %v3975
  %v4033 = vunpack.c.l.b16 %v3976
  %v4034 = vunpack.c.h.b16 %v3976
  %v4035 = vunpack.c.l.b16 %v3977
  %v4036 = vunpack.c.h.b16 %v3977
  %v4037 = vunpack.c.l.b16 %v3978
  %v4038 = vunpack.c.h.b16 %v3978
  %v4039 = vunpack.c.l.b16 %v3979
  %v4040 = vunpack.c.h.b16 %v3979
  %v4041 = vunpack.c.l.b16 %v3980
  %v4042 = vunpack.c.h.b16 %v3980
  %v4043 = vunpack.c.l.b16 %v3981
  %v4044 = vunpack.c.h.b16 %v3981
  %v4045 = vunpack.c.l.b16 %v3982
  %v4046 = vunpack.c.h.b16 %v3982
  %v4047 = vunpack.c.l.b16 %v3983
  %v4048 = vunpack.c.h.b16 %v3983
  %v4049 = vunpack.c.l.b16 %v3984
  %v4050 = vunpack.c.h.b16 %v3984
  %v4051 = vunpack.c.l.b16 %v3985
  %v4052 = vunpack.c.h.b16 %v3985
  %v4053 = vunpack.c.l.b16 %v3986
  %v4054 = vunpack.c.h.b16 %v3986
  %v4055 = vunpack.c.l.b16 %v3987
  %v4056 = vunpack.c.h.b16 %v3987
  %v4057 = vpack.c.b16 %v4013, %v4011
  %v4058 = vpack.c.b16 %v4014, %v4012
  %v4059 = vpack.c.b16 %v4017, %v4015
  %v4060 = vpack.c.b16 %v4018, %v4016
  %v4061 = vpack.c.b16 %v4021, %v4019
  %v4062 = vpack.c.b16 %v4022, %v4020
  %v4063 = vpack.c.b16 %v4025, %v4023
  %v4064 = vpack.c.b16 %v4026, %v4024
  %v4065 = vpack.c.b16 %v4029, %v4027
  %v4066 = vpack.c.b16 %v4030, %v4028
  %v4067 = vpack.c.b16 %v4033, %v4031
  %v4068 = vpack.c.b16 %v4034, %v4032
  %v4069 = vpack.c.b16 %v4037, %v4035
  %v4070 = vpack.c.b16 %v4038, %v4036
  %v4071 = vpack.c.b16 %v4041, %v4039
  %v4072 = vpack.c.b16 %v4042, %v4040
  %v4073 = vpack.c.b16 %v4045, %v4043
  %v4074 = vpack.c.b16 %v4046, %v4044
  %v4075 = vpack.c.b16 %v4049, %v4047
  %v4076 = vpack.c.b16 %v4050, %v4048
  %v4077 = vpack.c.b16 %v4053, %v4051
  %v4078 = vpack.c.b16 %v4054, %v4052
  %v4079 = vpack.c.b16 %v4055, %v4055
  %v4080 = vpack.c.b16 %v4056, %v4056
  %v4104 = vsel %vm123, %v3962, 0
  %v4107 = vsel %vm123, %v3964, 0
  %v4110 = vsel %vm991, %v4079, 0
  %v4113 = vsel %vm991, %v4080, 0
  %4115 = vmatprep.subr.bf16.mxu0 %v4058
  %4116 = vmatpush1.bf16.msra.mxu0 %v4057
  %4117 = vmatprep.subr.bf16.mxu0 %v4060
  %4118 = vmatpush1.bf16.msra.mxu0 %v4059
  %4119 = vmatprep.subr.bf16.mxu0 %v4062
  %4120 = vmatpush1.bf16.msra.mxu0 %v4061
  %4121 = vmatprep.subr.bf16.mxu0 %v4064
  %4122 = vmatpush1.bf16.msra.mxu0 %v4063
  %4123 = vmatprep.subr.bf16.mxu0 %v4066
  %4124 = vmatpush1.bf16.msra.mxu0 %v4065
  %4125 = vmatprep.subr.bf16.mxu0 %v4068
  %4126 = vmatpush1.bf16.msra.mxu0 %v4067
  %4127 = vmatprep.subr.bf16.mxu0 %v4070
  %4128 = vmatpush1.bf16.msra.mxu0 %v4069
  %4129 = vmatprep.subr.bf16.mxu0 %v4072
  %4130 = vmatpush1.bf16.msra.mxu0 %v4071
  %4131 = vmatprep.subr.bf16.mxu0 %v4074
  %4132 = vmatpush1.bf16.msra.mxu0 %v4073
  %4133 = vmatprep.subr.bf16.mxu0 %v4076
  %4134 = vmatpush1.bf16.msra.mxu0 %v4075
  %4135 = vmatprep.subr.bf16.mxu0 %v4078
  %4136 = vmatpush1.bf16.msra.mxu0 %v4077
  %4137 = vmatprep.subr.bf16.mxu0 %v4113
  %4138 = vmatpush1.bf16.msra.mxu0 %v4110
  %4139 = vmatprep.subr.bf16.mxu0 0
  %4140 = vmatpush1.bf16.msra.mxu0 0
  %4141 = vmatprep.subr.bf16.mxu0 0
  %4142 = vmatpush1.bf16.msra.mxu0 0
  %4143 = vmatprep.subr.bf16.mxu0 0
  %4144 = vmatpush1.bf16.msra.mxu0 0
  %4145 = vmatprep.subr.bf16.mxu0 0
  %4146 = vmatpush1.bf16.msra.mxu0 0
  %4147 = vmatprep.mubr.bf16.mxu0 %v4104
  %4148 = vmatmul.mubr.bf16.gmra.mrb[0].mxu0 %v3961
  %v4149 = vpop.f32.mrb[0].mxu0
  %v4150 = vadd.f32 0.0, %v4149
  %v4151 = vpop.f32.mrb[0].mxu0
  %v4152 = vadd.f32 0.0, %v4151
  %v4153 = vpop.f32.mrb[0].mxu0
  %v4154 = vadd.f32 0.0, %v4153
  %v4155 = vpop.f32.mrb[0].mxu0
  %v4156 = vadd.f32 0.0, %v4155
  %4157 = vmatprep.mubr.bf16.mxu0 %v4107
  %4158 = vmatmul.mubr.bf16.gmra.mrb[0].mxu0 %v3963
  %v4159 = vpop.f32.mrb[0].mxu0
  %v4160 = vadd.f32 0.0, %v4159
  %v4161 = vpop.f32.mrb[0].mxu0
  %v4162 = vadd.f32 0.0, %v4161
  %v4163 = vpop.f32.mrb[0].mxu0
  %v4164 = vadd.f32 0.0, %v4163
  %v4165 = vpop.f32.mrb[0].mxu0
  %v4166 = vadd.f32 0.0, %v4165
  %4167 = vdwg.mxu0
  %v4168 = vadd.f32 %v3953, %v4150
  %v4169 = vadd.f32 %v3954, %v4152
  %v4170 = vadd.f32 %v3955, %v4154
  %v4171 = vadd.f32 %v3956, %v4156
  %v4172 = vadd.f32 %v3957, %v4160
  %v4173 = vadd.f32 %v3958, %v4162
  %v4174 = vadd.f32 %v3959, %v4164
  %v4175 = vadd.f32 %v3960, %v4166
  %v4176 = vld [vmem:[%s3498 + $0x60] sm:$0xff]
  %v4177 = vld [vmem:[%s3498 + $0x68] sm:$0xff]
  %v4178 = vld [vmem:[%s3498 + $0x70] sm:$0xff]
  %v4179 = vld [vmem:[%s3498 + $0x78] sm:$0xff]
  %v4180 = vld [vmem:[%s1495] sm:$0xff]
  %v4181 = vld [vmem:[%s1495 + $0x8] sm:$0xff]
  %v4182 = vld [vmem:[%s1495 + $0x10] sm:$0xff]
  %v4183 = vld [vmem:[%s1495 + $0x18] sm:$0xff]
  %v4184 = vld [vmem:[%s1495 + $0x20] sm:$0xff]
  %v4185 = vld [vmem:[%s1495 + $0x28] sm:$0xff]
  %v4186 = vld [vmem:[%s1495 + $0x30] sm:$0xff]
  %v4187 = vld [vmem:[%s1495 + $0x38] sm:$0xff]
  %v4188 = vld [vmem:[%s1495 + $0x40] sm:$0xff]
  %v4189 = vld [vmem:[%s1495 + $0x48] sm:$0xff]
  %v4190 = vld [vmem:[%s1495 + $0x50] sm:$0xff]
  %v4191 = vld [vmem:[%s1495 + $0x58] sm:$0xff]
  %v4192 = vld [vmem:[%s1495 + $0x60] sm:$0xff]
  %v4193 = vld [vmem:[%s1495 + $0x68] sm:$0xff]
  %v4194 = vld [vmem:[%s1495 + $0x70] sm:$0xff]
  %v4195 = vld [vmem:[%s1495 + $0x78] sm:$0xff]
  %v4196 = vld [vmem:[%s1495 + $0x80] sm:$0xff]
  %v4197 = vld [vmem:[%s1495 + $0x88] sm:$0xff]
  %v4198 = vld [vmem:[%s1495 + $0x90] sm:$0xff]
  %v4199 = vld [vmem:[%s1495 + $0x98] sm:$0xff]
  %v4200 = vld [vmem:[%s1495 + $0xa0] sm:$0xff]
  %v4201 = vld [vmem:[%s1495 + $0xa8] sm:$0xff]
  %v4202 = vld [vmem:[%s1495 + $0xb0] sm:$0x33]
  %v4226 = vunpack.c.l.b16 %v4180
  %v4227 = vunpack.c.h.b16 %v4180
  %v4228 = vunpack.c.l.b16 %v4181
  %v4229 = vunpack.c.h.b16 %v4181
  %v4230 = vunpack.c.l.b16 %v4182
  %v4231 = vunpack.c.h.b16 %v4182
  %v4232 = vunpack.c.l.b16 %v4183
  %v4233 = vunpack.c.h.b16 %v4183
  %v4234 = vunpack.c.l.b16 %v4184
  %v4235 = vunpack.c.h.b16 %v4184
  %v4236 = vunpack.c.l.b16 %v4185
  %v4237 = vunpack.c.h.b16 %v4185
  %v4238 = vunpack.c.l.b16 %v4186
  %v4239 = vunpack.c.h.b16 %v4186
  %v4240 = vunpack.c.l.b16 %v4187
  %v4241 = vunpack.c.h.b16 %v4187
  %v4242 = vunpack.c.l.b16 %v4188
  %v4243 = vunpack.c.h.b16 %v4188
  %v4244 = vunpack.c.l.b16 %v4189
  %v4245 = vunpack.c.h.b16 %v4189
  %v4246 = vunpack.c.l.b16 %v4190
  %v4247 = vunpack.c.h.b16 %v4190
  %v4248 = vunpack.c.l.b16 %v4191
  %v4249 = vunpack.c.h.b16 %v4191
  %v4250 = vunpack.c.l.b16 %v4192
  %v4251 = vunpack.c.h.b16 %v4192
  %v4252 = vunpack.c.l.b16 %v4193
  %v4253 = vunpack.c.h.b16 %v4193
  %v4254 = vunpack.c.l.b16 %v4194
  %v4255 = vunpack.c.h.b16 %v4194
  %v4256 = vunpack.c.l.b16 %v4195
  %v4257 = vunpack.c.h.b16 %v4195
  %v4258 = vunpack.c.l.b16 %v4196
  %v4259 = vunpack.c.h.b16 %v4196
  %v4260 = vunpack.c.l.b16 %v4197
  %v4261 = vunpack.c.h.b16 %v4197
  %v4262 = vunpack.c.l.b16 %v4198
  %v4263 = vunpack.c.h.b16 %v4198
  %v4264 = vunpack.c.l.b16 %v4199
  %v4265 = vunpack.c.h.b16 %v4199
  %v4266 = vunpack.c.l.b16 %v4200
  %v4267 = vunpack.c.h.b16 %v4200
  %v4268 = vunpack.c.l.b16 %v4201
  %v4269 = vunpack.c.h.b16 %v4201
  %v4270 = vunpack.c.l.b16 %v4202
  %v4271 = vunpack.c.h.b16 %v4202
  %v4272 = vpack.c.b16 %v4228, %v4226
  %v4273 = vpack.c.b16 %v4229, %v4227
  %v4274 = vpack.c.b16 %v4232, %v4230
  %v4275 = vpack.c.b16 %v4233, %v4231
  %v4276 = vpack.c.b16 %v4236, %v4234
  %v4277 = vpack.c.b16 %v4237, %v4235
  %v4278 = vpack.c.b16 %v4240, %v4238
  %v4279 = vpack.c.b16 %v4241, %v4239
  %v4280 = vpack.c.b16 %v4244, %v4242
  %v4281 = vpack.c.b16 %v4245, %v4243
  %v4282 = vpack.c.b16 %v4248, %v4246
  %v4283 = vpack.c.b16 %v4249, %v4247
  %v4284 = vpack.c.b16 %v4252, %v4250
  %v4285 = vpack.c.b16 %v4253, %v4251
  %v4286 = vpack.c.b16 %v4256, %v4254
  %v4287 = vpack.c.b16 %v4257, %v4255
  %v4288 = vpack.c.b16 %v4260, %v4258
  %v4289 = vpack.c.b16 %v4261, %v4259
  %v4290 = vpack.c.b16 %v4264, %v4262
  %v4291 = vpack.c.b16 %v4265, %v4263
  %v4292 = vpack.c.b16 %v4268, %v4266
  %v4293 = vpack.c.b16 %v4269, %v4267
  %v4294 = vpack.c.b16 %v4270, %v4270
  %v4295 = vpack.c.b16 %v4271, %v4271
  %v4319 = vsel %vm123, %v4177, 0
  %v4322 = vsel %vm123, %v4179, 0
  %v4325 = vsel %vm991, %v4294, 0
  %v4328 = vsel %vm991, %v4295, 0
  %4330 = vmatprep.subr.bf16.mxu0 %v4273
  %4331 = vmatpush1.bf16.msra.mxu0 %v4272
  %4332 = vmatprep.subr.bf16.mxu0 %v4275
  %4333 = vmatpush1.bf16.msra.mxu0 %v4274
  %4334 = vmatprep.subr.bf16.mxu0 %v4277
  %4335 = vmatpush1.bf16.msra.mxu0 %v4276
  %4336 = vmatprep.subr.bf16.mxu0 %v4279
  %4337 = vmatpush1.bf16.msra.mxu0 %v4278
  %4338 = vmatprep.subr.bf16.mxu0 %v4281
  %4339 = vmatpush1.bf16.msra.mxu0 %v4280
  %4340 = vmatprep.subr.bf16.mxu0 %v4283
  %4341 = vmatpush1.bf16.msra.mxu0 %v4282
  %4342 = vmatprep.subr.bf16.mxu0 %v4285
  %4343 = vmatpush1.bf16.msra.mxu0 %v4284
  %4344 = vmatprep.subr.bf16.mxu0 %v4287
  %4345 = vmatpush1.bf16.msra.mxu0 %v4286
  %4346 = vmatprep.subr.bf16.mxu0 %v4289
  %4347 = vmatpush1.bf16.msra.mxu0 %v4288
  %4348 = vmatprep.subr.bf16.mxu0 %v4291
  %4349 = vmatpush1.bf16.msra.mxu0 %v4290
  %4350 = vmatprep.subr.bf16.mxu0 %v4293
  %4351 = vmatpush1.bf16.msra.mxu0 %v4292
  %4352 = vmatprep.subr.bf16.mxu0 %v4328
  %4353 = vmatpush1.bf16.msra.mxu0 %v4325
  %4354 = vmatprep.subr.bf16.mxu0 0
  %4355 = vmatpush1.bf16.msra.mxu0 0
  %4356 = vmatprep.subr.bf16.mxu0 0
  %4357 = vmatpush1.bf16.msra.mxu0 0
  %4358 = vmatprep.subr.bf16.mxu0 0
  %4359 = vmatpush1.bf16.msra.mxu0 0
  %4360 = vmatprep.subr.bf16.mxu0 0
  %4361 = vmatpush1.bf16.msra.mxu0 0
  %4362 = vmatprep.mubr.bf16.mxu0 %v4319
  %4363 = vmatmul.mubr.bf16.gmra.mrb[0].mxu0 %v4176
  %v4364 = vpop.f32.mrb[0].mxu0
  %v4365 = vadd.f32 0.0, %v4364
  %v4366 = vpop.f32.mrb[0].mxu0
  %v4367 = vadd.f32 0.0, %v4366
  %v4368 = vpop.f32.mrb[0].mxu0
  %v4369 = vadd.f32 0.0, %v4368
  %v4370 = vpop.f32.mrb[0].mxu0
  %v4371 = vadd.f32 0.0, %v4370
  %4372 = vmatprep.mubr.bf16.mxu0 %v4322
  %4373 = vmatmul.mubr.bf16.gmra.mrb[0].mxu0 %v4178
  %v4374 = vpop.f32.mrb[0].mxu0
  %v4375 = vadd.f32 0.0, %v4374
  %v4376 = vpop.f32.mrb[0].mxu0
  %v4377 = vadd.f32 0.0, %v4376
  %v4378 = vpop.f32.mrb[0].mxu0
  %v4379 = vadd.f32 0.0, %v4378
  %v4380 = vpop.f32.mrb[0].mxu0
  %v4381 = vadd.f32 0.0, %v4380
  %4382 = vdwg.mxu0
  %v4383 = vadd.f32 %v4168, %v4365
  %v4384 = vadd.f32 %v4169, %v4367
  %v4385 = vadd.f32 %v4170, %v4369
  %v4386 = vadd.f32 %v4171, %v4371
  %v4387 = vadd.f32 %v4172, %v4375
  %v4388 = vadd.f32 %v4173, %v4377
  %v4389 = vadd.f32 %v4174, %v4379
  %v4390 = vadd.f32 %v4175, %v4381
  %v4391 = vld [vmem:[%s3498 + $0x80] sm:$0xff]
  %v4392 = vld [vmem:[%s3498 + $0x88] sm:$0xff]
  %v4393 = vld [vmem:[%s3498 + $0x90] sm:$0xff]
  %v4394 = vld [vmem:[%s3498 + $0x98] sm:$0xff]
  %v4395 = vld [vmem:[%s1711] sm:$0xff]
  %v4396 = vld [vmem:[%s1711 + $0x8] sm:$0xff]
  %v4397 = vld [vmem:[%s1711 + $0x10] sm:$0xff]
  %v4398 = vld [vmem:[%s1711 + $0x18] sm:$0xff]
  %v4399 = vld [vmem:[%s1711 + $0x20] sm:$0xff]
  %v4400 = vld [vmem:[%s1711 + $0x28] sm:$0xff]
  %v4401 = vld [vmem:[%s1711 + $0x30] sm:$0xff]
  %v4402 = vld [vmem:[%s1711 + $0x38] sm:$0xff]
  %v4403 = vld [vmem:[%s1711 + $0x40] sm:$0xff]
  %v4404 = vld [vmem:[%s1711 + $0x48] sm:$0xff]
  %v4405 = vld [vmem:[%s1711 + $0x50] sm:$0xff]
  %v4406 = vld [vmem:[%s1711 + $0x58] sm:$0xff]
  %v4407 = vld [vmem:[%s1711 + $0x60] sm:$0xff]
  %v4408 = vld [vmem:[%s1711 + $0x68] sm:$0xff]
  %v4409 = vld [vmem:[%s1711 + $0x70] sm:$0xff]
  %v4410 = vld [vmem:[%s1711 + $0x78] sm:$0xff]
  %v4411 = vld [vmem:[%s1711 + $0x80] sm:$0xff]
  %v4412 = vld [vmem:[%s1711 + $0x88] sm:$0xff]
  %v4413 = vld [vmem:[%s1711 + $0x90] sm:$0xff]
  %v4414 = vld [vmem:[%s1711 + $0x98] sm:$0xff]
  %v4415 = vld [vmem:[%s1711 + $0xa0] sm:$0xff]
  %v4416 = vld [vmem:[%s1711 + $0xa8] sm:$0xff]
  %v4417 = vld [vmem:[%s1711 + $0xb0] sm:$0x33]
  %v4441 = vunpack.c.l.b16 %v4395
  %v4442 = vunpack.c.h.b16 %v4395
  %v4443 = vunpack.c.l.b16 %v4396
  %v4444 = vunpack.c.h.b16 %v4396
  %v4445 = vunpack.c.l.b16 %v4397
  %v4446 = vunpack.c.h.b16 %v4397
  %v4447 = vunpack.c.l.b16 %v4398
  %v4448 = vunpack.c.h.b16 %v4398
  %v4449 = vunpack.c.l.b16 %v4399
  %v4450 = vunpack.c.h.b16 %v4399
  %v4451 = vunpack.c.l.b16 %v4400
  %v4452 = vunpack.c.h.b16 %v4400
  %v4453 = vunpack.c.l.b16 %v4401
  %v4454 = vunpack.c.h.b16 %v4401
  %v4455 = vunpack.c.l.b16 %v4402
  %v4456 = vunpack.c.h.b16 %v4402
  %v4457 = vunpack.c.l.b16 %v4403
  %v4458 = vunpack.c.h.b16 %v4403
  %v4459 = vunpack.c.l.b16 %v4404
  %v4460 = vunpack.c.h.b16 %v4404
  %v4461 = vunpack.c.l.b16 %v4405
  %v4462 = vunpack.c.h.b16 %v4405
  %v4463 = vunpack.c.l.b16 %v4406
  %v4464 = vunpack.c.h.b16 %v4406
  %v4465 = vunpack.c.l.b16 %v4407
  %v4466 = vunpack.c.h.b16 %v4407
  %v4467 = vunpack.c.l.b16 %v4408
  %v4468 = vunpack.c.h.b16 %v4408
  %v4469 = vunpack.c.l.b16 %v4409
  %v4470 = vunpack.c.h.b16 %v4409
  %v4471 = vunpack.c.l.b16 %v4410
  %v4472 = vunpack.c.h.b16 %v4410
  %v4473 = vunpack.c.l.b16 %v4411
  %v4474 = vunpack.c.h.b16 %v4411
  %v4475 = vunpack.c.l.b16 %v4412
  %v4476 = vunpack.c.h.b16 %v4412
  %v4477 = vunpack.c.l.b16 %v4413
  %v4478 = vunpack.c.h.b16 %v4413
  %v4479 = vunpack.c.l.b16 %v4414
  %v4480 = vunpack.c.h.b16 %v4414
  %v4481 = vunpack.c.l.b16 %v4415
  %v4482 = vunpack.c.h.b16 %v4415
  %v4483 = vunpack.c.l.b16 %v4416
  %v4484 = vunpack.c.h.b16 %v4416
  %v4485 = vunpack.c.l.b16 %v4417
  %v4486 = vunpack.c.h.b16 %v4417
  %v4487 = vpack.c.b16 %v4443, %v4441
  %v4488 = vpack.c.b16 %v4444, %v4442
  %v4489 = vpack.c.b16 %v4447, %v4445
  %v4490 = vpack.c.b16 %v4448, %v4446
  %v4491 = vpack.c.b16 %v4451, %v4449
  %v4492 = vpack.c.b16 %v4452, %v4450
  %v4493 = vpack.c.b16 %v4455, %v4453
  %v4494 = vpack.c.b16 %v4456, %v4454
  %v4495 = vpack.c.b16 %v4459, %v4457
  %v4496 = vpack.c.b16 %v4460, %v4458
  %v4497 = vpack.c.b16 %v4463, %v4461
  %v4498 = vpack.c.b16 %v4464, %v4462
  %v4499 = vpack.c.b16 %v4467, %v4465
  %v4500 = vpack.c.b16 %v4468, %v4466
  %v4501 = vpack.c.b16 %v4471, %v4469
  %v4502 = vpack.c.b16 %v4472, %v4470
  %v4503 = vpack.c.b16 %v4475, %v4473
  %v4504 = vpack.c.b16 %v4476, %v4474
  %v4505 = vpack.c.b16 %v4479, %v4477
  %v4506 = vpack.c.b16 %v4480, %v4478
  %v4507 = vpack.c.b16 %v4483, %v4481
  %v4508 = vpack.c.b16 %v4484, %v4482
  %v4509 = vpack.c.b16 %v4485, %v4485
  %v4510 = vpack.c.b16 %v4486, %v4486
  %v4534 = vsel %vm123, %v4392, 0
  %v4537 = vsel %vm123, %v4394, 0
  %v4540 = vsel %vm991, %v4509, 0
  %v4543 = vsel %vm991, %v4510, 0
  %4545 = vmatprep.subr.bf16.mxu0 %v4488
  %4546 = vmatpush1.bf16.msra.mxu0 %v4487
  %4547 = vmatprep.subr.bf16.mxu0 %v4490
  %4548 = vmatpush1.bf16.msra.mxu0 %v4489
  %4549 = vmatprep.subr.bf16.mxu0 %v4492
  %4550 = vmatpush1.bf16.msra.mxu0 %v4491
  %4551 = vmatprep.subr.bf16.mxu0 %v4494
  %4552 = vmatpush1.bf16.msra.mxu0 %v4493
  %4553 = vmatprep.subr.bf16.mxu0 %v4496
  %4554 = vmatpush1.bf16.msra.mxu0 %v4495
  %4555 = vmatprep.subr.bf16.mxu0 %v4498
  %4556 = vmatpush1.bf16.msra.mxu0 %v4497
  %4557 = vmatprep.subr.bf16.mxu0 %v4500
  %4558 = vmatpush1.bf16.msra.mxu0 %v4499
  %4559 = vmatprep.subr.bf16.mxu0 %v4502
  %4560 = vmatpush1.bf16.msra.mxu0 %v4501
  %4561 = vmatprep.subr.bf16.mxu0 %v4504
  %4562 = vmatpush1.bf16.msra.mxu0 %v4503
  %4563 = vmatprep.subr.bf16.mxu0 %v4506
  %4564 = vmatpush1.bf16.msra.mxu0 %v4505
  %4565 = vmatprep.subr.bf16.mxu0 %v4508
  %4566 = vmatpush1.bf16.msra.mxu0 %v4507
  %4567 = vmatprep.subr.bf16.mxu0 %v4543
  %4568 = vmatpush1.bf16.msra.mxu0 %v4540
  %4569 = vmatprep.subr.bf16.mxu0 0
  %4570 = vmatpush1.bf16.msra.mxu0 0
  %4571 = vmatprep.subr.bf16.mxu0 0
  %4572 = vmatpush1.bf16.msra.mxu0 0
  %4573 = vmatprep.subr.bf16.mxu0 0
  %4574 = vmatpush1.bf16.msra.mxu0 0
  %4575 = vmatprep.subr.bf16.mxu0 0
  %4576 = vmatpush1.bf16.msra.mxu0 0
  %4577 = vmatprep.mubr.bf16.mxu0 %v4534
  %4578 = vmatmul.mubr.bf16.gmra.mrb[0].mxu0 %v4391
  %v4579 = vpop.f32.mrb[0].mxu0
  %v4580 = vadd.f32 0.0, %v4579
  %v4581 = vpop.f32.mrb[0].mxu0
  %v4582 = vadd.f32 0.0, %v4581
  %v4583 = vpop.f32.mrb[0].mxu0
  %v4584 = vadd.f32 0.0, %v4583
  %v4585 = vpop.f32.mrb[0].mxu0
  %v4586 = vadd.f32 0.0, %v4585
  %4587 = vmatprep.mubr.bf16.mxu0 %v4537
  %4588 = vmatmul.mubr.bf16.gmra.mrb[0].mxu0 %v4393
  %v4589 = vpop.f32.mrb[0].mxu0
  %v4590 = vadd.f32 0.0, %v4589
  %v4591 = vpop.f32.mrb[0].mxu0
  %v4592 = vadd.f32 0.0, %v4591
  %v4593 = vpop.f32.mrb[0].mxu0
  %v4594 = vadd.f32 0.0, %v4593
  %v4595 = vpop.f32.mrb[0].mxu0
  %v4596 = vadd.f32 0.0, %v4595
  %4597 = vdwg.mxu0
  %v4598 = vadd.f32 %v4383, %v4580
  %v4599 = vadd.f32 %v4384, %v4582
  %v4600 = vadd.f32 %v4385, %v4584
  %v4601 = vadd.f32 %v4386, %v4586
  %v4602 = vadd.f32 %v4387, %v4590
  %v4603 = vadd.f32 %v4388, %v4592
  %v4604 = vadd.f32 %v4389, %v4594
  %v4605 = vadd.f32 %v4390, %v4596
  %v4606 = vpack.c.bf16 %v4600, %v4598
  %v4607 = vpack.c.bf16 %v4601, %v4599
  %v4608 = vpack.c.bf16 %v4604, %v4602
  %v4609 = vpack.c.bf16 %v4605, %v4603
  %v4610 = vld [vmem:[%s5] sm:$0xff]
  %v4611 = vld [vmem:[%s5 + $0x8] sm:$0xff]
  %v4612 = vld [vmem:[%s5 + $0x10] sm:$0xff]
  %v4613 = vld [vmem:[%s5 + $0x18] sm:$0xff]
  %v4614 = vld [vmem:[%s5 + $0x20] sm:$0xff]
  %v4615 = vld [vmem:[%s5 + $0x28] sm:$0xff]
  %v4616 = vld [vmem:[%s5 + $0x30] sm:$0xff]
  %v4617 = vld [vmem:[%s5 + $0x38] sm:$0xff]
  %v4618 = vld [vmem:[%s5 + $0x40] sm:$0xff]
  %v4619 = vld [vmem:[%s5 + $0x48] sm:$0xff]
  %v4620 = vld [vmem:[%s5 + $0x50] sm:$0xff]
  %v4621 = vld [vmem:[%s5 + $0x58] sm:$0xff]
  %v4622 = vld [vmem:[%s5 + $0x60] sm:$0xff]
  %v4623 = vld [vmem:[%s5 + $0x68] sm:$0xff]
  %v4624 = vld [vmem:[%s5 + $0x70] sm:$0xff]
  %v4625 = vld [vmem:[%s5 + $0x78] sm:$0xff]
  %v4626 = vld [vmem:[%s5 + $0x80] sm:$0xff]
  %v4627 = vld [vmem:[%s5 + $0x88] sm:$0xff]
  %v4628 = vld [vmem:[%s5 + $0x90] sm:$0xff]
  %v4629 = vld [vmem:[%s5 + $0x98] sm:$0xff]
  %v4630 = vld [vmem:[%s5 + $0xa0] sm:$0xff]
  %v4631 = vld [vmem:[%s5 + $0xa8] sm:$0xff]
  %v4632 = vld [vmem:[%s5 + $0xb0] sm:$0xff]
  %v4633 = vld [vmem:[%s5 + $0xb8] sm:$0xff]
  %v4658 = vunpack.c.l.b16 %v4610
  %v4659 = vunpack.c.h.b16 %v4610
  %v4660 = vunpack.c.l.b16 %v4611
  %v4661 = vunpack.c.h.b16 %v4611
  %v4662 = vunpack.c.l.b16 %v4612
  %v4663 = vunpack.c.h.b16 %v4612
  %v4664 = vunpack.c.l.b16 %v4613
  %v4665 = vunpack.c.h.b16 %v4613
  %v4666 = vunpack.c.l.b16 %v4614
  %v4667 = vunpack.c.h.b16 %v4614
  %v4668 = vunpack.c.l.b16 %v4615
  %v4669 = vunpack.c.h.b16 %v4615
  %v4670 = vunpack.c.l.b16 %v4616
  %v4671 = vunpack.c.h.b16 %v4616
  %v4672 = vunpack.c.l.b16 %v4617
  %v4673 = vunpack.c.h.b16 %v4617
  %v4674 = vunpack.c.l.b16 %v4618
  %v4675 = vunpack.c.h.b16 %v4618
  %v4676 = vunpack.c.l.b16 %v4619
  %v4677 = vunpack.c.h.b16 %v4619
  %v4678 = vunpack.c.l.b16 %v4620
  %v4679 = vunpack.c.h.b16 %v4620
  %v4680 = vunpack.c.l.b16 %v4621
  %v4681 = vunpack.c.h.b16 %v4621
  %v4682 = vunpack.c.l.b16 %v4622
  %v4683 = vunpack.c.h.b16 %v4622
  %v4684 = vunpack.c.l.b16 %v4623
  %v4685 = vunpack.c.h.b16 %v4623
  %v4686 = vunpack.c.l.b16 %v4624
  %v4687 = vunpack.c.h.b16 %v4624
  %v4688 = vunpack.c.l.b16 %v4625
  %v4689 = vunpack.c.h.b16 %v4625
  %v4690 = vunpack.c.l.b16 %v4626
  %v4691 = vunpack.c.h.b16 %v4626
  %v4692 = vunpack.c.l.b16 %v4627
  %v4693 = vunpack.c.h.b16 %v4627
  %v4694 = vunpack.c.l.b16 %v4628
  %v4695 = vunpack.c.h.b16 %v4628
  %v4696 = vunpack.c.l.b16 %v4629
  %v4697 = vunpack.c.h.b16 %v4629
  %v4698 = vunpack.c.l.b16 %v4630
  %v4699 = vunpack.c.h.b16 %v4630
  %v4700 = vunpack.c.l.b16 %v4631
  %v4701 = vunpack.c.h.b16 %v4631
  %v4702 = vunpack.c.l.b16 %v4632
  %v4703 = vunpack.c.h.b16 %v4632
  %v4704 = vunpack.c.l.b16 %v4633
  %v4705 = vunpack.c.h.b16 %v4633
  %v4706 = vpack.c.b16 %v4660, %v4658
  %v4707 = vpack.c.b16 %v4661, %v4659
  %v4708 = vpack.c.b16 %v4664, %v4662
  %v4709 = vpack.c.b16 %v4665, %v4663
  %v4710 = vpack.c.b16 %v4668, %v4666
  %v4711 = vpack.c.b16 %v4669, %v4667
  %v4712 = vpack.c.b16 %v4672, %v4670
  %v4713 = vpack.c.b16 %v4673, %v4671
  %v4714 = vpack.c.b16 %v4676, %v4674
  %v4715 = vpack.c.b16 %v4677, %v4675
  %v4716 = vpack.c.b16 %v4680, %v4678
  %v4717 = vpack.c.b16 %v4681, %v4679
  %v4718 = vpack.c.b16 %v4684, %v4682
  %v4719 = vpack.c.b16 %v4685, %v4683
  %v4720 = vpack.c.b16 %v4688, %v4686
  %v4721 = vpack.c.b16 %v4689, %v4687
  %v4722 = vpack.c.b16 %v4692, %v4690
  %v4723 = vpack.c.b16 %v4693, %v4691
  %v4724 = vpack.c.b16 %v4696, %v4694
  %v4725 = vpack.c.b16 %v4697, %v4695
  %v4726 = vpack.c.b16 %v4700, %v4698
  %v4727 = vpack.c.b16 %v4701, %v4699
  %v4728 = vpack.c.b16 %v4704, %v4702
  %v4729 = vpack.c.b16 %v4705, %v4703
  %v4755 = vsel %vm2071, %v4607, 0
  %v4758 = vsel %vm2071, %v4609, 0
  %4760 = vmatprep.subr.bf16.mxu0 %v4707
  %4761 = vmatpush1.bf16.msra.mxu0 %v4706
  %4762 = vmatprep.subr.bf16.mxu0 %v4709
  %4763 = vmatpush1.bf16.msra.mxu0 %v4708
  %4764 = vmatprep.subr.bf16.mxu0 %v4711
  %4765 = vmatpush1.bf16.msra.mxu0 %v4710
  %4766 = vmatprep.subr.bf16.mxu0 %v4713
  %4767 = vmatpush1.bf16.msra.mxu0 %v4712
  %4768 = vmatprep.subr.bf16.mxu0 %v4715
  %4769 = vmatpush1.bf16.msra.mxu0 %v4714
  %4770 = vmatprep.subr.bf16.mxu0 %v4717
  %4771 = vmatpush1.bf16.msra.mxu0 %v4716
  %4772 = vmatprep.subr.bf16.mxu0 %v4719
  %4773 = vmatpush1.bf16.msra.mxu0 %v4718
  %4774 = vmatprep.subr.bf16.mxu0 %v4721
  %4775 = vmatpush1.bf16.msra.mxu0 %v4720
  %4776 = vmatprep.subr.bf16.mxu0 %v4723
  %4777 = vmatpush1.bf16.msra.mxu0 %v4722
  %4778 = vmatprep.subr.bf16.mxu0 %v4725
  %4779 = vmatpush1.bf16.msra.mxu0 %v4724
  %4780 = vmatprep.subr.bf16.mxu0 %v4727
  %4781 = vmatpush1.bf16.msra.mxu0 %v4726
  %4782 = vmatprep.subr.bf16.mxu0 %v4729
  %4783 = vmatpush1.bf16.msra.mxu0 %v4728
  %4784 = vmatprep.subr.bf16.mxu0 0
  %4785 = vmatpush1.bf16.msra.mxu0 0
  %4786 = vmatprep.subr.bf16.mxu0 0
  %4787 = vmatpush1.bf16.msra.mxu0 0
  %4788 = vmatprep.subr.bf16.mxu0 0
  %4789 = vmatpush1.bf16.msra.mxu0 0
  %4790 = vmatprep.subr.bf16.mxu0 0
  %4791 = vmatpush1.bf16.msra.mxu0 0
  %4792 = vmatprep.mubr.bf16.mxu0 %v4755
  %4793 = vmatmul.mubr.bf16.gmra.mrb[0].mxu0 %v4606
  %v4794 = vpop.f32.mrb[0].mxu0
  %v4795 = vadd.f32 0.0, %v4794
  %v4796 = vpop.f32.mrb[0].mxu0
  %v4797 = vadd.f32 0.0, %v4796
  %v4798 = vpop.f32.mrb[0].mxu0
  %v4799 = vadd.f32 0.0, %v4798
  %v4800 = vpop.f32.mrb[0].mxu0
  %v4801 = vadd.f32 0.0, %v4800
  %4802 = vmatprep.mubr.bf16.mxu0 %v4758
  %4803 = vmatmul.mubr.bf16.gmra.mrb[0].mxu0 %v4608
  %v4804 = vpop.f32.mrb[0].mxu0
  %v4805 = vadd.f32 0.0, %v4804
  %v4806 = vpop.f32.mrb[0].mxu0
  %v4807 = vadd.f32 0.0, %v4806
  %v4808 = vpop.f32.mrb[0].mxu0
  %v4809 = vadd.f32 0.0, %v4808
  %v4810 = vpop.f32.mrb[0].mxu0
  %v4811 = vadd.f32 0.0, %v4810
  %4812 = vdwg.mxu0
  %v4813 = vpack.c.bf16 %v4799, %v4795
  %v4814 = vpack.c.bf16 %v4801, %v4797
  %v4815 = vpack.c.bf16 %v4809, %v4805
  %v4816 = vpack.c.bf16 %v4811, %v4807
  %s4817 = scalar_lea.vmem [#allocation4], 96
  %4818 = vst [vmem:[%s4817] sm:$0xff] %v4813
  %4819 = vst.msk [vmem:[%s4817 + $0x8] sm:$0xff] %vm2136, %v4814
  %4820 = vst [vmem:[%s4817 + $0x10] sm:$0xff] %v4815
  %4821 = vst.msk [vmem:[%s4817 + $0x18] sm:$0xff] %vm2136, %v4816
  %v4822 = vld [vmem:[%s2140] sm:$0xff]
  %v4823 = vld [vmem:[%s2140 + $0x8] sm:$0xff]
  %v4824 = vld [vmem:[%s2140 + $0x10] sm:$0xff]
  %v4825 = vld [vmem:[%s2140 + $0x18] sm:$0xff]
  %v4826 = vld [vmem:[%s2140 + $0x20] sm:$0xff]
  %v4827 = vld [vmem:[%s2140 + $0x28] sm:$0xff]
  %v4828 = vld [vmem:[%s2140 + $0x30] sm:$0xff]
  %v4829 = vld [vmem:[%s2140 + $0x38] sm:$0xff]
  %v4830 = vld [vmem:[%s2140 + $0x40] sm:$0xff]
  %v4831 = vld [vmem:[%s2140 + $0x48] sm:$0xff]
  %v4832 = vld [vmem:[%s2140 + $0x50] sm:$0xff]
  %v4833 = vld [vmem:[%s2140 + $0x58] sm:$0xff]
  %v4834 = vld [vmem:[%s2140 + $0x60] sm:$0xff]
  %v4835 = vld [vmem:[%s2140 + $0x68] sm:$0xff]
  %v4836 = vld [vmem:[%s2140 + $0x70] sm:$0xff]
  %v4837 = vld [vmem:[%s2140 + $0x78] sm:$0xff]
  %v4838 = vld [vmem:[%s2140 + $0x80] sm:$0xff]
  %v4839 = vld [vmem:[%s2140 + $0x88] sm:$0xff]
  %v4840 = vld [vmem:[%s2140 + $0x90] sm:$0xff]
  %v4841 = vld [vmem:[%s2140 + $0x98] sm:$0xff]
  %v4842 = vld [vmem:[%s2140 + $0xa0] sm:$0xff]
  %v4843 = vld [vmem:[%s2140 + $0xa8] sm:$0xff]
  %v4844 = vld [vmem:[%s2140 + $0xb0] sm:$0xff]
  %v4845 = vld [vmem:[%s2140 + $0xb8] sm:$0xff]
  %v4870 = vunpack.c.l.b16 %v4822
  %v4871 = vunpack.c.h.b16 %v4822
  %v4872 = vunpack.c.l.b16 %v4823
  %v4873 = vunpack.c.h.b16 %v4823
  %v4874 = vunpack.c.l.b16 %v4824
  %v4875 = vunpack.c.h.b16 %v4824
  %v4876 = vunpack.c.l.b16 %v4825
  %v4877 = vunpack.c.h.b16 %v4825
  %v4878 = vunpack.c.l.b16 %v4826
  %v4879 = vunpack.c.h.b16 %v4826
  %v4880 = vunpack.c.l.b16 %v4827
  %v4881 = vunpack.c.h.b16 %v4827
  %v4882 = vunpack.c.l.b16 %v4828
  %v4883 = vunpack.c.h.b16 %v4828
  %v4884 = vunpack.c.l.b16 %v4829
  %v4885 = vunpack.c.h.b16 %v4829
  %v4886 = vunpack.c.l.b16 %v4830
  %v4887 = vunpack.c.h.b16 %v4830
  %v4888 = vunpack.c.l.b16 %v4831
  %v4889 = vunpack.c.h.b16 %v4831
  %v4890 = vunpack.c.l.b16 %v4832
  %v4891 = vunpack.c.h.b16 %v4832
  %v4892 = vunpack.c.l.b16 %v4833
  %v4893 = vunpack.c.h.b16 %v4833
  %v4894 = vunpack.c.l.b16 %v4834
  %v4895 = vunpack.c.h.b16 %v4834
  %v4896 = vunpack.c.l.b16 %v4835
  %v4897 = vunpack.c.h.b16 %v4835
  %v4898 = vunpack.c.l.b16 %v4836
  %v4899 = vunpack.c.h.b16 %v4836
  %v4900 = vunpack.c.l.b16 %v4837
  %v4901 = vunpack.c.h.b16 %v4837
  %v4902 = vunpack.c.l.b16 %v4838
  %v4903 = vunpack.c.h.b16 %v4838
  %v4904 = vunpack.c.l.b16 %v4839
  %v4905 = vunpack.c.h.b16 %v4839
  %v4906 = vunpack.c.l.b16 %v4840
  %v4907 = vunpack.c.h.b16 %v4840
  %v4908 = vunpack.c.l.b16 %v4841
  %v4909 = vunpack.c.h.b16 %v4841
  %v4910 = vunpack.c.l.b16 %v4842
  %v4911 = vunpack.c.h.b16 %v4842
  %v4912 = vunpack.c.l.b16 %v4843
  %v4913 = vunpack.c.h.b16 %v4843
  %v4914 = vunpack.c.l.b16 %v4844
  %v4915 = vunpack.c.h.b16 %v4844
  %v4916 = vunpack.c.l.b16 %v4845
  %v4917 = vunpack.c.h.b16 %v4845
  %v4918 = vpack.c.b16 %v4872, %v4870
  %v4919 = vpack.c.b16 %v4873, %v4871
  %v4920 = vpack.c.b16 %v4876, %v4874
  %v4921 = vpack.c.b16 %v4877, %v4875
  %v4922 = vpack.c.b16 %v4880, %v4878
  %v4923 = vpack.c.b16 %v4881, %v4879
  %v4924 = vpack.c.b16 %v4884, %v4882
  %v4925 = vpack.c.b16 %v4885, %v4883
  %v4926 = vpack.c.b16 %v4888, %v4886
  %v4927 = vpack.c.b16 %v4889, %v4887
  %v4928 = vpack.c.b16 %v4892, %v4890
  %v4929 = vpack.c.b16 %v4893, %v4891
  %v4930 = vpack.c.b16 %v4896, %v4894
  %v4931 = vpack.c.b16 %v4897, %v4895
  %v4932 = vpack.c.b16 %v4900, %v4898
  %v4933 = vpack.c.b16 %v4901, %v4899
  %v4934 = vpack.c.b16 %v4904, %v4902
  %v4935 = vpack.c.b16 %v4905, %v4903
  %v4936 = vpack.c.b16 %v4908, %v4906
  %v4937 = vpack.c.b16 %v4909, %v4907
  %v4938 = vpack.c.b16 %v4912, %v4910
  %v4939 = vpack.c.b16 %v4913, %v4911
  %v4940 = vpack.c.b16 %v4916, %v4914
  %v4941 = vpack.c.b16 %v4917, %v4915
  %4966 = vmatprep.subr.bf16.mxu0 %v4919
  %4967 = vmatpush1.bf16.msra.mxu0 %v4918
  %4968 = vmatprep.subr.bf16.mxu0 %v4921
  %4969 = vmatpush1.bf16.msra.mxu0 %v4920
  %4970 = vmatprep.subr.bf16.mxu0 %v4923
  %4971 = vmatpush1.bf16.msra.mxu0 %v4922
  %4972 = vmatprep.subr.bf16.mxu0 %v4925
  %4973 = vmatpush1.bf16.msra.mxu0 %v4924
  %4974 = vmatprep.subr.bf16.mxu0 %v4927
  %4975 = vmatpush1.bf16.msra.mxu0 %v4926
  %4976 = vmatprep.subr.bf16.mxu0 %v4929
  %4977 = vmatpush1.bf16.msra.mxu0 %v4928
  %4978 = vmatprep.subr.bf16.mxu0 %v4931
  %4979 = vmatpush1.bf16.msra.mxu0 %v4930
  %4980 = vmatprep.subr.bf16.mxu0 %v4933
  %4981 = vmatpush1.bf16.msra.mxu0 %v4932
  %4982 = vmatprep.subr.bf16.mxu0 %v4935
  %4983 = vmatpush1.bf16.msra.mxu0 %v4934
  %4984 = vmatprep.subr.bf16.mxu0 %v4937
  %4985 = vmatpush1.bf16.msra.mxu0 %v4936
  %4986 = vmatprep.subr.bf16.mxu0 %v4939
  %4987 = vmatpush1.bf16.msra.mxu0 %v4938
  %4988 = vmatprep.subr.bf16.mxu0 %v4941
  %4989 = vmatpush1.bf16.msra.mxu0 %v4940
  %4990 = vmatprep.subr.bf16.mxu0 0
  %4991 = vmatpush1.bf16.msra.mxu0 0
  %4992 = vmatprep.subr.bf16.mxu0 0
  %4993 = vmatpush1.bf16.msra.mxu0 0
  %4994 = vmatprep.subr.bf16.mxu0 0
  %4995 = vmatpush1.bf16.msra.mxu0 0
  %4996 = vmatprep.subr.bf16.mxu0 0
  %4997 = vmatpush1.bf16.msra.mxu0 0
  %4998 = vmatprep.mubr.bf16.mxu0 %v4755
  %4999 = vmatmul.mubr.bf16.gmra.mrb[0].mxu0 %v4606
  %v5000 = vpop.f32.mrb[0].mxu0
  %v5001 = vadd.f32 0.0, %v5000
  %v5002 = vpop.f32.mrb[0].mxu0
  %v5003 = vadd.f32 0.0, %v5002
  %v5004 = vpop.f32.mrb[0].mxu0
  %v5005 = vadd.f32 0.0, %v5004
  %v5006 = vpop.f32.mrb[0].mxu0
  %v5007 = vadd.f32 0.0, %v5006
  %5008 = vmatprep.mubr.bf16.mxu0 %v4758
  %5009 = vmatmul.mubr.bf16.gmra.mrb[0].mxu0 %v4608
  %v5010 = vpop.f32.mrb[0].mxu0
  %v5011 = vadd.f32 0.0, %v5010
  %v5012 = vpop.f32.mrb[0].mxu0
  %v5013 = vadd.f32 0.0, %v5012
  %v5014 = vpop.f32.mrb[0].mxu0
  %v5015 = vadd.f32 0.0, %v5014
  %v5016 = vpop.f32.mrb[0].mxu0
  %v5017 = vadd.f32 0.0, %v5016
  %5018 = vdwg.mxu0
  %v5019 = vpack.c.bf16 %v5005, %v5001
  %v5020 = vpack.c.bf16 %v5007, %v5003
  %v5021 = vpack.c.bf16 %v5015, %v5011
  %v5022 = vpack.c.bf16 %v5017, %v5013
  %5023 = vst [vmem:[%s4817 + $0x20] sm:$0xff] %v5019
  %5024 = vst.msk [vmem:[%s4817 + $0x28] sm:$0xff] %vm2136, %v5020
  %5025 = vst [vmem:[%s4817 + $0x30] sm:$0xff] %v5021
  %5026 = vst.msk [vmem:[%s4817 + $0x38] sm:$0xff] %vm2136, %v5022
  %v5027 = vld [vmem:[%s2346] sm:$0xff]
  %v5028 = vld [vmem:[%s2346 + $0x8] sm:$0xff]
  %v5029 = vld [vmem:[%s2346 + $0x10] sm:$0xff]
  %v5030 = vld [vmem:[%s2346 + $0x18] sm:$0xff]
  %v5031 = vld [vmem:[%s2346 + $0x20] sm:$0xff]
  %v5032 = vld [vmem:[%s2346 + $0x28] sm:$0xff]
  %v5033 = vld [vmem:[%s2346 + $0x30] sm:$0xff]
  %v5034 = vld [vmem:[%s2346 + $0x38] sm:$0xff]
  %v5035 = vld [vmem:[%s2346 + $0x40] sm:$0xff]
  %v5036 = vld [vmem:[%s2346 + $0x48] sm:$0xff]
  %v5037 = vld [vmem:[%s2346 + $0x50] sm:$0xff]
  %v5038 = vld [vmem:[%s2346 + $0x58] sm:$0xff]
  %v5039 = vld [vmem:[%s2346 + $0x60] sm:$0xff]
  %v5040 = vld [vmem:[%s2346 + $0x68] sm:$0xff]
  %v5041 = vld [vmem:[%s2346 + $0x70] sm:$0xff]
  %v5042 = vld [vmem:[%s2346 + $0x78] sm:$0xff]
  %v5043 = vld [vmem:[%s2346 + $0x80] sm:$0xff]
  %v5044 = vld [vmem:[%s2346 + $0x88] sm:$0xff]
  %v5045 = vld [vmem:[%s2346 + $0x90] sm:$0xff]
  %v5046 = vld [vmem:[%s2346 + $0x98] sm:$0xff]
  %v5047 = vld [vmem:[%s2346 + $0xa0] sm:$0xff]
  %v5048 = vld [vmem:[%s2346 + $0xa8] sm:$0xff]
  %v5049 = vld [vmem:[%s2346 + $0xb0] sm:$0xff]
  %v5050 = vld [vmem:[%s2346 + $0xb8] sm:$0xff]
  %v5075 = vunpack.c.l.b16 %v5027
  %v5076 = vunpack.c.h.b16 %v5027
  %v5077 = vunpack.c.l.b16 %v5028
  %v5078 = vunpack.c.h.b16 %v5028
  %v5079 = vunpack.c.l.b16 %v5029
  %v5080 = vunpack.c.h.b16 %v5029
  %v5081 = vunpack.c.l.b16 %v5030
  %v5082 = vunpack.c.h.b16 %v5030
  %v5083 = vunpack.c.l.b16 %v5031
  %v5084 = vunpack.c.h.b16 %v5031
  %v5085 = vunpack.c.l.b16 %v5032
  %v5086 = vunpack.c.h.b16 %v5032
  %v5087 = vunpack.c.l.b16 %v5033
  %v5088 = vunpack.c.h.b16 %v5033
  %v5089 = vunpack.c.l.b16 %v5034
  %v5090 = vunpack.c.h.b16 %v5034
  %v5091 = vunpack.c.l.b16 %v5035
  %v5092 = vunpack.c.h.b16 %v5035
  %v5093 = vunpack.c.l.b16 %v5036
  %v5094 = vunpack.c.h.b16 %v5036
  %v5095 = vunpack.c.l.b16 %v5037
  %v5096 = vunpack.c.h.b16 %v5037
  %v5097 = vunpack.c.l.b16 %v5038
  %v5098 = vunpack.c.h.b16 %v5038
  %v5099 = vunpack.c.l.b16 %v5039
  %v5100 = vunpack.c.h.b16 %v5039
  %v5101 = vunpack.c.l.b16 %v5040
  %v5102 = vunpack.c.h.b16 %v5040
  %v5103 = vunpack.c.l.b16 %v5041
  %v5104 = vunpack.c.h.b16 %v5041
  %v5105 = vunpack.c.l.b16 %v5042
  %v5106 = vunpack.c.h.b16 %v5042
  %v5107 = vunpack.c.l.b16 %v5043
  %v5108 = vunpack.c.h.b16 %v5043
  %v5109 = vunpack.c.l.b16 %v5044
  %v5110 = vunpack.c.h.b16 %v5044
  %v5111 = vunpack.c.l.b16 %v5045
  %v5112 = vunpack.c.h.b16 %v5045
  %v5113 = vunpack.c.l.b16 %v5046
  %v5114 = vunpack.c.h.b16 %v5046
  %v5115 = vunpack.c.l.b16 %v5047
  %v5116 = vunpack.c.h.b16 %v5047
  %v5117 = vunpack.c.l.b16 %v5048
  %v5118 = vunpack.c.h.b16 %v5048
  %v5119 = vunpack.c.l.b16 %v5049
  %v5120 = vunpack.c.h.b16 %v5049
  %v5121 = vunpack.c.l.b16 %v5050
  %v5122 = vunpack.c.h.b16 %v5050
  %v5123 = vpack.c.b16 %v5077, %v5075
  %v5124 = vpack.c.b16 %v5078, %v5076
  %v5125 = vpack.c.b16 %v5081, %v5079
  %v5126 = vpack.c.b16 %v5082, %v5080
  %v5127 = vpack.c.b16 %v5085, %v5083
  %v5128 = vpack.c.b16 %v5086, %v5084
  %v5129 = vpack.c.b16 %v5089, %v5087
  %v5130 = vpack.c.b16 %v5090, %v5088
  %v5131 = vpack.c.b16 %v5093, %v5091
  %v5132 = vpack.c.b16 %v5094, %v5092
  %v5133 = vpack.c.b16 %v5097, %v5095
  %v5134 = vpack.c.b16 %v5098, %v5096
  %v5135 = vpack.c.b16 %v5101, %v5099
  %v5136 = vpack.c.b16 %v5102, %v5100
  %v5137 = vpack.c.b16 %v5105, %v5103
  %v5138 = vpack.c.b16 %v5106, %v5104
  %v5139 = vpack.c.b16 %v5109, %v5107
  %v5140 = vpack.c.b16 %v5110, %v5108
  %v5141 = vpack.c.b16 %v5113, %v5111
  %v5142 = vpack.c.b16 %v5114, %v5112
  %v5143 = vpack.c.b16 %v5117, %v5115
  %v5144 = vpack.c.b16 %v5118, %v5116
  %v5145 = vpack.c.b16 %v5121, %v5119
  %v5146 = vpack.c.b16 %v5122, %v5120
  %5171 = vmatprep.subr.bf16.mxu0 %v5124
  %5172 = vmatpush1.bf16.msra.mxu0 %v5123
  %5173 = vmatprep.subr.bf16.mxu0 %v5126
  %5174 = vmatpush1.bf16.msra.mxu0 %v5125
  %5175 = vmatprep.subr.bf16.mxu0 %v5128
  %5176 = vmatpush1.bf16.msra.mxu0 %v5127
  %5177 = vmatprep.subr.bf16.mxu0 %v5130
  %5178 = vmatpush1.bf16.msra.mxu0 %v5129
  %5179 = vmatprep.subr.bf16.mxu0 %v5132
  %5180 = vmatpush1.bf16.msra.mxu0 %v5131
  %5181 = vmatprep.subr.bf16.mxu0 %v5134
  %5182 = vmatpush1.bf16.msra.mxu0 %v5133
  %5183 = vmatprep.subr.bf16.mxu0 %v5136
  %5184 = vmatpush1.bf16.msra.mxu0 %v5135
  %5185 = vmatprep.subr.bf16.mxu0 %v5138
  %5186 = vmatpush1.bf16.msra.mxu0 %v5137
  %5187 = vmatprep.subr.bf16.mxu0 %v5140
  %5188 = vmatpush1.bf16.msra.mxu0 %v5139
  %5189 = vmatprep.subr.bf16.mxu0 %v5142
  %5190 = vmatpush1.bf16.msra.mxu0 %v5141
  %5191 = vmatprep.subr.bf16.mxu0 %v5144
  %5192 = vmatpush1.bf16.msra.mxu0 %v5143
  %5193 = vmatprep.subr.bf16.mxu0 %v5146
  %5194 = vmatpush1.bf16.msra.mxu0 %v5145
  %5195 = vmatprep.subr.bf16.mxu0 0
  %5196 = vmatpush1.bf16.msra.mxu0 0
  %5197 = vmatprep.subr.bf16.mxu0 0
  %5198 = vmatpush1.bf16.msra.mxu0 0
  %5199 = vmatprep.subr.bf16.mxu0 0
  %5200 = vmatpush1.bf16.msra.mxu0 0
  %5201 = vmatprep.subr.bf16.mxu0 0
  %5202 = vmatpush1.bf16.msra.mxu0 0
  %5203 = vmatprep.mubr.bf16.mxu0 %v4755
  %5204 = vmatmul.mubr.bf16.gmra.mrb[0].mxu0 %v4606
  %v5205 = vpop.f32.mrb[0].mxu0
  %v5206 = vadd.f32 0.0, %v5205
  %v5207 = vpop.f32.mrb[0].mxu0
  %v5208 = vadd.f32 0.0, %v5207
  %v5209 = vpop.f32.mrb[0].mxu0
  %v5210 = vadd.f32 0.0, %v5209
  %v5211 = vpop.f32.mrb[0].mxu0
  %v5212 = vadd.f32 0.0, %v5211
  %5213 = vmatprep.mubr.bf16.mxu0 %v4758
  %5214 = vmatmul.mubr.bf16.gmra.mrb[0].mxu0 %v4608
  %v5215 = vpop.f32.mrb[0].mxu0
  %v5216 = vadd.f32 0.0, %v5215
  %v5217 = vpop.f32.mrb[0].mxu0
  %v5218 = vadd.f32 0.0, %v5217
  %v5219 = vpop.f32.mrb[0].mxu0
  %v5220 = vadd.f32 0.0, %v5219
  %v5221 = vpop.f32.mrb[0].mxu0
  %v5222 = vadd.f32 0.0, %v5221
  %5223 = vdwg.mxu0
  %v5224 = vpack.c.bf16 %v5210, %v5206
  %v5225 = vpack.c.bf16 %v5212, %v5208
  %v5226 = vpack.c.bf16 %v5220, %v5216
  %v5227 = vpack.c.bf16 %v5222, %v5218
  %5228 = vst [vmem:[%s4817 + $0x40] sm:$0xff] %v5224
  %5229 = vst.msk [vmem:[%s4817 + $0x48] sm:$0xff] %vm2136, %v5225
  %5230 = vst [vmem:[%s4817 + $0x50] sm:$0xff] %v5226
  %5231 = vst.msk [vmem:[%s4817 + $0x58] sm:$0xff] %vm2136, %v5227
  %v5232 = vld [vmem:[%s6] sm:$0xf]
  %v5233 = vld [vmem:[%s6 + $0x4] sm:$0xf]
  %v5234 = vld [vmem:[%s6 + $0x8] sm:$0xf]
  %v5235 = vld [vmem:[%s6 + $0xc] sm:$0xf]
  %v5236 = vld [vmem:[%s6 + $0x10] sm:$0xf]
  %v5237 = vld [vmem:[%s6 + $0x14] sm:$0xf]
  %v5238 = vld [vmem:[%s6 + $0x18] sm:$0xf]
  %v5239 = vld [vmem:[%s6 + $0x1c] sm:$0xf]
  %v5240 = vld [vmem:[%s6 + $0x20] sm:$0x1]
  %v5241 = vld [vmem:[%s4817] sm:$0xff]
  %v5242 = vld [vmem:[%s4817 + $0x8] sm:$0xff]
  %v5243 = vld [vmem:[%s4817 + $0x10] sm:$0xff]
  %v5244 = vld [vmem:[%s4817 + $0x18] sm:$0xff]
  %v5245 = vld [vmem:[%s4817 + $0x20] sm:$0xff]
  %v5246 = vld [vmem:[%s4817 + $0x28] sm:$0xff]
  %v5247 = vld [vmem:[%s4817 + $0x30] sm:$0xff]
  %v5248 = vld [vmem:[%s4817 + $0x38] sm:$0xff]
  %v5249 = vld [vmem:[%s4817 + $0x40] sm:$0xff]
  %v5250 = vld [vmem:[%s4817 + $0x48] sm:$0xff]
  %v5251 = vld [vmem:[%s4817 + $0x50] sm:$0xff]
  %v5252 = vld [vmem:[%s4817 + $0x58] sm:$0xff]
  %v5253 = vld [vmem:[%s7] sm:$0x3]
  %v5255 = vlaneseq
  %v5256 = vshrl.u32 %v5255, 7
  %v5257 = vsub.s32 0, %v5256
  %v5258 = vrot.slane %v5253, %v5257
  %v5259 = vlaneseq
  %v5260 = vshrl.u32 %v5259, 7
  %v5261 = vsub.s32 1, %v5260
  %v5262 = vrot.slane %v5253, %v5261
  %v5274 = vunpack.c.l.b16 %v5232
  %v5275 = vunpack.c.l.b16 %v5233
  %v5276 = vunpack.c.l.b16 %v5234
  %v5277 = vunpack.c.l.b16 %v5235
  %v5278 = vunpack.c.l.b16 %v5236
  %v5279 = vunpack.c.l.b16 %v5237
  %v5280 = vunpack.c.l.b16 %v5238
  %v5281 = vunpack.c.l.b16 %v5239
  %v5282 = vunpack.c.l.b16 %v5240
  %v5283 = vpack.c.b16 %v5275, %v5274
  %v5284 = vpack.c.b16 %v5277, %v5276
  %v5285 = vpack.c.b16 %v5279, %v5278
  %v5286 = vpack.c.b16 %v5281, %v5280
  %v5287 = vpack.c.b16 %v5282, %v5282
  %v5289 = vsel %vm627, %v5283, 0
  %v5292 = vsel %vm627, %v5284, 0
  %v5295 = vsel %vm627, %v5285, 0
  %v5298 = vsel %vm627, %v5286, 0
  %v5301 = vsel %vm627, %v5287, 0
  %5303 = vmatprep.subr.bf16.mxu0 %v5242
  %5304 = vmatpush1.bf16.msra.mxu0 %v5241
  %5305 = vmatprep.subr.bf16.mxu0 %v5244
  %5306 = vmatpush1.bf16.msra.mxu0 %v5243
  %5307 = vmatprep.subr.bf16.mxu0 %v5246
  %5308 = vmatpush1.bf16.msra.mxu0 %v5245
  %5309 = vmatprep.subr.bf16.mxu0 %v5248
  %5310 = vmatpush1.bf16.msra.mxu0 %v5247
  %5311 = vmatprep.subr.bf16.mxu0 %v5250
  %5312 = vmatpush1.bf16.msra.mxu0 %v5249
  %5313 = vmatprep.subr.bf16.mxu0 %v5252
  %5314 = vmatpush1.bf16.msra.mxu0 %v5251
  %5315 = vmatprep.subr.bf16.mxu0 0
  %5316 = vmatpush1.bf16.msra.mxu0 0
  %5317 = vmatprep.subr.bf16.mxu0 0
  %5318 = vmatpush1.bf16.msra.mxu0 0
  %5319 = vmatprep.subr.bf16.mxu0 0
  %5320 = vmatpush1.bf16.msra.mxu0 0
  %5321 = vmatprep.subr.bf16.mxu0 0
  %5322 = vmatpush1.bf16.msra.mxu0 0
  %5323 = vmatprep.subr.bf16.mxu0 0
  %5324 = vmatpush1.bf16.msra.mxu0 0
  %5325 = vmatprep.subr.bf16.mxu0 0
  %5326 = vmatpush1.bf16.msra.mxu0 0
  %5327 = vmatprep.subr.bf16.mxu0 0
  %5328 = vmatpush1.bf16.msra.mxu0 0
  %5329 = vmatprep.subr.bf16.mxu0 0
  %5330 = vmatpush1.bf16.msra.mxu0 0
  %5331 = vmatprep.subr.bf16.mxu0 0
  %5332 = vmatpush1.bf16.msra.mxu0 0
  %5333 = vmatprep.subr.bf16.mxu0 0
  %5334 = vmatpush1.bf16.msra.mxu0 0
  %5335 = vmatprep.mubr.bf16.mxu0 0
  %5336 = vmatmul.mubr.bf16.gmra.mrb[0].mxu0 %v5289
  %v5337 = vpop.f32.mrb[0].mxu0
  %v5338 = vadd.f32 %v5258, %v5337
  %v5339 = vpop.f32.mrb[0].mxu0
  %v5340 = vadd.f32 %v5262, %v5339
  %v5341 = vpop.f32.mrb[0].mxu0
  %v5342 = vadd.f32 %v5258, %v5341
  %v5343 = vpop.f32.mrb[0].mxu0
  %v5344 = vadd.f32 %v5262, %v5343
  %5345 = vmatprep.mubr.bf16.mxu0 0
  %5346 = vmatmul.mubr.bf16.gmra.mrb[0].mxu0 %v5292
  %v5347 = vpop.f32.mrb[0].mxu0
  %v5348 = vadd.f32 %v5258, %v5347
  %v5349 = vpop.f32.mrb[0].mxu0
  %v5350 = vadd.f32 %v5262, %v5349
  %v5351 = vpop.f32.mrb[0].mxu0
  %v5352 = vadd.f32 %v5258, %v5351
  %v5353 = vpop.f32.mrb[0].mxu0
  %v5354 = vadd.f32 %v5262, %v5353
  %5355 = vmatprep.mubr.bf16.mxu0 0
  %5356 = vmatmul.mubr.bf16.gmra.mrb[0].mxu0 %v5295
  %v5357 = vpop.f32.mrb[0].mxu0
  %v5358 = vadd.f32 %v5258, %v5357
  %v5359 = vpop.f32.mrb[0].mxu0
  %v5360 = vadd.f32 %v5262, %v5359
  %v5361 = vpop.f32.mrb[0].mxu0
  %v5362 = vadd.f32 %v5258, %v5361
  %v5363 = vpop.f32.mrb[0].mxu0
  %v5364 = vadd.f32 %v5262, %v5363
  %5365 = vmatprep.mubr.bf16.mxu0 0
  %5366 = vmatmul.mubr.bf16.gmra.mrb[0].mxu0 %v5298
  %v5367 = vpop.f32.mrb[0].mxu0
  %v5368 = vadd.f32 %v5258, %v5367
  %v5369 = vpop.f32.mrb[0].mxu0
  %v5370 = vadd.f32 %v5262, %v5369
  %v5371 = vpop.f32.mrb[0].mxu0
  %v5372 = vadd.f32 %v5258, %v5371
  %v5373 = vpop.f32.mrb[0].mxu0
  %v5374 = vadd.f32 %v5262, %v5373
  %5375 = vmatprep.mubr.bf16.mxu0 0
  %5376 = vmatmul.mubr.bf16.gmra.mrb[0].mxu0 %v5301
  %v5377 = vpop.f32.mrb[0].mxu0
  %v5378 = vadd.f32 %v5258, %v5377
  %v5379 = vpop.f32.mrb[0].mxu0
  %v5380 = vadd.f32 %v5262, %v5379
  %v5381 = vpop.f32.mrb[0].mxu0
  %v5382 = vpop.f32.mrb[0].mxu0
  %5383 = vdwg.mxu0
  %s5384 = scalar_lea.vmem %s8, 144
  %5385 = vst [vmem:[%s5384] sm:$0xff] %v5338
  %5386 = vst.msk [vmem:[%s5384 + $0x8] sm:$0xff] %vm2136, %v5340
  %5387 = vst [vmem:[%s5384 + $0x10] sm:$0xff] %v5342
  %5388 = vst.msk [vmem:[%s5384 + $0x18] sm:$0xff] %vm2136, %v5344
  %5389 = vst [vmem:[%s5384 + $0x20] sm:$0xff] %v5348
  %5390 = vst.msk [vmem:[%s5384 + $0x28] sm:$0xff] %vm2136, %v5350
  %5391 = vst [vmem:[%s5384 + $0x30] sm:$0xff] %v5352
  %5392 = vst.msk [vmem:[%s5384 + $0x38] sm:$0xff] %vm2136, %v5354
  %5393 = vst [vmem:[%s5384 + $0x40] sm:$0xff] %v5358
  %5394 = vst.msk [vmem:[%s5384 + $0x48] sm:$0xff] %vm2136, %v5360
  %5395 = vst [vmem:[%s5384 + $0x50] sm:$0xff] %v5362
  %5396 = vst.msk [vmem:[%s5384 + $0x58] sm:$0xff] %vm2136, %v5364
  %5397 = vst [vmem:[%s5384 + $0x60] sm:$0xff] %v5368
  %5398 = vst.msk [vmem:[%s5384 + $0x68] sm:$0xff] %vm2136, %v5370
  %5399 = vst [vmem:[%s5384 + $0x70] sm:$0xff] %v5372
  %5400 = vst.msk [vmem:[%s5384 + $0x78] sm:$0xff] %vm2136, %v5374
  %5401 = vst [vmem:[%s5384 + $0x80] sm:$0x1] %v5378
  %5402 = vst.msk [vmem:[%s5384 + $0x88] sm:$0x1] %vm2721, %v5380
  // Predicated region
  $region34: #{forward.1} parent=0 // pred_check
    _
  $region35: #{forward.1} parent=0 // pred_check_branch
    %5404 = sbr.rel (0) target = $region37
  $region36: #{forward.1} parent=0 // pred_region
    _
  $region37: #{forward.1} parent=0 // pred_fallthru
    _
  // Predicated region
  $region38: #{forward.1} parent=0 // pred_check
    _
  $region39: #{forward.1} parent=0 // pred_check_branch
    %5406 = sbr.rel (0) target = $region41
  $region40: #{forward.1} parent=0 // pred_region
    _
  $region41: #{forward.1} parent=0 // pred_fallthru
    _

</llo_original>
